<compile_context>
chip_gen: v7x
topology: tpu7x:2x2x1
jax: 0.10.0
libtpu: 0.0.40
codegen_flags: <defaults>
</compile_context>

<pallas_src>
import functools
import math

import jax
import jax.numpy as jnp
from jax import lax
from jax.experimental import pallas as pl
from jax.experimental.pallas import tpu as pltpu


# -----------------------------------------------------------------------------
# In-kernel helpers (operate on VMEM-resident values / refs)
# -----------------------------------------------------------------------------
def _layer_norm(x, g, b, eps):
    mu = jnp.mean(x, axis=-1, keepdims=True)
    xc = x - mu
    var = jnp.mean(xc * xc, axis=-1, keepdims=True)
    return xc * lax.rsqrt(var + eps) * g + b


def _mha(xq, xk, xv, w_qkv_ref, b_qkv_ref, w_o_ref, b_o_ref, num_heads):
    """Multi-head attention on VMEM-resident activations.

    xq: (Nq, C)   xk/xv: (Nk, C)
    w_qkv_ref: (3, C, I)   b_qkv_ref: (3, 1, I)
    w_o_ref:   (I, C)      b_o_ref:   (1, C)
    """
    internal = w_qkv_ref.shape[2]
    dh = internal // num_heads
    scale = 1.0 / math.sqrt(dh)

    # Fused full-width input projections (one (N,C)x(C,I) matmul each).
    qp = jnp.dot(xq, w_qkv_ref[0], preferred_element_type=jnp.float32) + b_qkv_ref[0]
    kp = jnp.dot(xk, w_qkv_ref[1], preferred_element_type=jnp.float32) + b_qkv_ref[1]
    vp = jnp.dot(xv, w_qkv_ref[2], preferred_element_type=jnp.float32) + b_qkv_ref[2]

    # Per-head scores / softmax / PV (static unroll; 2D ops only).
    head_outs = []
    for h in range(num_heads):
        lo, hi = h * dh, (h + 1) * dh
        qh, kh, vh = qp[:, lo:hi], kp[:, lo:hi], vp[:, lo:hi]
        s = lax.dot_general(qh, kh, (((1,), (1,)), ((), ())),
                            preferred_element_type=jnp.float32) * scale
        s = s - jnp.max(s, axis=-1, keepdims=True)
        p = jnp.exp(s)
        p = p * pl.reciprocal(jnp.sum(p, axis=-1, keepdims=True), approx=True)
        head_outs.append(jnp.dot(p, vh, preferred_element_type=jnp.float32))

    # Concatenate heads, then ONE full-width output projection (N,I)x(I,C).
    o = jnp.concatenate(head_outs, axis=-1) if num_heads > 1 else head_outs[0]
    return jnp.dot(o, w_o_ref[...], preferred_element_type=jnp.float32) + b_o_ref[...]


# -----------------------------------------------------------------------------
# Fused TwoWayTransformerBlock kernel (one batch element per grid step)
# -----------------------------------------------------------------------------
def _two_way_block_kernel(
    # activations
    q_in_ref, k_in_ref, qpe_ref, kpe_ref,
    # self-attention params
    sa_wqkv, sa_bqkv, sa_wo, sa_bo,
    # cross attention token -> image
    t2i_wqkv, t2i_bqkv, t2i_wo, t2i_bo,
    # cross attention image -> token
    i2t_wqkv, i2t_bqkv, i2t_wo, i2t_bo,
    # MLP
    mlp_w1, mlp_b1, mlp_w2, mlp_b2,
    # LayerNorms
    n1_g, n1_b, n2_g, n2_b, n3_g, n3_b, n4_g, n4_b,
    # outputs
    q_out_ref, k_out_ref,
    *, num_heads, skip_first_layer_pe, eps,
):
    queries = q_in_ref[0].astype(jnp.float32)   # (Nq, C)
    keys = k_in_ref[0].astype(jnp.float32)      # (Nk, C)
    qpe = qpe_ref[0].astype(jnp.float32)
    kpe = kpe_ref[0].astype(jnp.float32)

    # 1) self attention on sparse tokens (+ residual unless PE skipped)
    if skip_first_layer_pe:
        queries = _mha(queries, queries, queries,
                       sa_wqkv, sa_bqkv, sa_wo, sa_bo, num_heads)
    else:
        q = queries + qpe
        attn_out = _mha(q, q, queries, sa_wqkv, sa_bqkv, sa_wo, sa_bo, num_heads)
        queries = queries + attn_out
    queries = _layer_norm(queries, n1_g[...], n1_b[...], eps)

    # 2) cross attention: tokens attend to image
    q = queries + qpe
    k = keys + kpe
    attn_out = _mha(q, k, keys, t2i_wqkv, t2i_bqkv, t2i_wo, t2i_bo, num_heads)
    queries = queries + attn_out
    queries = _layer_norm(queries, n2_g[...], n2_b[...], eps)

    # 3) MLP block on sparse tokens (Linear -> ReLU -> Linear)
    h = jnp.dot(queries, mlp_w1[...], preferred_element_type=jnp.float32) + mlp_b1[...]
    h = jnp.maximum(h, 0.0)
    mlp_out = jnp.dot(h, mlp_w2[...], preferred_element_type=jnp.float32) + mlp_b2[...]
    queries = queries + mlp_out
    queries = _layer_norm(queries, n3_g[...], n3_b[...], eps)

    # 4) cross attention: image attends to tokens
    q = queries + qpe
    k = keys + kpe
    attn_out = _mha(k, q, queries, i2t_wqkv, i2t_bqkv, i2t_wo, i2t_bo, num_heads)
    keys = keys + attn_out
    keys = _layer_norm(keys, n4_g[...], n4_b[...], eps)

    q_out_ref[0] = queries.astype(q_out_ref.dtype)
    k_out_ref[0] = keys.astype(k_out_ref.dtype)


# -----------------------------------------------------------------------------
# Wrapper: one pallas_call for the whole block
# -----------------------------------------------------------------------------
def two_way_transformer_block(params, queries, keys, query_pe, key_pe, *,
                              num_heads, skip_first_layer_pe=False):
    B, Nq, C = queries.shape
    Nk = keys.shape[1]

    weight_args = (
        params["self_attn"]["w_qkv"], params["self_attn"]["b_qkv"],
        params["self_attn"]["w_o"], params["self_attn"]["b_o"],
        params["cross_t2i"]["w_qkv"], params["cross_t2i"]["b_qkv"],
        params["cross_t2i"]["w_o"], params["cross_t2i"]["b_o"],
        params["cross_i2t"]["w_qkv"], params["cross_i2t"]["b_qkv"],
        params["cross_i2t"]["w_o"], params["cross_i2t"]["b_o"],
        params["mlp"]["w1"], params["mlp"]["b1"],
        params["mlp"]["w2"], params["mlp"]["b2"],
        params["norm1"]["g"], params["norm1"]["b"],
        params["norm2"]["g"], params["norm2"]["b"],
        params["norm3"]["g"], params["norm3"]["b"],
        params["norm4"]["g"], params["norm4"]["b"],
    )

    q_spec = pl.BlockSpec((1, Nq, C), lambda b: (b, 0, 0))
    k_spec = pl.BlockSpec((1, Nk, C), lambda b: (b, 0, 0))

    def _rep(w):  # weight replicated across grid (constant block index -> stays resident)
        nd = w.ndim
        return pl.BlockSpec(w.shape, lambda b, _nd=nd: (0,) * _nd)

    kernel = functools.partial(
        _two_way_block_kernel, num_heads=num_heads,
        skip_first_layer_pe=skip_first_layer_pe, eps=1e-5)

    q_out, k_out = pl.pallas_call(
        kernel,
        out_shape=(jax.ShapeDtypeStruct((B, Nq, C), jnp.float32),
                   jax.ShapeDtypeStruct((B, Nk, C), jnp.float32)),
        grid=(B,),
        in_specs=[q_spec, k_spec, q_spec, k_spec] + [_rep(w) for w in weight_args],
        out_specs=(q_spec, k_spec),
        compiler_params=pltpu.CompilerParams(dimension_semantics=("parallel",)),
    )(queries, keys, query_pe, key_pe, *weight_args)
    return q_out, k_out


# -----------------------------------------------------------------------------
# Deterministic parameter init — weights built in kernel layout ONCE here.
# -----------------------------------------------------------------------------
def _init_linear(key, in_dim, out_dim, scale=0.02):
    kw, kb = jax.random.split(key)
    w = jax.random.normal(kw, (in_dim, out_dim), jnp.float32) * scale
    b = jax.random.normal(kb, (out_dim,), jnp.float32) * scale
    return w, b


def _init_attention(key, embed_dim, internal_dim):
    ks = jax.random.split(key, 4)
    wq, bq = _init_linear(ks[0], embed_dim, internal_dim)
    wk, bk = _init_linear(ks[1], embed_dim, internal_dim)
    wv, bv = _init_linear(ks[2], embed_dim, internal_dim)
    wo, bo = _init_linear(ks[3], internal_dim, embed_dim)
    return dict(
        w_qkv=jnp.stack([wq, wk, wv], axis=0),               # (3, C, I)
        b_qkv=jnp.stack([bq, bk, bv], axis=0)[:, None, :],   # (3, 1, I)
        w_o=wo,                                              # (I, C)
        b_o=bo[None, :],                                     # (1, C)
    )


def _init_ln(C):
    return dict(g=jnp.ones((1, C), jnp.float32), b=jnp.zeros((1, C), jnp.float32))


def _init_mlp(key, C, M):
    k1, k2 = jax.random.split(key)
    w1, b1 = _init_linear(k1, C, M)
    w2, b2 = _init_linear(k2, M, C)
    return dict(w1=w1, b1=b1[None, :], w2=w2, b2=b2[None, :])


def init_block_params(key, embedding_dim, mlp_dim, attention_downsample_rate):
    C = embedding_dim
    I_ds = C // attention_downsample_rate
    ks = jax.random.split(key, 4)
    return dict(
        self_attn=_init_attention(ks[0], C, C),          # downsample_rate = 1
        cross_t2i=_init_attention(ks[1], C, I_ds),
        cross_i2t=_init_attention(ks[2], C, I_ds),
        mlp=_init_mlp(ks[3], C, mlp_dim),
        norm1=_init_ln(C), norm2=_init_ln(C), norm3=_init_ln(C), norm4=_init_ln(C),
    )


# -----------------------------------------------------------------------------
if __name__ == "__main__":
    embedding_dim = 32
    num_heads = 2
    mlp_dim = 64
    attention_downsample_rate = 2

    B = 2
    H = W = 8
    Nk = H * W          # dense image tokens (already flattened: (B, H*W, C))
    Nq = 8              # sparse point/query tokens

    key = jax.random.PRNGKey(0)
    kp, k1, k2, k3, k4 = jax.random.split(key, 5)

    params = init_block_params(kp, embedding_dim, mlp_dim, attention_downsample_rate)

    queries = jax.random.normal(k1, (B, Nq, embedding_dim), jnp.float32)
    keys = jax.random.normal(k2, (B, Nk, embedding_dim), jnp.float32)
    query_pe = jax.random.normal(k3, (B, Nq, embedding_dim), jnp.float32)
    key_pe = jax.random.normal(k4, (B, Nk, embedding_dim), jnp.float32)

    # standard block
    q_out, k_out = two_way_transformer_block(
        params, queries, keys, query_pe, key_pe,
        num_heads=num_heads, skip_first_layer_pe=False)
    jax.block_until_ready((q_out, k_out))
    assert q_out.shape == (B, Nq, embedding_dim)
    assert k_out.shape == (B, Nk, embedding_dim)

    # first-layer variant (skip_first_layer_pe=True branch)
    q_out2, k_out2 = two_way_transformer_block(
        params, queries, keys, query_pe, key_pe,
        num_heads=num_heads, skip_first_layer_pe=True)
    jax.block_until_ready((q_out2, k_out2))
    assert q_out2.shape == (B, Nq, embedding_dim)
    assert k_out2.shape == (B, Nk, embedding_dim)

    print("KERNEL_OK")
</pallas_src>

<mosaic_0001>
module attributes {stable_mosaic.version = 11 : i64} {
  func.func @_two_way_block_kernel(%arg0: i32, %arg1: memref<1x8x32xf32, #tpu.memory_space<vmem>>, %arg2: memref<1x64x32xf32, #tpu.memory_space<vmem>>, %arg3: memref<1x8x32xf32, #tpu.memory_space<vmem>>, %arg4: memref<1x64x32xf32, #tpu.memory_space<vmem>>, %arg5: memref<3x32x32xf32, #tpu.memory_space<vmem>>, %arg6: memref<3x1x32xf32, #tpu.memory_space<vmem>>, %arg7: memref<32x32xf32, #tpu.memory_space<vmem>>, %arg8: memref<1x32xf32, #tpu.memory_space<vmem>>, %arg9: memref<3x32x16xf32, #tpu.memory_space<vmem>>, %arg10: memref<3x1x16xf32, #tpu.memory_space<vmem>>, %arg11: memref<16x32xf32, #tpu.memory_space<vmem>>, %arg12: memref<1x32xf32, #tpu.memory_space<vmem>>, %arg13: memref<3x32x16xf32, #tpu.memory_space<vmem>>, %arg14: memref<3x1x16xf32, #tpu.memory_space<vmem>>, %arg15: memref<16x32xf32, #tpu.memory_space<vmem>>, %arg16: memref<1x32xf32, #tpu.memory_space<vmem>>, %arg17: memref<32x64xf32, #tpu.memory_space<vmem>>, %arg18: memref<1x64xf32, #tpu.memory_space<vmem>>, %arg19: memref<64x32xf32, #tpu.memory_space<vmem>>, %arg20: memref<1x32xf32, #tpu.memory_space<vmem>>, %arg21: memref<1x32xf32, #tpu.memory_space<vmem>>, %arg22: memref<1x32xf32, #tpu.memory_space<vmem>>, %arg23: memref<1x32xf32, #tpu.memory_space<vmem>>, %arg24: memref<1x32xf32, #tpu.memory_space<vmem>>, %arg25: memref<1x32xf32, #tpu.memory_space<vmem>>, %arg26: memref<1x32xf32, #tpu.memory_space<vmem>>, %arg27: memref<1x32xf32, #tpu.memory_space<vmem>>, %arg28: memref<1x32xf32, #tpu.memory_space<vmem>>, %arg29: memref<1x8x32xf32, #tpu.memory_space<vmem>>, %arg30: memref<1x64x32xf32, #tpu.memory_space<vmem>>) attributes {dimension_semantics = [#tpu.dimension_semantics<parallel>], iteration_bounds = array<i64: 2>, scalar_prefetch = 0 : i64, scratch_operands = 0 : i64, tpu.core_type = #tpu.core_type<tc>, window_params = [{transform_indices = @transform_0, window_bounds = array<i64: 1, 8, 32>}, {transform_indices = @transform_1, window_bounds = array<i64: 1, 64, 32>}, {transform_indices = @transform_2, window_bounds = array<i64: 1, 8, 32>}, {transform_indices = @transform_3, window_bounds = array<i64: 1, 64, 32>}, {pipeline_mode = #tpu.pipeline_mode<synchronous>, transform_indices = @transform_4, window_bounds = array<i64: 3, 32, 32>}, {pipeline_mode = #tpu.pipeline_mode<synchronous>, transform_indices = @transform_5, window_bounds = array<i64: 3, 1, 32>}, {pipeline_mode = #tpu.pipeline_mode<synchronous>, transform_indices = @transform_6, window_bounds = array<i64: 32, 32>}, {pipeline_mode = #tpu.pipeline_mode<synchronous>, transform_indices = @transform_7, window_bounds = array<i64: 1, 32>}, {pipeline_mode = #tpu.pipeline_mode<synchronous>, transform_indices = @transform_8, window_bounds = array<i64: 3, 32, 16>}, {pipeline_mode = #tpu.pipeline_mode<synchronous>, transform_indices = @transform_9, window_bounds = array<i64: 3, 1, 16>}, {pipeline_mode = #tpu.pipeline_mode<synchronous>, transform_indices = @transform_10, window_bounds = array<i64: 16, 32>}, {pipeline_mode = #tpu.pipeline_mode<synchronous>, transform_indices = @transform_11, window_bounds = array<i64: 1, 32>}, {pipeline_mode = #tpu.pipeline_mode<synchronous>, transform_indices = @transform_12, window_bounds = array<i64: 3, 32, 16>}, {pipeline_mode = #tpu.pipeline_mode<synchronous>, transform_indices = @transform_13, window_bounds = array<i64: 3, 1, 16>}, {pipeline_mode = #tpu.pipeline_mode<synchronous>, transform_indices = @transform_14, window_bounds = array<i64: 16, 32>}, {pipeline_mode = #tpu.pipeline_mode<synchronous>, transform_indices = @transform_15, window_bounds = array<i64: 1, 32>}, {pipeline_mode = #tpu.pipeline_mode<synchronous>, transform_indices = @transform_16, window_bounds = array<i64: 32, 64>}, {pipeline_mode = #tpu.pipeline_mode<synchronous>, transform_indices = @transform_17, window_bounds = array<i64: 1, 64>}, {pipeline_mode = #tpu.pipeline_mode<synchronous>, transform_indices = @transform_18, window_bounds = array<i64: 64, 32>}, {pipeline_mode = #tpu.pipeline_mode<synchronous>, transform_indices = @transform_19, window_bounds = array<i64: 1, 32>}, {pipeline_mode = #tpu.pipeline_mode<synchronous>, transform_indices = @transform_20, window_bounds = array<i64: 1, 32>}, {pipeline_mode = #tpu.pipeline_mode<synchronous>, transform_indices = @transform_21, window_bounds = array<i64: 1, 32>}, {pipeline_mode = #tpu.pipeline_mode<synchronous>, transform_indices = @transform_22, window_bounds = array<i64: 1, 32>}, {pipeline_mode = #tpu.pipeline_mode<synchronous>, transform_indices = @transform_23, window_bounds = array<i64: 1, 32>}, {pipeline_mode = #tpu.pipeline_mode<synchronous>, transform_indices = @transform_24, window_bounds = array<i64: 1, 32>}, {pipeline_mode = #tpu.pipeline_mode<synchronous>, transform_indices = @transform_25, window_bounds = array<i64: 1, 32>}, {pipeline_mode = #tpu.pipeline_mode<synchronous>, transform_indices = @transform_26, window_bounds = array<i64: 1, 32>}, {pipeline_mode = #tpu.pipeline_mode<synchronous>, transform_indices = @transform_27, window_bounds = array<i64: 1, 32>}, {transform_indices = @transform_28, window_bounds = array<i64: 1, 8, 32>}, {transform_indices = @transform_29, window_bounds = array<i64: 1, 64, 32>}]} {
    %c0 = arith.constant 0 : index
    %c0_0 = arith.constant 0 : index
    %c0_1 = arith.constant 0 : index
    %0 = vector.load %arg1[%c0, %c0_0, %c0_1] : memref<1x8x32xf32, #tpu.memory_space<vmem>>, vector<1x8x32xf32>
    %1 = vector.shape_cast %0 : vector<1x8x32xf32> to vector<8x32xf32>
    %c0_2 = arith.constant 0 : index
    %c0_3 = arith.constant 0 : index
    %c0_4 = arith.constant 0 : index
    %2 = vector.load %arg2[%c0_2, %c0_3, %c0_4] : memref<1x64x32xf32, #tpu.memory_space<vmem>>, vector<1x64x32xf32>
    %3 = vector.shape_cast %2 : vector<1x64x32xf32> to vector<64x32xf32>
    %c0_5 = arith.constant 0 : index
    %c0_6 = arith.constant 0 : index
    %c0_7 = arith.constant 0 : index
    %4 = vector.load %arg3[%c0_5, %c0_6, %c0_7] : memref<1x8x32xf32, #tpu.memory_space<vmem>>, vector<1x8x32xf32>
    %5 = vector.shape_cast %4 : vector<1x8x32xf32> to vector<8x32xf32>
    %c0_8 = arith.constant 0 : index
    %c0_9 = arith.constant 0 : index
    %c0_10 = arith.constant 0 : index
    %6 = vector.load %arg4[%c0_8, %c0_9, %c0_10] : memref<1x64x32xf32, #tpu.memory_space<vmem>>, vector<1x64x32xf32>
    %7 = vector.shape_cast %6 : vector<1x64x32xf32> to vector<64x32xf32>
    %8 = arith.addf %1, %5 : vector<8x32xf32>
    %c0_11 = arith.constant 0 : index
    %c0_12 = arith.constant 0 : index
    %c0_13 = arith.constant 0 : index
    %9 = vector.load %arg5[%c0_11, %c0_12, %c0_13] : memref<3x32x32xf32, #tpu.memory_space<vmem>>, vector<1x32x32xf32>
    %10 = vector.shape_cast %9 : vector<1x32x32xf32> to vector<32x32xf32>
    %cst = arith.constant dense<0.000000e+00> : vector<8x32xf32>
    %11 = tpu.matmul %8, %10, %cst {dimension_numbers = #tpu.dot_dimension_numbers<[1], [0], [0], [1], [0, 0, 1, 1], [], []>} : vector<8x32xf32>, vector<32x32xf32>, vector<8x32xf32> -> vector<8x32xf32>
    %c0_14 = arith.constant 0 : index
    %c0_15 = arith.constant 0 : index
    %c0_16 = arith.constant 0 : index
    %12 = vector.load %arg6[%c0_14, %c0_15, %c0_16] : memref<3x1x32xf32, #tpu.memory_space<vmem>>, vector<1x1x32xf32>
    %13 = vector.shape_cast %12 : vector<1x1x32xf32> to vector<1x32xf32>
    %14 = vector.broadcast %13 : vector<1x32xf32> to vector<8x32xf32>
    %15 = arith.addf %11, %14 : vector<8x32xf32>
    %c1 = arith.constant 1 : index
    %c0_17 = arith.constant 0 : index
    %c0_18 = arith.constant 0 : index
    %16 = vector.load %arg5[%c1, %c0_17, %c0_18] : memref<3x32x32xf32, #tpu.memory_space<vmem>>, vector<1x32x32xf32>
    %17 = vector.shape_cast %16 : vector<1x32x32xf32> to vector<32x32xf32>
    %cst_19 = arith.constant dense<0.000000e+00> : vector<8x32xf32>
    %18 = tpu.matmul %8, %17, %cst_19 {dimension_numbers = #tpu.dot_dimension_numbers<[1], [0], [0], [1], [0, 0, 1, 1], [], []>} : vector<8x32xf32>, vector<32x32xf32>, vector<8x32xf32> -> vector<8x32xf32>
    %c1_20 = arith.constant 1 : index
    %c0_21 = arith.constant 0 : index
    %c0_22 = arith.constant 0 : index
    %19 = vector.load %arg6[%c1_20, %c0_21, %c0_22] : memref<3x1x32xf32, #tpu.memory_space<vmem>>, vector<1x1x32xf32>
    %20 = vector.shape_cast %19 : vector<1x1x32xf32> to vector<1x32xf32>
    %21 = vector.broadcast %20 : vector<1x32xf32> to vector<8x32xf32>
    %22 = arith.addf %18, %21 : vector<8x32xf32>
    %c2 = arith.constant 2 : index
    %c0_23 = arith.constant 0 : index
    %c0_24 = arith.constant 0 : index
    %23 = vector.load %arg5[%c2, %c0_23, %c0_24] : memref<3x32x32xf32, #tpu.memory_space<vmem>>, vector<1x32x32xf32>
    %24 = vector.shape_cast %23 : vector<1x32x32xf32> to vector<32x32xf32>
    %cst_25 = arith.constant dense<0.000000e+00> : vector<8x32xf32>
    %25 = tpu.matmul %1, %24, %cst_25 {dimension_numbers = #tpu.dot_dimension_numbers<[1], [0], [0], [1], [0, 0, 1, 1], [], []>} : vector<8x32xf32>, vector<32x32xf32>, vector<8x32xf32> -> vector<8x32xf32>
    %c2_26 = arith.constant 2 : index
    %c0_27 = arith.constant 0 : index
    %c0_28 = arith.constant 0 : index
    %26 = vector.load %arg6[%c2_26, %c0_27, %c0_28] : memref<3x1x32xf32, #tpu.memory_space<vmem>>, vector<1x1x32xf32>
    %27 = vector.shape_cast %26 : vector<1x1x32xf32> to vector<1x32xf32>
    %28 = vector.broadcast %27 : vector<1x32xf32> to vector<8x32xf32>
    %29 = arith.addf %25, %28 : vector<8x32xf32>
    %30 = vector.extract_strided_slice %15 {offsets = [0, 0], sizes = [8, 16], strides = [1, 1]} : vector<8x32xf32> to vector<8x16xf32>
    %31 = vector.extract_strided_slice %22 {offsets = [0, 0], sizes = [8, 16], strides = [1, 1]} : vector<8x32xf32> to vector<8x16xf32>
    %32 = vector.extract_strided_slice %29 {offsets = [0, 0], sizes = [8, 16], strides = [1, 1]} : vector<8x32xf32> to vector<8x16xf32>
    %cst_29 = arith.constant dense<0.000000e+00> : vector<8x8xf32>
    %33 = tpu.matmul %30, %31, %cst_29 {dimension_numbers = #tpu.dot_dimension_numbers<[1], [1], [0], [0], [0, 0, 1, 0], [], []>} : vector<8x16xf32>, vector<8x16xf32>, vector<8x8xf32> -> vector<8x8xf32>
    %cst_30 = arith.constant 2.500000e-01 : f32
    %34 = vector.broadcast %cst_30 : f32 to vector<8x8xf32>
    %35 = arith.mulf %33, %34 : vector<8x8xf32>
    %cst_31 = arith.constant dense<0xFF800000> : vector<8xf32>
    %36 = vector.multi_reduction <maximumf>, %35, %cst_31 [1] : vector<8x8xf32> to vector<8xf32>
    %37 = vector.shape_cast %36 : vector<8xf32> to vector<8x1xf32>
    %38 = vector.broadcast %37 : vector<8x1xf32> to vector<8x8xf32>
    %39 = arith.subf %35, %38 : vector<8x8xf32>
    %40 = math.exp %39 : vector<8x8xf32>
    %cst_32 = arith.constant dense<0.000000e+00> : vector<8xf32>
    %41 = vector.multi_reduction <add>, %40, %cst_32 [1] : vector<8x8xf32> to vector<8xf32>
    %42 = vector.shape_cast %41 : vector<8xf32> to vector<8x1xf32>
    %43 = tpu.reciprocal %42 {approx = true} : vector<8x1xf32> -> vector<8x1xf32>
    %44 = vector.broadcast %43 : vector<8x1xf32> to vector<8x8xf32>
    %45 = arith.mulf %40, %44 : vector<8x8xf32>
    %cst_33 = arith.constant dense<0.000000e+00> : vector<8x16xf32>
    %46 = tpu.matmul %45, %32, %cst_33 {dimension_numbers = #tpu.dot_dimension_numbers<[1], [0], [0], [1], [0, 0, 1, 1], [], []>} : vector<8x8xf32>, vector<8x16xf32>, vector<8x16xf32> -> vector<8x16xf32>
    %47 = vector.extract_strided_slice %15 {offsets = [0, 16], sizes = [8, 16], strides = [1, 1]} : vector<8x32xf32> to vector<8x16xf32>
    %48 = vector.extract_strided_slice %22 {offsets = [0, 16], sizes = [8, 16], strides = [1, 1]} : vector<8x32xf32> to vector<8x16xf32>
    %49 = vector.extract_strided_slice %29 {offsets = [0, 16], sizes = [8, 16], strides = [1, 1]} : vector<8x32xf32> to vector<8x16xf32>
    %cst_34 = arith.constant dense<0.000000e+00> : vector<8x8xf32>
    %50 = tpu.matmul %47, %48, %cst_34 {dimension_numbers = #tpu.dot_dimension_numbers<[1], [1], [0], [0], [0, 0, 1, 0], [], []>} : vector<8x16xf32>, vector<8x16xf32>, vector<8x8xf32> -> vector<8x8xf32>
    %cst_35 = arith.constant 2.500000e-01 : f32
    %51 = vector.broadcast %cst_35 : f32 to vector<8x8xf32>
    %52 = arith.mulf %50, %51 : vector<8x8xf32>
    %cst_36 = arith.constant dense<0xFF800000> : vector<8xf32>
    %53 = vector.multi_reduction <maximumf>, %52, %cst_36 [1] : vector<8x8xf32> to vector<8xf32>
    %54 = vector.shape_cast %53 : vector<8xf32> to vector<8x1xf32>
    %55 = vector.broadcast %54 : vector<8x1xf32> to vector<8x8xf32>
    %56 = arith.subf %52, %55 : vector<8x8xf32>
    %57 = math.exp %56 : vector<8x8xf32>
    %cst_37 = arith.constant dense<0.000000e+00> : vector<8xf32>
    %58 = vector.multi_reduction <add>, %57, %cst_37 [1] : vector<8x8xf32> to vector<8xf32>
    %59 = vector.shape_cast %58 : vector<8xf32> to vector<8x1xf32>
    %60 = tpu.reciprocal %59 {approx = true} : vector<8x1xf32> -> vector<8x1xf32>
    %61 = vector.broadcast %60 : vector<8x1xf32> to vector<8x8xf32>
    %62 = arith.mulf %57, %61 : vector<8x8xf32>
    %cst_38 = arith.constant dense<0.000000e+00> : vector<8x16xf32>
    %63 = tpu.matmul %62, %49, %cst_38 {dimension_numbers = #tpu.dot_dimension_numbers<[1], [0], [0], [1], [0, 0, 1, 1], [], []>} : vector<8x8xf32>, vector<8x16xf32>, vector<8x16xf32> -> vector<8x16xf32>
    %64 = tpu.concatenate %46, %63 in 1 : vector<8x16xf32>, vector<8x16xf32> -> vector<8x32xf32>
    %c0_39 = arith.constant 0 : index
    %c0_40 = arith.constant 0 : index
    %65 = vector.load %arg7[%c0_39, %c0_40] : memref<32x32xf32, #tpu.memory_space<vmem>>, vector<32x32xf32>
    %cst_41 = arith.constant dense<0.000000e+00> : vector<8x32xf32>
    %66 = tpu.matmul %64, %65, %cst_41 {dimension_numbers = #tpu.dot_dimension_numbers<[1], [0], [0], [1], [0, 0, 1, 1], [], []>} : vector<8x32xf32>, vector<32x32xf32>, vector<8x32xf32> -> vector<8x32xf32>
    %c0_42 = arith.constant 0 : index
    %c0_43 = arith.constant 0 : index
    %67 = vector.load %arg8[%c0_42, %c0_43] : memref<1x32xf32, #tpu.memory_space<vmem>>, vector<1x32xf32>
    %68 = vector.broadcast %67 : vector<1x32xf32> to vector<8x32xf32>
    %69 = arith.addf %66, %68 : vector<8x32xf32>
    %70 = arith.addf %1, %69 : vector<8x32xf32>
    %c0_44 = arith.constant 0 : index
    %c0_45 = arith.constant 0 : index
    %71 = vector.load %arg21[%c0_44, %c0_45] : memref<1x32xf32, #tpu.memory_space<vmem>>, vector<1x32xf32>
    %c0_46 = arith.constant 0 : index
    %c0_47 = arith.constant 0 : index
    %72 = vector.load %arg22[%c0_46, %c0_47] : memref<1x32xf32, #tpu.memory_space<vmem>>, vector<1x32xf32>
    %cst_48 = arith.constant dense<0.000000e+00> : vector<8xf32>
    %73 = vector.multi_reduction <add>, %70, %cst_48 [1] : vector<8x32xf32> to vector<8xf32>
    %74 = vector.shape_cast %73 : vector<8xf32> to vector<8x1xf32>
    %cst_49 = arith.constant 3.200000e+01 : f32
    %75 = vector.broadcast %cst_49 : f32 to vector<8x1xf32>
    %76 = arith.divf %74, %75 : vector<8x1xf32>
    %77 = vector.broadcast %76 : vector<8x1xf32> to vector<8x32xf32>
    %78 = arith.subf %70, %77 : vector<8x32xf32>
    %79 = arith.mulf %78, %78 : vector<8x32xf32>
    %cst_50 = arith.constant dense<0.000000e+00> : vector<8xf32>
    %80 = vector.multi_reduction <add>, %79, %cst_50 [1] : vector<8x32xf32> to vector<8xf32>
    %81 = vector.shape_cast %80 : vector<8xf32> to vector<8x1xf32>
    %cst_51 = arith.constant 3.200000e+01 : f32
    %82 = vector.broadcast %cst_51 : f32 to vector<8x1xf32>
    %83 = arith.divf %81, %82 : vector<8x1xf32>
    %cst_52 = arith.constant 9.99999974E-6 : f32
    %84 = vector.broadcast %cst_52 : f32 to vector<8x1xf32>
    %85 = arith.addf %83, %84 : vector<8x1xf32>
    %86 = math.rsqrt %85 : vector<8x1xf32>
    %87 = vector.broadcast %86 : vector<8x1xf32> to vector<8x32xf32>
    %88 = arith.mulf %78, %87 : vector<8x32xf32>
    %89 = vector.broadcast %71 : vector<1x32xf32> to vector<8x32xf32>
    %90 = arith.mulf %88, %89 : vector<8x32xf32>
    %91 = vector.broadcast %72 : vector<1x32xf32> to vector<8x32xf32>
    %92 = arith.addf %90, %91 : vector<8x32xf32>
    %93 = arith.addf %92, %5 : vector<8x32xf32>
    %94 = arith.addf %3, %7 : vector<64x32xf32>
    %c0_53 = arith.constant 0 : index
    %c0_54 = arith.constant 0 : index
    %c0_55 = arith.constant 0 : index
    %95 = vector.load %arg9[%c0_53, %c0_54, %c0_55] : memref<3x32x16xf32, #tpu.memory_space<vmem>>, vector<1x32x16xf32>
    %96 = vector.shape_cast %95 : vector<1x32x16xf32> to vector<32x16xf32>
    %cst_56 = arith.constant dense<0.000000e+00> : vector<8x16xf32>
    %97 = tpu.matmul %93, %96, %cst_56 {dimension_numbers = #tpu.dot_dimension_numbers<[1], [0], [0], [1], [0, 0, 1, 1], [], []>} : vector<8x32xf32>, vector<32x16xf32>, vector<8x16xf32> -> vector<8x16xf32>
    %c0_57 = arith.constant 0 : index
    %c0_58 = arith.constant 0 : index
    %c0_59 = arith.constant 0 : index
    %98 = vector.load %arg10[%c0_57, %c0_58, %c0_59] : memref<3x1x16xf32, #tpu.memory_space<vmem>>, vector<1x1x16xf32>
    %99 = vector.shape_cast %98 : vector<1x1x16xf32> to vector<1x16xf32>
    %100 = vector.broadcast %99 : vector<1x16xf32> to vector<8x16xf32>
    %101 = arith.addf %97, %100 : vector<8x16xf32>
    %c1_60 = arith.constant 1 : index
    %c0_61 = arith.constant 0 : index
    %c0_62 = arith.constant 0 : index
    %102 = vector.load %arg9[%c1_60, %c0_61, %c0_62] : memref<3x32x16xf32, #tpu.memory_space<vmem>>, vector<1x32x16xf32>
    %103 = vector.shape_cast %102 : vector<1x32x16xf32> to vector<32x16xf32>
    %cst_63 = arith.constant dense<0.000000e+00> : vector<64x16xf32>
    %104 = tpu.matmul %94, %103, %cst_63 {dimension_numbers = #tpu.dot_dimension_numbers<[1], [0], [0], [1], [0, 0, 1, 1], [], []>} : vector<64x32xf32>, vector<32x16xf32>, vector<64x16xf32> -> vector<64x16xf32>
    %c1_64 = arith.constant 1 : index
    %c0_65 = arith.constant 0 : index
    %c0_66 = arith.constant 0 : index
    %105 = vector.load %arg10[%c1_64, %c0_65, %c0_66] : memref<3x1x16xf32, #tpu.memory_space<vmem>>, vector<1x1x16xf32>
    %106 = vector.shape_cast %105 : vector<1x1x16xf32> to vector<1x16xf32>
    %107 = vector.broadcast %106 : vector<1x16xf32> to vector<64x16xf32>
    %108 = arith.addf %104, %107 : vector<64x16xf32>
    %c2_67 = arith.constant 2 : index
    %c0_68 = arith.constant 0 : index
    %c0_69 = arith.constant 0 : index
    %109 = vector.load %arg9[%c2_67, %c0_68, %c0_69] : memref<3x32x16xf32, #tpu.memory_space<vmem>>, vector<1x32x16xf32>
    %110 = vector.shape_cast %109 : vector<1x32x16xf32> to vector<32x16xf32>
    %cst_70 = arith.constant dense<0.000000e+00> : vector<64x16xf32>
    %111 = tpu.matmul %3, %110, %cst_70 {dimension_numbers = #tpu.dot_dimension_numbers<[1], [0], [0], [1], [0, 0, 1, 1], [], []>} : vector<64x32xf32>, vector<32x16xf32>, vector<64x16xf32> -> vector<64x16xf32>
    %c2_71 = arith.constant 2 : index
    %c0_72 = arith.constant 0 : index
    %c0_73 = arith.constant 0 : index
    %112 = vector.load %arg10[%c2_71, %c0_72, %c0_73] : memref<3x1x16xf32, #tpu.memory_space<vmem>>, vector<1x1x16xf32>
    %113 = vector.shape_cast %112 : vector<1x1x16xf32> to vector<1x16xf32>
    %114 = vector.broadcast %113 : vector<1x16xf32> to vector<64x16xf32>
    %115 = arith.addf %111, %114 : vector<64x16xf32>
    %116 = vector.extract_strided_slice %101 {offsets = [0, 0], sizes = [8, 8], strides = [1, 1]} : vector<8x16xf32> to vector<8x8xf32>
    %117 = vector.extract_strided_slice %108 {offsets = [0, 0], sizes = [64, 8], strides = [1, 1]} : vector<64x16xf32> to vector<64x8xf32>
    %118 = vector.extract_strided_slice %115 {offsets = [0, 0], sizes = [64, 8], strides = [1, 1]} : vector<64x16xf32> to vector<64x8xf32>
    %cst_74 = arith.constant dense<0.000000e+00> : vector<8x64xf32>
    %119 = tpu.matmul %116, %117, %cst_74 {dimension_numbers = #tpu.dot_dimension_numbers<[1], [1], [0], [0], [0, 0, 1, 0], [], []>} : vector<8x8xf32>, vector<64x8xf32>, vector<8x64xf32> -> vector<8x64xf32>
    %cst_75 = arith.constant 0.353553385 : f32
    %120 = vector.broadcast %cst_75 : f32 to vector<8x64xf32>
    %121 = arith.mulf %119, %120 : vector<8x64xf32>
    %cst_76 = arith.constant dense<0xFF800000> : vector<8xf32>
    %122 = vector.multi_reduction <maximumf>, %121, %cst_76 [1] : vector<8x64xf32> to vector<8xf32>
    %123 = vector.shape_cast %122 : vector<8xf32> to vector<8x1xf32>
    %124 = vector.broadcast %123 : vector<8x1xf32> to vector<8x64xf32>
    %125 = arith.subf %121, %124 : vector<8x64xf32>
    %126 = math.exp %125 : vector<8x64xf32>
    %cst_77 = arith.constant dense<0.000000e+00> : vector<8xf32>
    %127 = vector.multi_reduction <add>, %126, %cst_77 [1] : vector<8x64xf32> to vector<8xf32>
    %128 = vector.shape_cast %127 : vector<8xf32> to vector<8x1xf32>
    %129 = tpu.reciprocal %128 {approx = true} : vector<8x1xf32> -> vector<8x1xf32>
    %130 = vector.broadcast %129 : vector<8x1xf32> to vector<8x64xf32>
    %131 = arith.mulf %126, %130 : vector<8x64xf32>
    %cst_78 = arith.constant dense<0.000000e+00> : vector<8x8xf32>
    %132 = tpu.matmul %131, %118, %cst_78 {dimension_numbers = #tpu.dot_dimension_numbers<[1], [0], [0], [1], [0, 0, 1, 1], [], []>} : vector<8x64xf32>, vector<64x8xf32>, vector<8x8xf32> -> vector<8x8xf32>
    %133 = vector.extract_strided_slice %101 {offsets = [0, 8], sizes = [8, 8], strides = [1, 1]} : vector<8x16xf32> to vector<8x8xf32>
    %134 = vector.extract_strided_slice %108 {offsets = [0, 8], sizes = [64, 8], strides = [1, 1]} : vector<64x16xf32> to vector<64x8xf32>
    %135 = vector.extract_strided_slice %115 {offsets = [0, 8], sizes = [64, 8], strides = [1, 1]} : vector<64x16xf32> to vector<64x8xf32>
    %cst_79 = arith.constant dense<0.000000e+00> : vector<8x64xf32>
    %136 = tpu.matmul %133, %134, %cst_79 {dimension_numbers = #tpu.dot_dimension_numbers<[1], [1], [0], [0], [0, 0, 1, 0], [], []>} : vector<8x8xf32>, vector<64x8xf32>, vector<8x64xf32> -> vector<8x64xf32>
    %cst_80 = arith.constant 0.353553385 : f32
    %137 = vector.broadcast %cst_80 : f32 to vector<8x64xf32>
    %138 = arith.mulf %136, %137 : vector<8x64xf32>
    %cst_81 = arith.constant dense<0xFF800000> : vector<8xf32>
    %139 = vector.multi_reduction <maximumf>, %138, %cst_81 [1] : vector<8x64xf32> to vector<8xf32>
    %140 = vector.shape_cast %139 : vector<8xf32> to vector<8x1xf32>
    %141 = vector.broadcast %140 : vector<8x1xf32> to vector<8x64xf32>
    %142 = arith.subf %138, %141 : vector<8x64xf32>
    %143 = math.exp %142 : vector<8x64xf32>
    %cst_82 = arith.constant dense<0.000000e+00> : vector<8xf32>
    %144 = vector.multi_reduction <add>, %143, %cst_82 [1] : vector<8x64xf32> to vector<8xf32>
    %145 = vector.shape_cast %144 : vector<8xf32> to vector<8x1xf32>
    %146 = tpu.reciprocal %145 {approx = true} : vector<8x1xf32> -> vector<8x1xf32>
    %147 = vector.broadcast %146 : vector<8x1xf32> to vector<8x64xf32>
    %148 = arith.mulf %143, %147 : vector<8x64xf32>
    %cst_83 = arith.constant dense<0.000000e+00> : vector<8x8xf32>
    %149 = tpu.matmul %148, %135, %cst_83 {dimension_numbers = #tpu.dot_dimension_numbers<[1], [0], [0], [1], [0, 0, 1, 1], [], []>} : vector<8x64xf32>, vector<64x8xf32>, vector<8x8xf32> -> vector<8x8xf32>
    %150 = tpu.concatenate %132, %149 in 1 : vector<8x8xf32>, vector<8x8xf32> -> vector<8x16xf32>
    %c0_84 = arith.constant 0 : index
    %c0_85 = arith.constant 0 : index
    %151 = vector.load %arg11[%c0_84, %c0_85] : memref<16x32xf32, #tpu.memory_space<vmem>>, vector<16x32xf32>
    %cst_86 = arith.constant dense<0.000000e+00> : vector<8x32xf32>
    %152 = tpu.matmul %150, %151, %cst_86 {dimension_numbers = #tpu.dot_dimension_numbers<[1], [0], [0], [1], [0, 0, 1, 1], [], []>} : vector<8x16xf32>, vector<16x32xf32>, vector<8x32xf32> -> vector<8x32xf32>
    %c0_87 = arith.constant 0 : index
    %c0_88 = arith.constant 0 : index
    %153 = vector.load %arg12[%c0_87, %c0_88] : memref<1x32xf32, #tpu.memory_space<vmem>>, vector<1x32xf32>
    %154 = vector.broadcast %153 : vector<1x32xf32> to vector<8x32xf32>
    %155 = arith.addf %152, %154 : vector<8x32xf32>
    %156 = arith.addf %92, %155 : vector<8x32xf32>
    %c0_89 = arith.constant 0 : index
    %c0_90 = arith.constant 0 : index
    %157 = vector.load %arg23[%c0_89, %c0_90] : memref<1x32xf32, #tpu.memory_space<vmem>>, vector<1x32xf32>
    %c0_91 = arith.constant 0 : index
    %c0_92 = arith.constant 0 : index
    %158 = vector.load %arg24[%c0_91, %c0_92] : memref<1x32xf32, #tpu.memory_space<vmem>>, vector<1x32xf32>
    %cst_93 = arith.constant dense<0.000000e+00> : vector<8xf32>
    %159 = vector.multi_reduction <add>, %156, %cst_93 [1] : vector<8x32xf32> to vector<8xf32>
    %160 = vector.shape_cast %159 : vector<8xf32> to vector<8x1xf32>
    %cst_94 = arith.constant 3.200000e+01 : f32
    %161 = vector.broadcast %cst_94 : f32 to vector<8x1xf32>
    %162 = arith.divf %160, %161 : vector<8x1xf32>
    %163 = vector.broadcast %162 : vector<8x1xf32> to vector<8x32xf32>
    %164 = arith.subf %156, %163 : vector<8x32xf32>
    %165 = arith.mulf %164, %164 : vector<8x32xf32>
    %cst_95 = arith.constant dense<0.000000e+00> : vector<8xf32>
    %166 = vector.multi_reduction <add>, %165, %cst_95 [1] : vector<8x32xf32> to vector<8xf32>
    %167 = vector.shape_cast %166 : vector<8xf32> to vector<8x1xf32>
    %cst_96 = arith.constant 3.200000e+01 : f32
    %168 = vector.broadcast %cst_96 : f32 to vector<8x1xf32>
    %169 = arith.divf %167, %168 : vector<8x1xf32>
    %cst_97 = arith.constant 9.99999974E-6 : f32
    %170 = vector.broadcast %cst_97 : f32 to vector<8x1xf32>
    %171 = arith.addf %169, %170 : vector<8x1xf32>
    %172 = math.rsqrt %171 : vector<8x1xf32>
    %173 = vector.broadcast %172 : vector<8x1xf32> to vector<8x32xf32>
    %174 = arith.mulf %164, %173 : vector<8x32xf32>
    %175 = vector.broadcast %157 : vector<1x32xf32> to vector<8x32xf32>
    %176 = arith.mulf %174, %175 : vector<8x32xf32>
    %177 = vector.broadcast %158 : vector<1x32xf32> to vector<8x32xf32>
    %178 = arith.addf %176, %177 : vector<8x32xf32>
    %c0_98 = arith.constant 0 : index
    %c0_99 = arith.constant 0 : index
    %179 = vector.load %arg17[%c0_98, %c0_99] : memref<32x64xf32, #tpu.memory_space<vmem>>, vector<32x64xf32>
    %cst_100 = arith.constant dense<0.000000e+00> : vector<8x64xf32>
    %180 = tpu.matmul %178, %179, %cst_100 {dimension_numbers = #tpu.dot_dimension_numbers<[1], [0], [0], [1], [0, 0, 1, 1], [], []>} : vector<8x32xf32>, vector<32x64xf32>, vector<8x64xf32> -> vector<8x64xf32>
    %c0_101 = arith.constant 0 : index
    %c0_102 = arith.constant 0 : index
    %181 = vector.load %arg18[%c0_101, %c0_102] : memref<1x64xf32, #tpu.memory_space<vmem>>, vector<1x64xf32>
    %182 = vector.broadcast %181 : vector<1x64xf32> to vector<8x64xf32>
    %183 = arith.addf %180, %182 : vector<8x64xf32>
    %cst_103 = arith.constant 0.000000e+00 : f32
    %184 = vector.broadcast %cst_103 : f32 to vector<8x64xf32>
    %185 = arith.maximumf %183, %184 : vector<8x64xf32>
    %c0_104 = arith.constant 0 : index
    %c0_105 = arith.constant 0 : index
    %186 = vector.load %arg19[%c0_104, %c0_105] : memref<64x32xf32, #tpu.memory_space<vmem>>, vector<64x32xf32>
    %cst_106 = arith.constant dense<0.000000e+00> : vector<8x32xf32>
    %187 = tpu.matmul %185, %186, %cst_106 {dimension_numbers = #tpu.dot_dimension_numbers<[1], [0], [0], [1], [0, 0, 1, 1], [], []>} : vector<8x64xf32>, vector<64x32xf32>, vector<8x32xf32> -> vector<8x32xf32>
    %c0_107 = arith.constant 0 : index
    %c0_108 = arith.constant 0 : index
    %188 = vector.load %arg20[%c0_107, %c0_108] : memref<1x32xf32, #tpu.memory_space<vmem>>, vector<1x32xf32>
    %189 = vector.broadcast %188 : vector<1x32xf32> to vector<8x32xf32>
    %190 = arith.addf %187, %189 : vector<8x32xf32>
    %191 = arith.addf %178, %190 : vector<8x32xf32>
    %c0_109 = arith.constant 0 : index
    %c0_110 = arith.constant 0 : index
    %192 = vector.load %arg25[%c0_109, %c0_110] : memref<1x32xf32, #tpu.memory_space<vmem>>, vector<1x32xf32>
    %c0_111 = arith.constant 0 : index
    %c0_112 = arith.constant 0 : index
    %193 = vector.load %arg26[%c0_111, %c0_112] : memref<1x32xf32, #tpu.memory_space<vmem>>, vector<1x32xf32>
    %cst_113 = arith.constant dense<0.000000e+00> : vector<8xf32>
    %194 = vector.multi_reduction <add>, %191, %cst_113 [1] : vector<8x32xf32> to vector<8xf32>
    %195 = vector.shape_cast %194 : vector<8xf32> to vector<8x1xf32>
    %cst_114 = arith.constant 3.200000e+01 : f32
    %196 = vector.broadcast %cst_114 : f32 to vector<8x1xf32>
    %197 = arith.divf %195, %196 : vector<8x1xf32>
    %198 = vector.broadcast %197 : vector<8x1xf32> to vector<8x32xf32>
    %199 = arith.subf %191, %198 : vector<8x32xf32>
    %200 = arith.mulf %199, %199 : vector<8x32xf32>
    %cst_115 = arith.constant dense<0.000000e+00> : vector<8xf32>
    %201 = vector.multi_reduction <add>, %200, %cst_115 [1] : vector<8x32xf32> to vector<8xf32>
    %202 = vector.shape_cast %201 : vector<8xf32> to vector<8x1xf32>
    %cst_116 = arith.constant 3.200000e+01 : f32
    %203 = vector.broadcast %cst_116 : f32 to vector<8x1xf32>
    %204 = arith.divf %202, %203 : vector<8x1xf32>
    %cst_117 = arith.constant 9.99999974E-6 : f32
    %205 = vector.broadcast %cst_117 : f32 to vector<8x1xf32>
    %206 = arith.addf %204, %205 : vector<8x1xf32>
    %207 = math.rsqrt %206 : vector<8x1xf32>
    %208 = vector.broadcast %207 : vector<8x1xf32> to vector<8x32xf32>
    %209 = arith.mulf %199, %208 : vector<8x32xf32>
    %210 = vector.broadcast %192 : vector<1x32xf32> to vector<8x32xf32>
    %211 = arith.mulf %209, %210 : vector<8x32xf32>
    %212 = vector.broadcast %193 : vector<1x32xf32> to vector<8x32xf32>
    %213 = arith.addf %211, %212 : vector<8x32xf32>
    %214 = arith.addf %213, %5 : vector<8x32xf32>
    %215 = arith.addf %3, %7 : vector<64x32xf32>
    %c0_118 = arith.constant 0 : index
    %c0_119 = arith.constant 0 : index
    %c0_120 = arith.constant 0 : index
    %216 = vector.load %arg13[%c0_118, %c0_119, %c0_120] : memref<3x32x16xf32, #tpu.memory_space<vmem>>, vector<1x32x16xf32>
    %217 = vector.shape_cast %216 : vector<1x32x16xf32> to vector<32x16xf32>
    %cst_121 = arith.constant dense<0.000000e+00> : vector<64x16xf32>
    %218 = tpu.matmul %215, %217, %cst_121 {dimension_numbers = #tpu.dot_dimension_numbers<[1], [0], [0], [1], [0, 0, 1, 1], [], []>} : vector<64x32xf32>, vector<32x16xf32>, vector<64x16xf32> -> vector<64x16xf32>
    %c0_122 = arith.constant 0 : index
    %c0_123 = arith.constant 0 : index
    %c0_124 = arith.constant 0 : index
    %219 = vector.load %arg14[%c0_122, %c0_123, %c0_124] : memref<3x1x16xf32, #tpu.memory_space<vmem>>, vector<1x1x16xf32>
    %220 = vector.shape_cast %219 : vector<1x1x16xf32> to vector<1x16xf32>
    %221 = vector.broadcast %220 : vector<1x16xf32> to vector<64x16xf32>
    %222 = arith.addf %218, %221 : vector<64x16xf32>
    %c1_125 = arith.constant 1 : index
    %c0_126 = arith.constant 0 : index
    %c0_127 = arith.constant 0 : index
    %223 = vector.load %arg13[%c1_125, %c0_126, %c0_127] : memref<3x32x16xf32, #tpu.memory_space<vmem>>, vector<1x32x16xf32>
    %224 = vector.shape_cast %223 : vector<1x32x16xf32> to vector<32x16xf32>
    %cst_128 = arith.constant dense<0.000000e+00> : vector<8x16xf32>
    %225 = tpu.matmul %214, %224, %cst_128 {dimension_numbers = #tpu.dot_dimension_numbers<[1], [0], [0], [1], [0, 0, 1, 1], [], []>} : vector<8x32xf32>, vector<32x16xf32>, vector<8x16xf32> -> vector<8x16xf32>
    %c1_129 = arith.constant 1 : index
    %c0_130 = arith.constant 0 : index
    %c0_131 = arith.constant 0 : index
    %226 = vector.load %arg14[%c1_129, %c0_130, %c0_131] : memref<3x1x16xf32, #tpu.memory_space<vmem>>, vector<1x1x16xf32>
    %227 = vector.shape_cast %226 : vector<1x1x16xf32> to vector<1x16xf32>
    %228 = vector.broadcast %227 : vector<1x16xf32> to vector<8x16xf32>
    %229 = arith.addf %225, %228 : vector<8x16xf32>
    %c2_132 = arith.constant 2 : index
    %c0_133 = arith.constant 0 : index
    %c0_134 = arith.constant 0 : index
    %230 = vector.load %arg13[%c2_132, %c0_133, %c0_134] : memref<3x32x16xf32, #tpu.memory_space<vmem>>, vector<1x32x16xf32>
    %231 = vector.shape_cast %230 : vector<1x32x16xf32> to vector<32x16xf32>
    %cst_135 = arith.constant dense<0.000000e+00> : vector<8x16xf32>
    %232 = tpu.matmul %213, %231, %cst_135 {dimension_numbers = #tpu.dot_dimension_numbers<[1], [0], [0], [1], [0, 0, 1, 1], [], []>} : vector<8x32xf32>, vector<32x16xf32>, vector<8x16xf32> -> vector<8x16xf32>
    %c2_136 = arith.constant 2 : index
    %c0_137 = arith.constant 0 : index
    %c0_138 = arith.constant 0 : index
    %233 = vector.load %arg14[%c2_136, %c0_137, %c0_138] : memref<3x1x16xf32, #tpu.memory_space<vmem>>, vector<1x1x16xf32>
    %234 = vector.shape_cast %233 : vector<1x1x16xf32> to vector<1x16xf32>
    %235 = vector.broadcast %234 : vector<1x16xf32> to vector<8x16xf32>
    %236 = arith.addf %232, %235 : vector<8x16xf32>
    %237 = vector.extract_strided_slice %222 {offsets = [0, 0], sizes = [64, 8], strides = [1, 1]} : vector<64x16xf32> to vector<64x8xf32>
    %238 = vector.extract_strided_slice %229 {offsets = [0, 0], sizes = [8, 8], strides = [1, 1]} : vector<8x16xf32> to vector<8x8xf32>
    %239 = vector.extract_strided_slice %236 {offsets = [0, 0], sizes = [8, 8], strides = [1, 1]} : vector<8x16xf32> to vector<8x8xf32>
    %cst_139 = arith.constant dense<0.000000e+00> : vector<64x8xf32>
    %240 = tpu.matmul %237, %238, %cst_139 {dimension_numbers = #tpu.dot_dimension_numbers<[1], [1], [0], [0], [0, 0, 1, 0], [], []>} : vector<64x8xf32>, vector<8x8xf32>, vector<64x8xf32> -> vector<64x8xf32>
    %cst_140 = arith.constant 0.353553385 : f32
    %241 = vector.broadcast %cst_140 : f32 to vector<64x8xf32>
    %242 = arith.mulf %240, %241 : vector<64x8xf32>
    %cst_141 = arith.constant dense<0xFF800000> : vector<64xf32>
    %243 = vector.multi_reduction <maximumf>, %242, %cst_141 [1] : vector<64x8xf32> to vector<64xf32>
    %244 = vector.shape_cast %243 : vector<64xf32> to vector<64x1xf32>
    %245 = vector.broadcast %244 : vector<64x1xf32> to vector<64x8xf32>
    %246 = arith.subf %242, %245 : vector<64x8xf32>
    %247 = math.exp %246 : vector<64x8xf32>
    %cst_142 = arith.constant dense<0.000000e+00> : vector<64xf32>
    %248 = vector.multi_reduction <add>, %247, %cst_142 [1] : vector<64x8xf32> to vector<64xf32>
    %249 = vector.shape_cast %248 : vector<64xf32> to vector<64x1xf32>
    %250 = tpu.reciprocal %249 {approx = true} : vector<64x1xf32> -> vector<64x1xf32>
    %251 = vector.broadcast %250 : vector<64x1xf32> to vector<64x8xf32>
    %252 = arith.mulf %247, %251 : vector<64x8xf32>
    %cst_143 = arith.constant dense<0.000000e+00> : vector<64x8xf32>
    %253 = tpu.matmul %252, %239, %cst_143 {dimension_numbers = #tpu.dot_dimension_numbers<[1], [0], [0], [1], [0, 0, 1, 1], [], []>} : vector<64x8xf32>, vector<8x8xf32>, vector<64x8xf32> -> vector<64x8xf32>
    %254 = vector.extract_strided_slice %222 {offsets = [0, 8], sizes = [64, 8], strides = [1, 1]} : vector<64x16xf32> to vector<64x8xf32>
    %255 = vector.extract_strided_slice %229 {offsets = [0, 8], sizes = [8, 8], strides = [1, 1]} : vector<8x16xf32> to vector<8x8xf32>
    %256 = vector.extract_strided_slice %236 {offsets = [0, 8], sizes = [8, 8], strides = [1, 1]} : vector<8x16xf32> to vector<8x8xf32>
    %cst_144 = arith.constant dense<0.000000e+00> : vector<64x8xf32>
    %257 = tpu.matmul %254, %255, %cst_144 {dimension_numbers = #tpu.dot_dimension_numbers<[1], [1], [0], [0], [0, 0, 1, 0], [], []>} : vector<64x8xf32>, vector<8x8xf32>, vector<64x8xf32> -> vector<64x8xf32>
    %cst_145 = arith.constant 0.353553385 : f32
    %258 = vector.broadcast %cst_145 : f32 to vector<64x8xf32>
    %259 = arith.mulf %257, %258 : vector<64x8xf32>
    %cst_146 = arith.constant dense<0xFF800000> : vector<64xf32>
    %260 = vector.multi_reduction <maximumf>, %259, %cst_146 [1] : vector<64x8xf32> to vector<64xf32>
    %261 = vector.shape_cast %260 : vector<64xf32> to vector<64x1xf32>
    %262 = vector.broadcast %261 : vector<64x1xf32> to vector<64x8xf32>
    %263 = arith.subf %259, %262 : vector<64x8xf32>
    %264 = math.exp %263 : vector<64x8xf32>
    %cst_147 = arith.constant dense<0.000000e+00> : vector<64xf32>
    %265 = vector.multi_reduction <add>, %264, %cst_147 [1] : vector<64x8xf32> to vector<64xf32>
    %266 = vector.shape_cast %265 : vector<64xf32> to vector<64x1xf32>
    %267 = tpu.reciprocal %266 {approx = true} : vector<64x1xf32> -> vector<64x1xf32>
    %268 = vector.broadcast %267 : vector<64x1xf32> to vector<64x8xf32>
    %269 = arith.mulf %264, %268 : vector<64x8xf32>
    %cst_148 = arith.constant dense<0.000000e+00> : vector<64x8xf32>
    %270 = tpu.matmul %269, %256, %cst_148 {dimension_numbers = #tpu.dot_dimension_numbers<[1], [0], [0], [1], [0, 0, 1, 1], [], []>} : vector<64x8xf32>, vector<8x8xf32>, vector<64x8xf32> -> vector<64x8xf32>
    %271 = tpu.concatenate %253, %270 in 1 : vector<64x8xf32>, vector<64x8xf32> -> vector<64x16xf32>
    %c0_149 = arith.constant 0 : index
    %c0_150 = arith.constant 0 : index
    %272 = vector.load %arg15[%c0_149, %c0_150] : memref<16x32xf32, #tpu.memory_space<vmem>>, vector<16x32xf32>
    %cst_151 = arith.constant dense<0.000000e+00> : vector<64x32xf32>
    %273 = tpu.matmul %271, %272, %cst_151 {dimension_numbers = #tpu.dot_dimension_numbers<[1], [0], [0], [1], [0, 0, 1, 1], [], []>} : vector<64x16xf32>, vector<16x32xf32>, vector<64x32xf32> -> vector<64x32xf32>
    %c0_152 = arith.constant 0 : index
    %c0_153 = arith.constant 0 : index
    %274 = vector.load %arg16[%c0_152, %c0_153] : memref<1x32xf32, #tpu.memory_space<vmem>>, vector<1x32xf32>
    %275 = vector.broadcast %274 : vector<1x32xf32> to vector<64x32xf32>
    %276 = arith.addf %273, %275 : vector<64x32xf32>
    %277 = arith.addf %3, %276 : vector<64x32xf32>
    %c0_154 = arith.constant 0 : index
    %c0_155 = arith.constant 0 : index
    %278 = vector.load %arg27[%c0_154, %c0_155] : memref<1x32xf32, #tpu.memory_space<vmem>>, vector<1x32xf32>
    %c0_156 = arith.constant 0 : index
    %c0_157 = arith.constant 0 : index
    %279 = vector.load %arg28[%c0_156, %c0_157] : memref<1x32xf32, #tpu.memory_space<vmem>>, vector<1x32xf32>
    %cst_158 = arith.constant dense<0.000000e+00> : vector<64xf32>
    %280 = vector.multi_reduction <add>, %277, %cst_158 [1] : vector<64x32xf32> to vector<64xf32>
    %281 = vector.shape_cast %280 : vector<64xf32> to vector<64x1xf32>
    %cst_159 = arith.constant 3.200000e+01 : f32
    %282 = vector.broadcast %cst_159 : f32 to vector<64x1xf32>
    %283 = arith.divf %281, %282 : vector<64x1xf32>
    %284 = vector.broadcast %283 : vector<64x1xf32> to vector<64x32xf32>
    %285 = arith.subf %277, %284 : vector<64x32xf32>
    %286 = arith.mulf %285, %285 : vector<64x32xf32>
    %cst_160 = arith.constant dense<0.000000e+00> : vector<64xf32>
    %287 = vector.multi_reduction <add>, %286, %cst_160 [1] : vector<64x32xf32> to vector<64xf32>
    %288 = vector.shape_cast %287 : vector<64xf32> to vector<64x1xf32>
    %cst_161 = arith.constant 3.200000e+01 : f32
    %289 = vector.broadcast %cst_161 : f32 to vector<64x1xf32>
    %290 = arith.divf %288, %289 : vector<64x1xf32>
    %cst_162 = arith.constant 9.99999974E-6 : f32
    %291 = vector.broadcast %cst_162 : f32 to vector<64x1xf32>
    %292 = arith.addf %290, %291 : vector<64x1xf32>
    %293 = math.rsqrt %292 : vector<64x1xf32>
    %294 = vector.broadcast %293 : vector<64x1xf32> to vector<64x32xf32>
    %295 = arith.mulf %285, %294 : vector<64x32xf32>
    %296 = vector.broadcast %278 : vector<1x32xf32> to vector<64x32xf32>
    %297 = arith.mulf %295, %296 : vector<64x32xf32>
    %298 = vector.broadcast %279 : vector<1x32xf32> to vector<64x32xf32>
    %299 = arith.addf %297, %298 : vector<64x32xf32>
    %c0_163 = arith.constant 0 : index
    %c0_164 = arith.constant 0 : index
    %c0_165 = arith.constant 0 : index
    %300 = vector.load %arg29[%c0_163, %c0_164, %c0_165] : memref<1x8x32xf32, #tpu.memory_space<vmem>>, vector<1x8x32xf32>
    %301 = vector.shape_cast %300 : vector<1x8x32xf32> to vector<8x32xf32>
    %302 = vector.shape_cast %213 : vector<8x32xf32> to vector<1x8x32xf32>
    tpu.vector_store %arg29[%c0_163, %c0_164, %c0_165], %302 {strides = array<i32>} : memref<1x8x32xf32, #tpu.memory_space<vmem>>, vector<1x8x32xf32>,
    %c0_166 = arith.constant 0 : index
    %c0_167 = arith.constant 0 : index
    %c0_168 = arith.constant 0 : index
    %303 = vector.load %arg30[%c0_166, %c0_167, %c0_168] : memref<1x64x32xf32, #tpu.memory_space<vmem>>, vector<1x64x32xf32>
    %304 = vector.shape_cast %303 : vector<1x64x32xf32> to vector<64x32xf32>
    %305 = vector.shape_cast %299 : vector<64x32xf32> to vector<1x64x32xf32>
    tpu.vector_store %arg30[%c0_166, %c0_167, %c0_168], %305 {strides = array<i32>} : memref<1x64x32xf32, #tpu.memory_space<vmem>>, vector<1x64x32xf32>,
    return
  }
  func.func @transform_0(%arg0: i32) -> (i32, i32, i32) {
    %c0_i32 = arith.constant 0 : i32
    %c0_i32_0 = arith.constant 0 : i32
    %c0_i32_1 = arith.constant 0 : i32
    return %arg0, %c0_i32, %c0_i32_0 : i32, i32, i32
  }
  func.func @transform_1(%arg0: i32) -> (i32, i32, i32) {
    %c0_i32 = arith.constant 0 : i32
    %c0_i32_0 = arith.constant 0 : i32
    %c0_i32_1 = arith.constant 0 : i32
    return %arg0, %c0_i32, %c0_i32_0 : i32, i32, i32
  }
  func.func @transform_2(%arg0: i32) -> (i32, i32, i32) {
    %c0_i32 = arith.constant 0 : i32
    %c0_i32_0 = arith.constant 0 : i32
    %c0_i32_1 = arith.constant 0 : i32
    return %arg0, %c0_i32, %c0_i32_0 : i32, i32, i32
  }
  func.func @transform_3(%arg0: i32) -> (i32, i32, i32) {
    %c0_i32 = arith.constant 0 : i32
    %c0_i32_0 = arith.constant 0 : i32
    %c0_i32_1 = arith.constant 0 : i32
    return %arg0, %c0_i32, %c0_i32_0 : i32, i32, i32
  }
  func.func @transform_4(%arg0: i32) -> (i32, i32, i32) {
    %c0_i32 = arith.constant 0 : i32
    %c0_i32_0 = arith.constant 0 : i32
    %c0_i32_1 = arith.constant 0 : i32
    %c0_i32_2 = arith.constant 0 : i32
    return %c0_i32, %c0_i32_0, %c0_i32_1 : i32, i32, i32
  }
  func.func @transform_5(%arg0: i32) -> (i32, i32, i32) {
    %c0_i32 = arith.constant 0 : i32
    %c0_i32_0 = arith.constant 0 : i32
    %c0_i32_1 = arith.constant 0 : i32
    %c0_i32_2 = arith.constant 0 : i32
    return %c0_i32, %c0_i32_0, %c0_i32_1 : i32, i32, i32
  }
  func.func @transform_6(%arg0: i32) -> (i32, i32) {
    %c0_i32 = arith.constant 0 : i32
    %c0_i32_0 = arith.constant 0 : i32
    %c0_i32_1 = arith.constant 0 : i32
    return %c0_i32, %c0_i32_0 : i32, i32
  }
  func.func @transform_7(%arg0: i32) -> (i32, i32) {
    %c0_i32 = arith.constant 0 : i32
    %c0_i32_0 = arith.constant 0 : i32
    %c0_i32_1 = arith.constant 0 : i32
    return %c0_i32, %c0_i32_0 : i32, i32
  }
  func.func @transform_8(%arg0: i32) -> (i32, i32, i32) {
    %c0_i32 = arith.constant 0 : i32
    %c0_i32_0 = arith.constant 0 : i32
    %c0_i32_1 = arith.constant 0 : i32
    %c0_i32_2 = arith.constant 0 : i32
    return %c0_i32, %c0_i32_0, %c0_i32_1 : i32, i32, i32
  }
  func.func @transform_9(%arg0: i32) -> (i32, i32, i32) {
    %c0_i32 = arith.constant 0 : i32
    %c0_i32_0 = arith.constant 0 : i32
    %c0_i32_1 = arith.constant 0 : i32
    %c0_i32_2 = arith.constant 0 : i32
    return %c0_i32, %c0_i32_0, %c0_i32_1 : i32, i32, i32
  }
  func.func @transform_10(%arg0: i32) -> (i32, i32) {
    %c0_i32 = arith.constant 0 : i32
    %c0_i32_0 = arith.constant 0 : i32
    %c0_i32_1 = arith.constant 0 : i32
    return %c0_i32, %c0_i32_0 : i32, i32
  }
  func.func @transform_11(%arg0: i32) -> (i32, i32) {
    %c0_i32 = arith.constant 0 : i32
    %c0_i32_0 = arith.constant 0 : i32
    %c0_i32_1 = arith.constant 0 : i32
    return %c0_i32, %c0_i32_0 : i32, i32
  }
  func.func @transform_12(%arg0: i32) -> (i32, i32, i32) {
    %c0_i32 = arith.constant 0 : i32
    %c0_i32_0 = arith.constant 0 : i32
    %c0_i32_1 = arith.constant 0 : i32
    %c0_i32_2 = arith.constant 0 : i32
    return %c0_i32, %c0_i32_0, %c0_i32_1 : i32, i32, i32
  }
  func.func @transform_13(%arg0: i32) -> (i32, i32, i32) {
    %c0_i32 = arith.constant 0 : i32
    %c0_i32_0 = arith.constant 0 : i32
    %c0_i32_1 = arith.constant 0 : i32
    %c0_i32_2 = arith.constant 0 : i32
    return %c0_i32, %c0_i32_0, %c0_i32_1 : i32, i32, i32
  }
  func.func @transform_14(%arg0: i32) -> (i32, i32) {
    %c0_i32 = arith.constant 0 : i32
    %c0_i32_0 = arith.constant 0 : i32
    %c0_i32_1 = arith.constant 0 : i32
    return %c0_i32, %c0_i32_0 : i32, i32
  }
  func.func @transform_15(%arg0: i32) -> (i32, i32) {
    %c0_i32 = arith.constant 0 : i32
    %c0_i32_0 = arith.constant 0 : i32
    %c0_i32_1 = arith.constant 0 : i32
    return %c0_i32, %c0_i32_0 : i32, i32
  }
  func.func @transform_16(%arg0: i32) -> (i32, i32) {
    %c0_i32 = arith.constant 0 : i32
    %c0_i32_0 = arith.constant 0 : i32
    %c0_i32_1 = arith.constant 0 : i32
    return %c0_i32, %c0_i32_0 : i32, i32
  }
  func.func @transform_17(%arg0: i32) -> (i32, i32) {
    %c0_i32 = arith.constant 0 : i32
    %c0_i32_0 = arith.constant 0 : i32
    %c0_i32_1 = arith.constant 0 : i32
    return %c0_i32, %c0_i32_0 : i32, i32
  }
  func.func @transform_18(%arg0: i32) -> (i32, i32) {
    %c0_i32 = arith.constant 0 : i32
    %c0_i32_0 = arith.constant 0 : i32
    %c0_i32_1 = arith.constant 0 : i32
    return %c0_i32, %c0_i32_0 : i32, i32
  }
  func.func @transform_19(%arg0: i32) -> (i32, i32) {
    %c0_i32 = arith.constant 0 : i32
    %c0_i32_0 = arith.constant 0 : i32
    %c0_i32_1 = arith.constant 0 : i32
    return %c0_i32, %c0_i32_0 : i32, i32
  }
  func.func @transform_20(%arg0: i32) -> (i32, i32) {
    %c0_i32 = arith.constant 0 : i32
    %c0_i32_0 = arith.constant 0 : i32
    %c0_i32_1 = arith.constant 0 : i32
    return %c0_i32, %c0_i32_0 : i32, i32
  }
  func.func @transform_21(%arg0: i32) -> (i32, i32) {
    %c0_i32 = arith.constant 0 : i32
    %c0_i32_0 = arith.constant 0 : i32
    %c0_i32_1 = arith.constant 0 : i32
    return %c0_i32, %c0_i32_0 : i32, i32
  }
  func.func @transform_22(%arg0: i32) -> (i32, i32) {
    %c0_i32 = arith.constant 0 : i32
    %c0_i32_0 = arith.constant 0 : i32
    %c0_i32_1 = arith.constant 0 : i32
    return %c0_i32, %c0_i32_0 : i32, i32
  }
  func.func @transform_23(%arg0: i32) -> (i32, i32) {
    %c0_i32 = arith.constant 0 : i32
    %c0_i32_0 = arith.constant 0 : i32
    %c0_i32_1 = arith.constant 0 : i32
    return %c0_i32, %c0_i32_0 : i32, i32
  }
  func.func @transform_24(%arg0: i32) -> (i32, i32) {
    %c0_i32 = arith.constant 0 : i32
    %c0_i32_0 = arith.constant 0 : i32
    %c0_i32_1 = arith.constant 0 : i32
    return %c0_i32, %c0_i32_0 : i32, i32
  }
  func.func @transform_25(%arg0: i32) -> (i32, i32) {
    %c0_i32 = arith.constant 0 : i32
    %c0_i32_0 = arith.constant 0 : i32
    %c0_i32_1 = arith.constant 0 : i32
    return %c0_i32, %c0_i32_0 : i32, i32
  }
  func.func @transform_26(%arg0: i32) -> (i32, i32) {
    %c0_i32 = arith.constant 0 : i32
    %c0_i32_0 = arith.constant 0 : i32
    %c0_i32_1 = arith.constant 0 : i32
    return %c0_i32, %c0_i32_0 : i32, i32
  }
  func.func @transform_27(%arg0: i32) -> (i32, i32) {
    %c0_i32 = arith.constant 0 : i32
    %c0_i32_0 = arith.constant 0 : i32
    %c0_i32_1 = arith.constant 0 : i32
    return %c0_i32, %c0_i32_0 : i32, i32
  }
  func.func @transform_28(%arg0: i32) -> (i32, i32, i32) {
    %c0_i32 = arith.constant 0 : i32
    %c0_i32_0 = arith.constant 0 : i32
    %c0_i32_1 = arith.constant 0 : i32
    return %arg0, %c0_i32, %c0_i32_0 : i32, i32, i32
  }
  func.func @transform_29(%arg0: i32) -> (i32, i32, i32) {
    %c0_i32 = arith.constant 0 : i32
    %c0_i32_0 = arith.constant 0 : i32
    %c0_i32_1 = arith.constant 0 : i32
    return %arg0, %c0_i32, %c0_i32_0 : i32, i32, i32
  }
}

</mosaic_0001>

<llo_original>
// kernel: tpu_custom_call.1
$region0: #{tpu_custom_call.1}
  #allocation0 [shape = 'u32[]', space=smem, size = 0x4, offset = 0x4, fixed_abs, tag = 'smem constant byte address 0x4 - core index']
  #allocation1 [shape = 'u32[144,128]{1,0:T(1,128)}', space=vmem, size = 0x12000, scoped, tag = 'internal scratch']
  %s0 = inlined_call_operand.smem [shape: u32[30], index: -1, kind: input, shape index: {}]
  %s1 = sld [smem:[%s0]]
  %s2 = scalar_lea.smem %s0, 1
  %s3 = sld [smem:[%s2]]
  %s4 = scalar_lea.smem %s0, 2
  %s5 = sld [smem:[%s4]]
  %s6 = scalar_lea.smem %s0, 3
  %s7 = sld [smem:[%s6]]
  %s8 = scalar_lea.smem %s0, 4
  %s9 = sld [smem:[%s8]]
  %s10 = scalar_lea.smem %s0, 5
  %s11 = sld [smem:[%s10]]
  %s12 = scalar_lea.smem %s0, 6
  %s13 = sld [smem:[%s12]]
  %s14 = scalar_lea.smem %s0, 7
  %s15 = sld [smem:[%s14]]
  %s16 = scalar_lea.smem %s0, 8
  %s17 = sld [smem:[%s16]]
  %s18 = scalar_lea.smem %s0, 9
  %s19 = sld [smem:[%s18]]
  %s20 = scalar_lea.smem %s0, 10
  %s21 = sld [smem:[%s20]]
  %s22 = scalar_lea.smem %s0, 11
  %s23 = sld [smem:[%s22]]
  %s24 = scalar_lea.smem %s0, 12
  %s25 = sld [smem:[%s24]]
  %s26 = scalar_lea.smem %s0, 13
  %s27 = sld [smem:[%s26]]
  %s28 = scalar_lea.smem %s0, 14
  %s29 = sld [smem:[%s28]]
  %s30 = scalar_lea.smem %s0, 15
  %s31 = sld [smem:[%s30]]
  %s32 = scalar_lea.smem %s0, 16
  %s33 = sld [smem:[%s32]]
  %s34 = scalar_lea.smem %s0, 17
  %s35 = sld [smem:[%s34]]
  %s36 = scalar_lea.smem %s0, 18
  %s37 = sld [smem:[%s36]]
  %s38 = scalar_lea.smem %s0, 19
  %s39 = sld [smem:[%s38]]
  %s40 = scalar_lea.smem %s0, 20
  %s41 = sld [smem:[%s40]]
  %s42 = scalar_lea.smem %s0, 21
  %s43 = sld [smem:[%s42]]
  %s44 = scalar_lea.smem %s0, 22
  %s45 = sld [smem:[%s44]]
  %s46 = scalar_lea.smem %s0, 23
  %s47 = sld [smem:[%s46]]
  %s48 = scalar_lea.smem %s0, 24
  %s49 = sld [smem:[%s48]]
  %s50 = scalar_lea.smem %s0, 25
  %s51 = sld [smem:[%s50]]
  %s52 = scalar_lea.smem %s0, 26
  %s53 = sld [smem:[%s52]]
  %s54 = scalar_lea.smem %s0, 27
  %s55 = sld [smem:[%s54]]
  %s56 = scalar_lea.smem %s0, 28
  %s57 = sld [smem:[%s56]]
  %s58 = scalar_lea.smem %s0, 29
  %s59 = sld [smem:[%s58]]
  %60 = xla_tuple %s57, %s59
  %s61 = sld [smem:[#allocation0]]
  $region153: #{tpu_custom_call.1} parent=0
    _
  %s63 = ssub.s32 1, %s61
  %s64 = scalar_select 0, %s63, %s61
  $region1: #{tpu_custom_call.1} parent=0
    #allocation2 [shape = 'u8[8192]{0}', space=vmem, size = 0x2000, scoped, tag = 'output window, operand 0']
    #allocation3 [shape = 's32[2]{0}', space=sflag, size = 0x8, scoped, tag = 'scoped memory for tpu_custom_call.1']
    %65 = vsyncpa [#allocation3], 0
    %s66 = scalar_lea.sflag [#allocation3], 1
    %67 = vsyncpa %s66, 0
    loop: start=0, step=1, limit=4
    $region2: #{tpu_custom_call.1} parent=1 // loop_pre_header
      _
    $region3: #{tpu_custom_call.1} parent=1 // loop_header
      %s69 = sphi 0, %s73
      %p70 = scmp.ge.s32.totalorder %s69, 4
      %s79 = sphi 0, %s81
      %s82 = sphi 0, %s79
      %s83 = sphi 0, %s82
      %s99 = sphi 0, %s83
      %s105 = sphi 0, %s107
      %s108 = sphi 0, %s105
      %s109 = sphi 0, %s108
      %s125 = sphi 0, %s109
      %s131 = sphi 0, %s133
      %s134 = sphi 0, %s131
      %s135 = sphi 0, %s134
      %s151 = sphi 0, %s135
      %s157 = sphi 0, %s159
      %s160 = sphi 0, %s157
      %s161 = sphi 0, %s160
      %s177 = sphi 0, %s161
      %s181 = sphi 0, %s181
      %s183 = sphi 0, %s181
      %s184 = sphi 0, %s183
      %s198 = sphi 0, %s184
      %s202 = sphi 0, %s202
      %s204 = sphi 0, %s202
      %s205 = sphi 0, %s204
      %s219 = sphi 0, %s205
      %s223 = sphi 0, %s223
      %s225 = sphi 0, %s223
      %s226 = sphi 0, %s225
      %s240 = sphi 0, %s226
      %s244 = sphi 0, %s244
      %s246 = sphi 0, %s244
      %s247 = sphi 0, %s246
      %s261 = sphi 0, %s247
      %s265 = sphi 0, %s265
      %s267 = sphi 0, %s265
      %s268 = sphi 0, %s267
      %s282 = sphi 0, %s268
      %s286 = sphi 0, %s286
      %s288 = sphi 0, %s286
      %s289 = sphi 0, %s288
      %s303 = sphi 0, %s289
      %s307 = sphi 0, %s307
      %s309 = sphi 0, %s307
      %s310 = sphi 0, %s309
      %s324 = sphi 0, %s310
      %s328 = sphi 0, %s328
      %s330 = sphi 0, %s328
      %s331 = sphi 0, %s330
      %s345 = sphi 0, %s331
      %s349 = sphi 0, %s349
      %s351 = sphi 0, %s349
      %s352 = sphi 0, %s351
      %s366 = sphi 0, %s352
      %s370 = sphi 0, %s370
      %s372 = sphi 0, %s370
      %s373 = sphi 0, %s372
      %s387 = sphi 0, %s373
      %s391 = sphi 0, %s391
      %s393 = sphi 0, %s391
      %s394 = sphi 0, %s393
      %s408 = sphi 0, %s394
      %s412 = sphi 0, %s412
      %s414 = sphi 0, %s412
      %s415 = sphi 0, %s414
      %s429 = sphi 0, %s415
      %s433 = sphi 0, %s433
      %s435 = sphi 0, %s433
      %s436 = sphi 0, %s435
      %s450 = sphi 0, %s436
      %s454 = sphi 0, %s454
      %s456 = sphi 0, %s454
      %s457 = sphi 0, %s456
      %s471 = sphi 0, %s457
      %s475 = sphi 0, %s475
      %s477 = sphi 0, %s475
      %s478 = sphi 0, %s477
      %s492 = sphi 0, %s478
      %s496 = sphi 0, %s496
      %s498 = sphi 0, %s496
      %s499 = sphi 0, %s498
      %s513 = sphi 0, %s499
      %s517 = sphi 0, %s517
      %s519 = sphi 0, %s517
      %s520 = sphi 0, %s519
      %s534 = sphi 0, %s520
      %s538 = sphi 0, %s538
      %s540 = sphi 0, %s538
      %s541 = sphi 0, %s540
      %s555 = sphi 0, %s541
      %s559 = sphi 0, %s559
      %s561 = sphi 0, %s559
      %s562 = sphi 0, %s561
      %s576 = sphi 0, %s562
      %s580 = sphi 0, %s580
      %s582 = sphi 0, %s580
      %s583 = sphi 0, %s582
      %s597 = sphi 0, %s583
      %s601 = sphi 0, %s601
      %s603 = sphi 0, %s601
      %s604 = sphi 0, %s603
      %s618 = sphi 0, %s604
      %s622 = sphi 0, %s622
      %s624 = sphi 0, %s622
      %s625 = sphi 0, %s624
      %s639 = sphi 0, %s625
      %s643 = sphi 0, %s643
      %s645 = sphi 0, %s643
      %s646 = sphi 0, %s645
      %s660 = sphi 0, %s646
      %s664 = sphi 0, %s664
      %s666 = sphi 0, %s664
      %s667 = sphi 0, %s666
      %s681 = sphi 0, %s667
      %s687 = sphi 0, %s689
      %s690 = sphi 0, %s687
      %s691 = sphi 0, %s690
      %s707 = sphi 0, %s691
      %s713 = sphi 0, %s715
      %s716 = sphi 0, %s713
      %s717 = sphi 0, %s716
      %s733 = sphi 0, %s717
    $region4: #{tpu_custom_call.1} parent=1 // loop_header_branch
      %72 = sbr.rel (%p70) target = $region8
    $region5: #{tpu_custom_call.1} parent=1 // loop_body
      %s74 = ssub.s32 %s69, 1
      %s75 = ssub.s32 %s69, 2
      %s76 = sadd.s32 %s69, 1
      %s77 = ssub.s32 %s69, %s76
      %p78 = scmp.eq.s32.totalorder %s77, 0
      %s80 = sadd.s32 %s79, 1
      %s81 = scalar_select %p78, %s79, %s80
      %p84 = pneg %p78
      %p85 = scmp.eq.s32.totalorder %s69, 1
      %p86 = por %p84, %p85
      %p87 = scmp.ne.s32.totalorder %s79, %s82
      %p88 = scmp.eq.s32.totalorder %s69, 0
      %p89 = por %p87, %p88
      %p90 = scmp.ne.s32.totalorder %s79, %s82
      %p91 = scmp.eq.s32.totalorder %s74, 1
      %p92 = por %p90, %p91
      %p93 = scmp.ne.s32.totalorder %s82, %s83
      %p94 = scmp.eq.s32.totalorder %s74, 0
      %p95 = por %p93, %p94
      %p96 = scmp.ne.s32.totalorder %s82, %s83
      %p97 = scmp.eq.s32.totalorder %s75, 1
      %p98 = por %p96, %p97
      %p100 = scmp.ne.s32.totalorder %s83, %s99
      %p101 = scmp.eq.s32.totalorder %s75, 0
      %p102 = por %p100, %p101
      %s103 = ssub.s32 %s69, %s76
      %p104 = scmp.eq.s32.totalorder %s103, 0
      %s106 = sadd.s32 %s105, 1
      %s107 = scalar_select %p104, %s105, %s106
      %p110 = pneg %p104
      %p111 = scmp.eq.s32.totalorder %s69, 1
      %p112 = por %p110, %p111
      %p113 = scmp.ne.s32.totalorder %s105, %s108
      %p114 = scmp.eq.s32.totalorder %s69, 0
      %p115 = por %p113, %p114
      %p116 = scmp.ne.s32.totalorder %s105, %s108
      %p117 = scmp.eq.s32.totalorder %s74, 1
      %p118 = por %p116, %p117
      %p119 = scmp.ne.s32.totalorder %s108, %s109
      %p120 = scmp.eq.s32.totalorder %s74, 0
      %p121 = por %p119, %p120
      %p122 = scmp.ne.s32.totalorder %s108, %s109
      %p123 = scmp.eq.s32.totalorder %s75, 1
      %p124 = por %p122, %p123
      %p126 = scmp.ne.s32.totalorder %s109, %s125
      %p127 = scmp.eq.s32.totalorder %s75, 0
      %p128 = por %p126, %p127
      %s129 = ssub.s32 %s69, %s76
      %p130 = scmp.eq.s32.totalorder %s129, 0
      %s132 = sadd.s32 %s131, 1
      %s133 = scalar_select %p130, %s131, %s132
      %p136 = pneg %p130
      %p137 = scmp.eq.s32.totalorder %s69, 1
      %p138 = por %p136, %p137
      %p139 = scmp.ne.s32.totalorder %s131, %s134
      %p140 = scmp.eq.s32.totalorder %s69, 0
      %p141 = por %p139, %p140
      %p142 = scmp.ne.s32.totalorder %s131, %s134
      %p143 = scmp.eq.s32.totalorder %s74, 1
      %p144 = por %p142, %p143
      %p145 = scmp.ne.s32.totalorder %s134, %s135
      %p146 = scmp.eq.s32.totalorder %s74, 0
      %p147 = por %p145, %p146
      %p148 = scmp.ne.s32.totalorder %s134, %s135
      %p149 = scmp.eq.s32.totalorder %s75, 1
      %p150 = por %p148, %p149
      %p152 = scmp.ne.s32.totalorder %s135, %s151
      %p153 = scmp.eq.s32.totalorder %s75, 0
      %p154 = por %p152, %p153
      %s155 = ssub.s32 %s69, %s76
      %p156 = scmp.eq.s32.totalorder %s155, 0
      %s158 = sadd.s32 %s157, 1
      %s159 = scalar_select %p156, %s157, %s158
      %p162 = pneg %p156
      %p163 = scmp.eq.s32.totalorder %s69, 1
      %p164 = por %p162, %p163
      %p165 = scmp.ne.s32.totalorder %s157, %s160
      %p166 = scmp.eq.s32.totalorder %s69, 0
      %p167 = por %p165, %p166
      %p168 = scmp.ne.s32.totalorder %s157, %s160
      %p169 = scmp.eq.s32.totalorder %s74, 1
      %p170 = por %p168, %p169
      %p171 = scmp.ne.s32.totalorder %s160, %s161
      %p172 = scmp.eq.s32.totalorder %s74, 0
      %p173 = por %p171, %p172
      %p174 = scmp.ne.s32.totalorder %s160, %s161
      %p175 = scmp.eq.s32.totalorder %s75, 1
      %p176 = por %p174, %p175
      %p178 = scmp.ne.s32.totalorder %s161, %s177
      %p179 = scmp.eq.s32.totalorder %s75, 0
      %p180 = por %p178, %p179
      %s182 = sadd.s32 %s181, 1
      %p185 = scmp.eq.s32.totalorder %s69, 1
      %p186 = scmp.ne.s32.totalorder %s181, %s183
      %p187 = scmp.eq.s32.totalorder %s69, 0
      %p188 = por %p186, %p187
      %p189 = scmp.ne.s32.totalorder %s181, %s183
      %p190 = scmp.eq.s32.totalorder %s74, 1
      %p191 = por %p189, %p190
      %p192 = scmp.ne.s32.totalorder %s183, %s184
      %p193 = scmp.eq.s32.totalorder %s74, 0
      %p194 = por %p192, %p193
      %p195 = scmp.ne.s32.totalorder %s183, %s184
      %p196 = scmp.eq.s32.totalorder %s75, 1
      %p197 = por %p195, %p196
      %p199 = scmp.ne.s32.totalorder %s184, %s198
      %p200 = scmp.eq.s32.totalorder %s75, 0
      %p201 = por %p199, %p200
      %s203 = sadd.s32 %s202, 1
      %p206 = scmp.eq.s32.totalorder %s69, 1
      %p207 = scmp.ne.s32.totalorder %s202, %s204
      %p208 = scmp.eq.s32.totalorder %s69, 0
      %p209 = por %p207, %p208
      %p210 = scmp.ne.s32.totalorder %s202, %s204
      %p211 = scmp.eq.s32.totalorder %s74, 1
      %p212 = por %p210, %p211
      %p213 = scmp.ne.s32.totalorder %s204, %s205
      %p214 = scmp.eq.s32.totalorder %s74, 0
      %p215 = por %p213, %p214
      %p216 = scmp.ne.s32.totalorder %s204, %s205
      %p217 = scmp.eq.s32.totalorder %s75, 1
      %p218 = por %p216, %p217
      %p220 = scmp.ne.s32.totalorder %s205, %s219
      %p221 = scmp.eq.s32.totalorder %s75, 0
      %p222 = por %p220, %p221
      %s224 = sadd.s32 %s223, 1
      %p227 = scmp.eq.s32.totalorder %s69, 1
      %p228 = scmp.ne.s32.totalorder %s223, %s225
      %p229 = scmp.eq.s32.totalorder %s69, 0
      %p230 = por %p228, %p229
      %p231 = scmp.ne.s32.totalorder %s223, %s225
      %p232 = scmp.eq.s32.totalorder %s74, 1
      %p233 = por %p231, %p232
      %p234 = scmp.ne.s32.totalorder %s225, %s226
      %p235 = scmp.eq.s32.totalorder %s74, 0
      %p236 = por %p234, %p235
      %p237 = scmp.ne.s32.totalorder %s225, %s226
      %p238 = scmp.eq.s32.totalorder %s75, 1
      %p239 = por %p237, %p238
      %p241 = scmp.ne.s32.totalorder %s226, %s240
      %p242 = scmp.eq.s32.totalorder %s75, 0
      %p243 = por %p241, %p242
      %s245 = sadd.s32 %s244, 1
      %p248 = scmp.eq.s32.totalorder %s69, 1
      %p249 = scmp.ne.s32.totalorder %s244, %s246
      %p250 = scmp.eq.s32.totalorder %s69, 0
      %p251 = por %p249, %p250
      %p252 = scmp.ne.s32.totalorder %s244, %s246
      %p253 = scmp.eq.s32.totalorder %s74, 1
      %p254 = por %p252, %p253
      %p255 = scmp.ne.s32.totalorder %s246, %s247
      %p256 = scmp.eq.s32.totalorder %s74, 0
      %p257 = por %p255, %p256
      %p258 = scmp.ne.s32.totalorder %s246, %s247
      %p259 = scmp.eq.s32.totalorder %s75, 1
      %p260 = por %p258, %p259
      %p262 = scmp.ne.s32.totalorder %s247, %s261
      %p263 = scmp.eq.s32.totalorder %s75, 0
      %p264 = por %p262, %p263
      %s266 = sadd.s32 %s265, 1
      %p269 = scmp.eq.s32.totalorder %s69, 1
      %p270 = scmp.ne.s32.totalorder %s265, %s267
      %p271 = scmp.eq.s32.totalorder %s69, 0
      %p272 = por %p270, %p271
      %p273 = scmp.ne.s32.totalorder %s265, %s267
      %p274 = scmp.eq.s32.totalorder %s74, 1
      %p275 = por %p273, %p274
      %p276 = scmp.ne.s32.totalorder %s267, %s268
      %p277 = scmp.eq.s32.totalorder %s74, 0
      %p278 = por %p276, %p277
      %p279 = scmp.ne.s32.totalorder %s267, %s268
      %p280 = scmp.eq.s32.totalorder %s75, 1
      %p281 = por %p279, %p280
      %p283 = scmp.ne.s32.totalorder %s268, %s282
      %p284 = scmp.eq.s32.totalorder %s75, 0
      %p285 = por %p283, %p284
      %s287 = sadd.s32 %s286, 1
      %p290 = scmp.eq.s32.totalorder %s69, 1
      %p291 = scmp.ne.s32.totalorder %s286, %s288
      %p292 = scmp.eq.s32.totalorder %s69, 0
      %p293 = por %p291, %p292
      %p294 = scmp.ne.s32.totalorder %s286, %s288
      %p295 = scmp.eq.s32.totalorder %s74, 1
      %p296 = por %p294, %p295
      %p297 = scmp.ne.s32.totalorder %s288, %s289
      %p298 = scmp.eq.s32.totalorder %s74, 0
      %p299 = por %p297, %p298
      %p300 = scmp.ne.s32.totalorder %s288, %s289
      %p301 = scmp.eq.s32.totalorder %s75, 1
      %p302 = por %p300, %p301
      %p304 = scmp.ne.s32.totalorder %s289, %s303
      %p305 = scmp.eq.s32.totalorder %s75, 0
      %p306 = por %p304, %p305
      %s308 = sadd.s32 %s307, 1
      %p311 = scmp.eq.s32.totalorder %s69, 1
      %p312 = scmp.ne.s32.totalorder %s307, %s309
      %p313 = scmp.eq.s32.totalorder %s69, 0
      %p314 = por %p312, %p313
      %p315 = scmp.ne.s32.totalorder %s307, %s309
      %p316 = scmp.eq.s32.totalorder %s74, 1
      %p317 = por %p315, %p316
      %p318 = scmp.ne.s32.totalorder %s309, %s310
      %p319 = scmp.eq.s32.totalorder %s74, 0
      %p320 = por %p318, %p319
      %p321 = scmp.ne.s32.totalorder %s309, %s310
      %p322 = scmp.eq.s32.totalorder %s75, 1
      %p323 = por %p321, %p322
      %p325 = scmp.ne.s32.totalorder %s310, %s324
      %p326 = scmp.eq.s32.totalorder %s75, 0
      %p327 = por %p325, %p326
      %s329 = sadd.s32 %s328, 1
      %p332 = scmp.eq.s32.totalorder %s69, 1
      %p333 = scmp.ne.s32.totalorder %s328, %s330
      %p334 = scmp.eq.s32.totalorder %s69, 0
      %p335 = por %p333, %p334
      %p336 = scmp.ne.s32.totalorder %s328, %s330
      %p337 = scmp.eq.s32.totalorder %s74, 1
      %p338 = por %p336, %p337
      %p339 = scmp.ne.s32.totalorder %s330, %s331
      %p340 = scmp.eq.s32.totalorder %s74, 0
      %p341 = por %p339, %p340
      %p342 = scmp.ne.s32.totalorder %s330, %s331
      %p343 = scmp.eq.s32.totalorder %s75, 1
      %p344 = por %p342, %p343
      %p346 = scmp.ne.s32.totalorder %s331, %s345
      %p347 = scmp.eq.s32.totalorder %s75, 0
      %p348 = por %p346, %p347
      %s350 = sadd.s32 %s349, 1
      %p353 = scmp.eq.s32.totalorder %s69, 1
      %p354 = scmp.ne.s32.totalorder %s349, %s351
      %p355 = scmp.eq.s32.totalorder %s69, 0
      %p356 = por %p354, %p355
      %p357 = scmp.ne.s32.totalorder %s349, %s351
      %p358 = scmp.eq.s32.totalorder %s74, 1
      %p359 = por %p357, %p358
      %p360 = scmp.ne.s32.totalorder %s351, %s352
      %p361 = scmp.eq.s32.totalorder %s74, 0
      %p362 = por %p360, %p361
      %p363 = scmp.ne.s32.totalorder %s351, %s352
      %p364 = scmp.eq.s32.totalorder %s75, 1
      %p365 = por %p363, %p364
      %p367 = scmp.ne.s32.totalorder %s352, %s366
      %p368 = scmp.eq.s32.totalorder %s75, 0
      %p369 = por %p367, %p368
      %s371 = sadd.s32 %s370, 1
      %p374 = scmp.eq.s32.totalorder %s69, 1
      %p375 = scmp.ne.s32.totalorder %s370, %s372
      %p376 = scmp.eq.s32.totalorder %s69, 0
      %p377 = por %p375, %p376
      %p378 = scmp.ne.s32.totalorder %s370, %s372
      %p379 = scmp.eq.s32.totalorder %s74, 1
      %p380 = por %p378, %p379
      %p381 = scmp.ne.s32.totalorder %s372, %s373
      %p382 = scmp.eq.s32.totalorder %s74, 0
      %p383 = por %p381, %p382
      %p384 = scmp.ne.s32.totalorder %s372, %s373
      %p385 = scmp.eq.s32.totalorder %s75, 1
      %p386 = por %p384, %p385
      %p388 = scmp.ne.s32.totalorder %s373, %s387
      %p389 = scmp.eq.s32.totalorder %s75, 0
      %p390 = por %p388, %p389
      %s392 = sadd.s32 %s391, 1
      %p395 = scmp.eq.s32.totalorder %s69, 1
      %p396 = scmp.ne.s32.totalorder %s391, %s393
      %p397 = scmp.eq.s32.totalorder %s69, 0
      %p398 = por %p396, %p397
      %p399 = scmp.ne.s32.totalorder %s391, %s393
      %p400 = scmp.eq.s32.totalorder %s74, 1
      %p401 = por %p399, %p400
      %p402 = scmp.ne.s32.totalorder %s393, %s394
      %p403 = scmp.eq.s32.totalorder %s74, 0
      %p404 = por %p402, %p403
      %p405 = scmp.ne.s32.totalorder %s393, %s394
      %p406 = scmp.eq.s32.totalorder %s75, 1
      %p407 = por %p405, %p406
      %p409 = scmp.ne.s32.totalorder %s394, %s408
      %p410 = scmp.eq.s32.totalorder %s75, 0
      %p411 = por %p409, %p410
      %s413 = sadd.s32 %s412, 1
      %p416 = scmp.eq.s32.totalorder %s69, 1
      %p417 = scmp.ne.s32.totalorder %s412, %s414
      %p418 = scmp.eq.s32.totalorder %s69, 0
      %p419 = por %p417, %p418
      %p420 = scmp.ne.s32.totalorder %s412, %s414
      %p421 = scmp.eq.s32.totalorder %s74, 1
      %p422 = por %p420, %p421
      %p423 = scmp.ne.s32.totalorder %s414, %s415
      %p424 = scmp.eq.s32.totalorder %s74, 0
      %p425 = por %p423, %p424
      %p426 = scmp.ne.s32.totalorder %s414, %s415
      %p427 = scmp.eq.s32.totalorder %s75, 1
      %p428 = por %p426, %p427
      %p430 = scmp.ne.s32.totalorder %s415, %s429
      %p431 = scmp.eq.s32.totalorder %s75, 0
      %p432 = por %p430, %p431
      %s434 = sadd.s32 %s433, 1
      %p437 = scmp.eq.s32.totalorder %s69, 1
      %p438 = scmp.ne.s32.totalorder %s433, %s435
      %p439 = scmp.eq.s32.totalorder %s69, 0
      %p440 = por %p438, %p439
      %p441 = scmp.ne.s32.totalorder %s433, %s435
      %p442 = scmp.eq.s32.totalorder %s74, 1
      %p443 = por %p441, %p442
      %p444 = scmp.ne.s32.totalorder %s435, %s436
      %p445 = scmp.eq.s32.totalorder %s74, 0
      %p446 = por %p444, %p445
      %p447 = scmp.ne.s32.totalorder %s435, %s436
      %p448 = scmp.eq.s32.totalorder %s75, 1
      %p449 = por %p447, %p448
      %p451 = scmp.ne.s32.totalorder %s436, %s450
      %p452 = scmp.eq.s32.totalorder %s75, 0
      %p453 = por %p451, %p452
      %s455 = sadd.s32 %s454, 1
      %p458 = scmp.eq.s32.totalorder %s69, 1
      %p459 = scmp.ne.s32.totalorder %s454, %s456
      %p460 = scmp.eq.s32.totalorder %s69, 0
      %p461 = por %p459, %p460
      %p462 = scmp.ne.s32.totalorder %s454, %s456
      %p463 = scmp.eq.s32.totalorder %s74, 1
      %p464 = por %p462, %p463
      %p465 = scmp.ne.s32.totalorder %s456, %s457
      %p466 = scmp.eq.s32.totalorder %s74, 0
      %p467 = por %p465, %p466
      %p468 = scmp.ne.s32.totalorder %s456, %s457
      %p469 = scmp.eq.s32.totalorder %s75, 1
      %p470 = por %p468, %p469
      %p472 = scmp.ne.s32.totalorder %s457, %s471
      %p473 = scmp.eq.s32.totalorder %s75, 0
      %p474 = por %p472, %p473
      %s476 = sadd.s32 %s475, 1
      %p479 = scmp.eq.s32.totalorder %s69, 1
      %p480 = scmp.ne.s32.totalorder %s475, %s477
      %p481 = scmp.eq.s32.totalorder %s69, 0
      %p482 = por %p480, %p481
      %p483 = scmp.ne.s32.totalorder %s475, %s477
      %p484 = scmp.eq.s32.totalorder %s74, 1
      %p485 = por %p483, %p484
      %p486 = scmp.ne.s32.totalorder %s477, %s478
      %p487 = scmp.eq.s32.totalorder %s74, 0
      %p488 = por %p486, %p487
      %p489 = scmp.ne.s32.totalorder %s477, %s478
      %p490 = scmp.eq.s32.totalorder %s75, 1
      %p491 = por %p489, %p490
      %p493 = scmp.ne.s32.totalorder %s478, %s492
      %p494 = scmp.eq.s32.totalorder %s75, 0
      %p495 = por %p493, %p494
      %s497 = sadd.s32 %s496, 1
      %p500 = scmp.eq.s32.totalorder %s69, 1
      %p501 = scmp.ne.s32.totalorder %s496, %s498
      %p502 = scmp.eq.s32.totalorder %s69, 0
      %p503 = por %p501, %p502
      %p504 = scmp.ne.s32.totalorder %s496, %s498
      %p505 = scmp.eq.s32.totalorder %s74, 1
      %p506 = por %p504, %p505
      %p507 = scmp.ne.s32.totalorder %s498, %s499
      %p508 = scmp.eq.s32.totalorder %s74, 0
      %p509 = por %p507, %p508
      %p510 = scmp.ne.s32.totalorder %s498, %s499
      %p511 = scmp.eq.s32.totalorder %s75, 1
      %p512 = por %p510, %p511
      %p514 = scmp.ne.s32.totalorder %s499, %s513
      %p515 = scmp.eq.s32.totalorder %s75, 0
      %p516 = por %p514, %p515
      %s518 = sadd.s32 %s517, 1
      %p521 = scmp.eq.s32.totalorder %s69, 1
      %p522 = scmp.ne.s32.totalorder %s517, %s519
      %p523 = scmp.eq.s32.totalorder %s69, 0
      %p524 = por %p522, %p523
      %p525 = scmp.ne.s32.totalorder %s517, %s519
      %p526 = scmp.eq.s32.totalorder %s74, 1
      %p527 = por %p525, %p526
      %p528 = scmp.ne.s32.totalorder %s519, %s520
      %p529 = scmp.eq.s32.totalorder %s74, 0
      %p530 = por %p528, %p529
      %p531 = scmp.ne.s32.totalorder %s519, %s520
      %p532 = scmp.eq.s32.totalorder %s75, 1
      %p533 = por %p531, %p532
      %p535 = scmp.ne.s32.totalorder %s520, %s534
      %p536 = scmp.eq.s32.totalorder %s75, 0
      %p537 = por %p535, %p536
      %s539 = sadd.s32 %s538, 1
      %p542 = scmp.eq.s32.totalorder %s69, 1
      %p543 = scmp.ne.s32.totalorder %s538, %s540
      %p544 = scmp.eq.s32.totalorder %s69, 0
      %p545 = por %p543, %p544
      %p546 = scmp.ne.s32.totalorder %s538, %s540
      %p547 = scmp.eq.s32.totalorder %s74, 1
      %p548 = por %p546, %p547
      %p549 = scmp.ne.s32.totalorder %s540, %s541
      %p550 = scmp.eq.s32.totalorder %s74, 0
      %p551 = por %p549, %p550
      %p552 = scmp.ne.s32.totalorder %s540, %s541
      %p553 = scmp.eq.s32.totalorder %s75, 1
      %p554 = por %p552, %p553
      %p556 = scmp.ne.s32.totalorder %s541, %s555
      %p557 = scmp.eq.s32.totalorder %s75, 0
      %p558 = por %p556, %p557
      %s560 = sadd.s32 %s559, 1
      %p563 = scmp.eq.s32.totalorder %s69, 1
      %p564 = scmp.ne.s32.totalorder %s559, %s561
      %p565 = scmp.eq.s32.totalorder %s69, 0
      %p566 = por %p564, %p565
      %p567 = scmp.ne.s32.totalorder %s559, %s561
      %p568 = scmp.eq.s32.totalorder %s74, 1
      %p569 = por %p567, %p568
      %p570 = scmp.ne.s32.totalorder %s561, %s562
      %p571 = scmp.eq.s32.totalorder %s74, 0
      %p572 = por %p570, %p571
      %p573 = scmp.ne.s32.totalorder %s561, %s562
      %p574 = scmp.eq.s32.totalorder %s75, 1
      %p575 = por %p573, %p574
      %p577 = scmp.ne.s32.totalorder %s562, %s576
      %p578 = scmp.eq.s32.totalorder %s75, 0
      %p579 = por %p577, %p578
      %s581 = sadd.s32 %s580, 1
      %p584 = scmp.eq.s32.totalorder %s69, 1
      %p585 = scmp.ne.s32.totalorder %s580, %s582
      %p586 = scmp.eq.s32.totalorder %s69, 0
      %p587 = por %p585, %p586
      %p588 = scmp.ne.s32.totalorder %s580, %s582
      %p589 = scmp.eq.s32.totalorder %s74, 1
      %p590 = por %p588, %p589
      %p591 = scmp.ne.s32.totalorder %s582, %s583
      %p592 = scmp.eq.s32.totalorder %s74, 0
      %p593 = por %p591, %p592
      %p594 = scmp.ne.s32.totalorder %s582, %s583
      %p595 = scmp.eq.s32.totalorder %s75, 1
      %p596 = por %p594, %p595
      %p598 = scmp.ne.s32.totalorder %s583, %s597
      %p599 = scmp.eq.s32.totalorder %s75, 0
      %p600 = por %p598, %p599
      %s602 = sadd.s32 %s601, 1
      %p605 = scmp.eq.s32.totalorder %s69, 1
      %p606 = scmp.ne.s32.totalorder %s601, %s603
      %p607 = scmp.eq.s32.totalorder %s69, 0
      %p608 = por %p606, %p607
      %p609 = scmp.ne.s32.totalorder %s601, %s603
      %p610 = scmp.eq.s32.totalorder %s74, 1
      %p611 = por %p609, %p610
      %p612 = scmp.ne.s32.totalorder %s603, %s604
      %p613 = scmp.eq.s32.totalorder %s74, 0
      %p614 = por %p612, %p613
      %p615 = scmp.ne.s32.totalorder %s603, %s604
      %p616 = scmp.eq.s32.totalorder %s75, 1
      %p617 = por %p615, %p616
      %p619 = scmp.ne.s32.totalorder %s604, %s618
      %p620 = scmp.eq.s32.totalorder %s75, 0
      %p621 = por %p619, %p620
      %s623 = sadd.s32 %s622, 1
      %p626 = scmp.eq.s32.totalorder %s69, 1
      %p627 = scmp.ne.s32.totalorder %s622, %s624
      %p628 = scmp.eq.s32.totalorder %s69, 0
      %p629 = por %p627, %p628
      %p630 = scmp.ne.s32.totalorder %s622, %s624
      %p631 = scmp.eq.s32.totalorder %s74, 1
      %p632 = por %p630, %p631
      %p633 = scmp.ne.s32.totalorder %s624, %s625
      %p634 = scmp.eq.s32.totalorder %s74, 0
      %p635 = por %p633, %p634
      %p636 = scmp.ne.s32.totalorder %s624, %s625
      %p637 = scmp.eq.s32.totalorder %s75, 1
      %p638 = por %p636, %p637
      %p640 = scmp.ne.s32.totalorder %s625, %s639
      %p641 = scmp.eq.s32.totalorder %s75, 0
      %p642 = por %p640, %p641
      %s644 = sadd.s32 %s643, 1
      %p647 = scmp.eq.s32.totalorder %s69, 1
      %p648 = scmp.ne.s32.totalorder %s643, %s645
      %p649 = scmp.eq.s32.totalorder %s69, 0
      %p650 = por %p648, %p649
      %p651 = scmp.ne.s32.totalorder %s643, %s645
      %p652 = scmp.eq.s32.totalorder %s74, 1
      %p653 = por %p651, %p652
      %p654 = scmp.ne.s32.totalorder %s645, %s646
      %p655 = scmp.eq.s32.totalorder %s74, 0
      %p656 = por %p654, %p655
      %p657 = scmp.ne.s32.totalorder %s645, %s646
      %p658 = scmp.eq.s32.totalorder %s75, 1
      %p659 = por %p657, %p658
      %p661 = scmp.ne.s32.totalorder %s646, %s660
      %p662 = scmp.eq.s32.totalorder %s75, 0
      %p663 = por %p661, %p662
      %s665 = sadd.s32 %s664, 1
      %p668 = scmp.eq.s32.totalorder %s69, 1
      %p669 = scmp.ne.s32.totalorder %s664, %s666
      %p670 = scmp.eq.s32.totalorder %s69, 0
      %p671 = por %p669, %p670
      %p672 = scmp.ne.s32.totalorder %s664, %s666
      %p673 = scmp.eq.s32.totalorder %s74, 1
      %p674 = por %p672, %p673
      %p675 = scmp.ne.s32.totalorder %s666, %s667
      %p676 = scmp.eq.s32.totalorder %s74, 0
      %p677 = por %p675, %p676
      %p678 = scmp.ne.s32.totalorder %s666, %s667
      %p679 = scmp.eq.s32.totalorder %s75, 1
      %p680 = por %p678, %p679
      %p682 = scmp.ne.s32.totalorder %s667, %s681
      %p683 = scmp.eq.s32.totalorder %s75, 0
      %p684 = por %p682, %p683
      %s685 = ssub.s32 %s69, %s76
      %p686 = scmp.eq.s32.totalorder %s685, 0
      %s688 = sadd.s32 %s687, 1
      %s689 = scalar_select %p686, %s687, %s688
      %p692 = pneg %p686
      %p693 = scmp.eq.s32.totalorder %s69, 1
      %p694 = por %p692, %p693
      %p695 = scmp.ne.s32.totalorder %s687, %s690
      %p696 = scmp.eq.s32.totalorder %s69, 0
      %p697 = por %p695, %p696
      %p698 = scmp.ne.s32.totalorder %s687, %s690
      %p699 = scmp.eq.s32.totalorder %s74, 1
      %p700 = por %p698, %p699
      %p701 = scmp.ne.s32.totalorder %s690, %s691
      %p702 = scmp.eq.s32.totalorder %s74, 0
      %p703 = por %p701, %p702
      %p704 = scmp.ne.s32.totalorder %s690, %s691
      %p705 = scmp.eq.s32.totalorder %s75, 1
      %p706 = por %p704, %p705
      %p708 = scmp.ne.s32.totalorder %s691, %s707
      %p709 = scmp.eq.s32.totalorder %s75, 0
      %p710 = por %p708, %p709
      %s711 = ssub.s32 %s69, %s76
      %p712 = scmp.eq.s32.totalorder %s711, 0
      %s714 = sadd.s32 %s713, 1
      %s715 = scalar_select %p712, %s713, %s714
      %p718 = pneg %p712
      %p719 = scmp.eq.s32.totalorder %s69, 1
      %p720 = por %p718, %p719
      %p721 = scmp.ne.s32.totalorder %s713, %s716
      %p722 = scmp.eq.s32.totalorder %s69, 0
      %p723 = por %p721, %p722
      %p724 = scmp.ne.s32.totalorder %s713, %s716
      %p725 = scmp.eq.s32.totalorder %s74, 1
      %p726 = por %p724, %p725
      %p727 = scmp.ne.s32.totalorder %s716, %s717
      %p728 = scmp.eq.s32.totalorder %s74, 0
      %p729 = por %p727, %p728
      %p730 = scmp.ne.s32.totalorder %s716, %s717
      %p731 = scmp.eq.s32.totalorder %s75, 1
      %p732 = por %p730, %p731
      %p734 = scmp.ne.s32.totalorder %s717, %s733
      %p735 = scmp.eq.s32.totalorder %s75, 0
      %p736 = por %p734, %p735
      %p737 = scmp.le.s32.totalorder 1, %s69
      %p738 = scmp.lt.s32.totalorder %s69, 3
      %p739 = pnand %p737, %p738
      %p740 = pneg %p739
      // Predicated region
      $region9: #{tpu_custom_call.1} parent=5 // pred_check
        _
      $region10: #{tpu_custom_call.1} parent=5 // pred_check_branch
        %742 = sbr.rel (%p739) target = $region12
      $region11: #{tpu_custom_call.1} parent=5 // pred_region
        %s743 = ssub.s32 %s69, 1
        // Predicated region
        $region13: #{tpu_custom_call.1} parent=11 // pred_check
          %p744 = pneg %p194
        $region14: #{tpu_custom_call.1} parent=11 // pred_check_branch
          %746 = sbr.rel (%p744) target = $region16
        $region15: #{tpu_custom_call.1} parent=11 // pred_region
          _
        $region16: #{tpu_custom_call.1} parent=11 // pred_fallthru
          _
        // Predicated region
        $region17: #{tpu_custom_call.1} parent=11 // pred_check
          %p747 = pneg %p215
        $region18: #{tpu_custom_call.1} parent=11 // pred_check_branch
          %749 = sbr.rel (%p747) target = $region20
        $region19: #{tpu_custom_call.1} parent=11 // pred_region
          _
        $region20: #{tpu_custom_call.1} parent=11 // pred_fallthru
          _
        // Predicated region
        $region21: #{tpu_custom_call.1} parent=11 // pred_check
          %p750 = pneg %p236
        $region22: #{tpu_custom_call.1} parent=11 // pred_check_branch
          %752 = sbr.rel (%p750) target = $region24
        $region23: #{tpu_custom_call.1} parent=11 // pred_region
          _
        $region24: #{tpu_custom_call.1} parent=11 // pred_fallthru
          _
        // Predicated region
        $region25: #{tpu_custom_call.1} parent=11 // pred_check
          %p753 = pneg %p257
        $region26: #{tpu_custom_call.1} parent=11 // pred_check_branch
          %755 = sbr.rel (%p753) target = $region28
        $region27: #{tpu_custom_call.1} parent=11 // pred_region
          _
        $region28: #{tpu_custom_call.1} parent=11 // pred_fallthru
          _
        // Predicated region
        $region29: #{tpu_custom_call.1} parent=11 // pred_check
          %p756 = pneg %p278
        $region30: #{tpu_custom_call.1} parent=11 // pred_check_branch
          %758 = sbr.rel (%p756) target = $region32
        $region31: #{tpu_custom_call.1} parent=11 // pred_region
          _
        $region32: #{tpu_custom_call.1} parent=11 // pred_fallthru
          _
        // Predicated region
        $region33: #{tpu_custom_call.1} parent=11 // pred_check
          %p759 = pneg %p299
        $region34: #{tpu_custom_call.1} parent=11 // pred_check_branch
          %761 = sbr.rel (%p759) target = $region36
        $region35: #{tpu_custom_call.1} parent=11 // pred_region
          _
        $region36: #{tpu_custom_call.1} parent=11 // pred_fallthru
          _
        // Predicated region
        $region37: #{tpu_custom_call.1} parent=11 // pred_check
          %p762 = pneg %p320
        $region38: #{tpu_custom_call.1} parent=11 // pred_check_branch
          %764 = sbr.rel (%p762) target = $region40
        $region39: #{tpu_custom_call.1} parent=11 // pred_region
          _
        $region40: #{tpu_custom_call.1} parent=11 // pred_fallthru
          _
        // Predicated region
        $region41: #{tpu_custom_call.1} parent=11 // pred_check
          %p765 = pneg %p341
        $region42: #{tpu_custom_call.1} parent=11 // pred_check_branch
          %767 = sbr.rel (%p765) target = $region44
        $region43: #{tpu_custom_call.1} parent=11 // pred_region
          _
        $region44: #{tpu_custom_call.1} parent=11 // pred_fallthru
          _
        // Predicated region
        $region45: #{tpu_custom_call.1} parent=11 // pred_check
          %p768 = pneg %p362
        $region46: #{tpu_custom_call.1} parent=11 // pred_check_branch
          %770 = sbr.rel (%p768) target = $region48
        $region47: #{tpu_custom_call.1} parent=11 // pred_region
          _
        $region48: #{tpu_custom_call.1} parent=11 // pred_fallthru
          _
        // Predicated region
        $region49: #{tpu_custom_call.1} parent=11 // pred_check
          %p771 = pneg %p383
        $region50: #{tpu_custom_call.1} parent=11 // pred_check_branch
          %773 = sbr.rel (%p771) target = $region52
        $region51: #{tpu_custom_call.1} parent=11 // pred_region
          _
        $region52: #{tpu_custom_call.1} parent=11 // pred_fallthru
          _
        // Predicated region
        $region53: #{tpu_custom_call.1} parent=11 // pred_check
          %p774 = pneg %p404
        $region54: #{tpu_custom_call.1} parent=11 // pred_check_branch
          %776 = sbr.rel (%p774) target = $region56
        $region55: #{tpu_custom_call.1} parent=11 // pred_region
          _
        $region56: #{tpu_custom_call.1} parent=11 // pred_fallthru
          _
        // Predicated region
        $region57: #{tpu_custom_call.1} parent=11 // pred_check
          %p777 = pneg %p425
        $region58: #{tpu_custom_call.1} parent=11 // pred_check_branch
          %779 = sbr.rel (%p777) target = $region60
        $region59: #{tpu_custom_call.1} parent=11 // pred_region
          _
        $region60: #{tpu_custom_call.1} parent=11 // pred_fallthru
          _
        // Predicated region
        $region61: #{tpu_custom_call.1} parent=11 // pred_check
          %p780 = pneg %p446
        $region62: #{tpu_custom_call.1} parent=11 // pred_check_branch
          %782 = sbr.rel (%p780) target = $region64
        $region63: #{tpu_custom_call.1} parent=11 // pred_region
          _
        $region64: #{tpu_custom_call.1} parent=11 // pred_fallthru
          _
        // Predicated region
        $region65: #{tpu_custom_call.1} parent=11 // pred_check
          %p783 = pneg %p467
        $region66: #{tpu_custom_call.1} parent=11 // pred_check_branch
          %785 = sbr.rel (%p783) target = $region68
        $region67: #{tpu_custom_call.1} parent=11 // pred_region
          _
        $region68: #{tpu_custom_call.1} parent=11 // pred_fallthru
          _
        // Predicated region
        $region69: #{tpu_custom_call.1} parent=11 // pred_check
          %p786 = pneg %p488
        $region70: #{tpu_custom_call.1} parent=11 // pred_check_branch
          %788 = sbr.rel (%p786) target = $region72
        $region71: #{tpu_custom_call.1} parent=11 // pred_region
          _
        $region72: #{tpu_custom_call.1} parent=11 // pred_fallthru
          _
        // Predicated region
        $region73: #{tpu_custom_call.1} parent=11 // pred_check
          %p789 = pneg %p509
        $region74: #{tpu_custom_call.1} parent=11 // pred_check_branch
          %791 = sbr.rel (%p789) target = $region76
        $region75: #{tpu_custom_call.1} parent=11 // pred_region
          _
        $region76: #{tpu_custom_call.1} parent=11 // pred_fallthru
          _
        // Predicated region
        $region77: #{tpu_custom_call.1} parent=11 // pred_check
          %p792 = pneg %p530
        $region78: #{tpu_custom_call.1} parent=11 // pred_check_branch
          %794 = sbr.rel (%p792) target = $region80
        $region79: #{tpu_custom_call.1} parent=11 // pred_region
          _
        $region80: #{tpu_custom_call.1} parent=11 // pred_fallthru
          _
        // Predicated region
        $region81: #{tpu_custom_call.1} parent=11 // pred_check
          %p795 = pneg %p551
        $region82: #{tpu_custom_call.1} parent=11 // pred_check_branch
          %797 = sbr.rel (%p795) target = $region84
        $region83: #{tpu_custom_call.1} parent=11 // pred_region
          _
        $region84: #{tpu_custom_call.1} parent=11 // pred_fallthru
          _
        // Predicated region
        $region85: #{tpu_custom_call.1} parent=11 // pred_check
          %p798 = pneg %p572
        $region86: #{tpu_custom_call.1} parent=11 // pred_check_branch
          %800 = sbr.rel (%p798) target = $region88
        $region87: #{tpu_custom_call.1} parent=11 // pred_region
          _
        $region88: #{tpu_custom_call.1} parent=11 // pred_fallthru
          _
        // Predicated region
        $region89: #{tpu_custom_call.1} parent=11 // pred_check
          %p801 = pneg %p593
        $region90: #{tpu_custom_call.1} parent=11 // pred_check_branch
          %803 = sbr.rel (%p801) target = $region92
        $region91: #{tpu_custom_call.1} parent=11 // pred_region
          _
        $region92: #{tpu_custom_call.1} parent=11 // pred_fallthru
          _
        // Predicated region
        $region93: #{tpu_custom_call.1} parent=11 // pred_check
          %p804 = pneg %p614
        $region94: #{tpu_custom_call.1} parent=11 // pred_check_branch
          %806 = sbr.rel (%p804) target = $region96
        $region95: #{tpu_custom_call.1} parent=11 // pred_region
          _
        $region96: #{tpu_custom_call.1} parent=11 // pred_fallthru
          _
        // Predicated region
        $region97: #{tpu_custom_call.1} parent=11 // pred_check
          %p807 = pneg %p635
        $region98: #{tpu_custom_call.1} parent=11 // pred_check_branch
          %809 = sbr.rel (%p807) target = $region100
        $region99: #{tpu_custom_call.1} parent=11 // pred_region
          _
        $region100: #{tpu_custom_call.1} parent=11 // pred_fallthru
          _
        // Predicated region
        $region101: #{tpu_custom_call.1} parent=11 // pred_check
          %p810 = pneg %p656
        $region102: #{tpu_custom_call.1} parent=11 // pred_check_branch
          %812 = sbr.rel (%p810) target = $region104
        $region103: #{tpu_custom_call.1} parent=11 // pred_region
          _
        $region104: #{tpu_custom_call.1} parent=11 // pred_fallthru
          _
        // Predicated region
        $region105: #{tpu_custom_call.1} parent=11 // pred_check
          %p813 = pneg %p677
        $region106: #{tpu_custom_call.1} parent=11 // pred_check_branch
          %815 = sbr.rel (%p813) target = $region108
        $region107: #{tpu_custom_call.1} parent=11 // pred_region
          _
        $region108: #{tpu_custom_call.1} parent=11 // pred_fallthru
          _
      $region12: #{tpu_custom_call.1} parent=5 // pred_fallthru
        _
      %p816 = scmp.lt.s32.totalorder %s69, 2
      // Predicated region
      $region109: #{tpu_custom_call.1} parent=5 // pred_check
        %p817 = pneg %p816
      $region110: #{tpu_custom_call.1} parent=5 // pred_check_branch
        %819 = sbr.rel (%p817) target = $region112
      $region111: #{tpu_custom_call.1} parent=5 // pred_region
        // Predicated region
        $region113: #{tpu_custom_call.1} parent=111 // pred_check
          %p820 = pneg %p89
        $region114: #{tpu_custom_call.1} parent=111 // pred_check_branch
          %822 = sbr.rel (%p820) target = $region116
        $region115: #{tpu_custom_call.1} parent=111 // pred_region
          %p823 = scmp.lt.s32.totalorder %s69, 1
          %s824 = scalar_select %p823, %s69, 1
          %s825 = smul.addr %s824, 8
          %s826 = scalar_lea.vmem %s1, %s825
        $region116: #{tpu_custom_call.1} parent=111 // pred_fallthru
          _
        // Predicated region
        $region117: #{tpu_custom_call.1} parent=111 // pred_check
          %p827 = pneg %p115
        $region118: #{tpu_custom_call.1} parent=111 // pred_check_branch
          %829 = sbr.rel (%p827) target = $region120
        $region119: #{tpu_custom_call.1} parent=111 // pred_region
          %p830 = scmp.lt.s32.totalorder %s69, 1
          %s831 = scalar_select %p830, %s69, 1
          %s832 = smul.addr %s831, 8
          %s833 = smul.addr %s832, 8
          %s834 = scalar_lea.vmem %s3, %s833
        $region120: #{tpu_custom_call.1} parent=111 // pred_fallthru
          _
        // Predicated region
        $region121: #{tpu_custom_call.1} parent=111 // pred_check
          %p835 = pneg %p141
        $region122: #{tpu_custom_call.1} parent=111 // pred_check_branch
          %837 = sbr.rel (%p835) target = $region124
        $region123: #{tpu_custom_call.1} parent=111 // pred_region
          %p838 = scmp.lt.s32.totalorder %s69, 1
          %s839 = scalar_select %p838, %s69, 1
          %s840 = smul.addr %s839, 8
          %s841 = scalar_lea.vmem %s5, %s840
        $region124: #{tpu_custom_call.1} parent=111 // pred_fallthru
          _
        // Predicated region
        $region125: #{tpu_custom_call.1} parent=111 // pred_check
          %p842 = pneg %p167
        $region126: #{tpu_custom_call.1} parent=111 // pred_check_branch
          %844 = sbr.rel (%p842) target = $region128
        $region127: #{tpu_custom_call.1} parent=111 // pred_region
          %p845 = scmp.lt.s32.totalorder %s69, 1
          %s846 = scalar_select %p845, %s69, 1
          %s847 = smul.addr %s846, 8
          %s848 = smul.addr %s847, 8
          %s849 = scalar_lea.vmem %s7, %s848
        $region128: #{tpu_custom_call.1} parent=111 // pred_fallthru
          _
      $region112: #{tpu_custom_call.1} parent=5 // pred_fallthru
        _
      %p850 = scmp.le.s32.totalorder 1, %s69
      %p851 = scmp.lt.s32.totalorder %s69, 3
      %p852 = pnand %p850, %p851
      %p853 = pneg %p852
      // Predicated region
      $region129: #{tpu_custom_call.1} parent=5 // pred_check
        _
      $region130: #{tpu_custom_call.1} parent=5 // pred_check_branch
        %855 = sbr.rel (%p852) target = $region132
      $region131: #{tpu_custom_call.1} parent=5 // pred_region
        %s856 = ssub.s32 %s69, 1
        %p857 = scmp.lt.s32.totalorder %s74, 1
        %s858 = scalar_select %p857, %s74, 1
        %s859 = smul.addr %s858, 8
        %s860 = scalar_lea.vmem %s1, %s859
        %p861 = pneg %p95
        %p862 = pneg %p92
        %p863 = scmp.lt.s32.totalorder %s74, 1
        %s864 = scalar_select %p863, %s74, 1
        %s865 = smul.addr %s864, 8
        %s866 = smul.addr %s865, 8
        %s867 = scalar_lea.vmem %s3, %s866
        %p868 = pneg %p121
        %p869 = pneg %p118
        %p870 = scmp.lt.s32.totalorder %s74, 1
        %s871 = scalar_select %p870, %s74, 1
        %s872 = smul.addr %s871, 8
        %s873 = scalar_lea.vmem %s5, %s872
        %p874 = pneg %p147
        %p875 = pneg %p144
        %p876 = scmp.lt.s32.totalorder %s74, 1
        %s877 = scalar_select %p876, %s74, 1
        %s878 = smul.addr %s877, 8
        %s879 = smul.addr %s878, 8
        %s880 = scalar_lea.vmem %s7, %s879
        %p881 = pneg %p173
        %p882 = pneg %p170
        %p883 = pneg %p194
        %p884 = pneg %p191
        %p885 = pneg %p215
        %p886 = pneg %p212
        %p887 = pneg %p236
        %p888 = pneg %p233
        %p889 = pneg %p257
        %p890 = pneg %p254
        %p891 = pneg %p278
        %p892 = pneg %p275
        %p893 = pneg %p299
        %p894 = pneg %p296
        %p895 = pneg %p320
        %p896 = pneg %p317
        %p897 = pneg %p341
        %p898 = pneg %p338
        %p899 = pneg %p362
        %p900 = pneg %p359
        %p901 = pneg %p383
        %p902 = pneg %p380
        %p903 = pneg %p404
        %p904 = pneg %p401
        %p905 = pneg %p425
        %p906 = pneg %p422
        %p907 = pneg %p446
        %p908 = pneg %p443
        %p909 = pneg %p467
        %p910 = pneg %p464
        %p911 = pneg %p488
        %p912 = pneg %p485
        %p913 = pneg %p509
        %p914 = pneg %p506
        %p915 = pneg %p530
        %p916 = pneg %p527
        %p917 = pneg %p551
        %p918 = pneg %p548
        %p919 = pneg %p572
        %p920 = pneg %p569
        %p921 = pneg %p593
        %p922 = pneg %p590
        %p923 = pneg %p614
        %p924 = pneg %p611
        %p925 = pneg %p635
        %p926 = pneg %p632
        %p927 = pneg %p656
        %p928 = pneg %p653
        %p929 = pneg %p677
        %p930 = pneg %p674
        %p931 = pneg %p703
        %p932 = pneg %p700
        %s933 = sand.u32 %s690, 1
        %s934 = scalar_lea.sflag [#allocation3], %s933
        %s935 = sand.u32 %s690, 1
        %s936 = smul.addr %s935, 8
        %s937 = scalar_lea.vmem [#allocation2], %s936
        %p938 = pneg %p729
        %p939 = pneg %p726
        %p940 = scmp.lt.s32.totalorder %s74, 1
        %s941 = scalar_select %p940, %s74, 1
        %s942 = smul.addr %s941, 8
        %s943 = smul.addr %s942, 8
        %s944 = scalar_lea.vmem %s59, %s943
        %p945 = scmp.lt.s32.totalorder %s74, 1
        %s946 = scalar_select %p945, %s74, 1
        %s947 = smul.addr %s946, 8
        %s948 = scalar_lea.vmem %s1, %s947
        %p949 = scmp.lt.s32.totalorder %s74, 1
        %s950 = scalar_select %p949, %s74, 1
        %s951 = smul.addr %s950, 8
        %s952 = smul.addr %s951, 8
        %s953 = scalar_lea.vmem %s3, %s952
        %p954 = scmp.lt.s32.totalorder %s74, 1
        %s955 = scalar_select %p954, %s74, 1
        %s956 = smul.addr %s955, 8
        %s957 = scalar_lea.vmem %s5, %s956
        %p958 = scmp.lt.s32.totalorder %s74, 1
        %s959 = scalar_select %p958, %s74, 1
        %s960 = smul.addr %s959, 8
        %s961 = smul.addr %s960, 8
        %s962 = scalar_lea.vmem %s7, %s961
        %p963 = scmp.lt.s32.totalorder %s74, 1
        %s964 = scalar_select %p963, %s74, 1
        %s965 = smul.addr %s964, 8
        %s966 = smul.addr %s965, 8
        %s967 = scalar_lea.vmem %s59, %s966
        %v968 = vld [vmem:[%s948] sm:$0xff]
        %v969 = vld [vmem:[%s953] sm:$0xff]
        %v970 = vld [vmem:[%s953 + $0x8] sm:$0xff]
        %v971 = vld [vmem:[%s953 + $0x10] sm:$0xff]
        %v972 = vld [vmem:[%s953 + $0x18] sm:$0xff]
        %v973 = vld [vmem:[%s953 + $0x20] sm:$0xff]
        %v974 = vld [vmem:[%s953 + $0x28] sm:$0xff]
        %v975 = vld [vmem:[%s953 + $0x30] sm:$0xff]
        %v976 = vld [vmem:[%s953 + $0x38] sm:$0xff]
        %v977 = vld [vmem:[%s957] sm:$0xff]
        %v978 = vld [vmem:[%s962] sm:$0xff]
        %v979 = vld [vmem:[%s962 + $0x8] sm:$0xff]
        %v980 = vld [vmem:[%s962 + $0x10] sm:$0xff]
        %v981 = vld [vmem:[%s962 + $0x18] sm:$0xff]
        %v982 = vld [vmem:[%s962 + $0x20] sm:$0xff]
        %v983 = vld [vmem:[%s962 + $0x28] sm:$0xff]
        %v984 = vld [vmem:[%s962 + $0x30] sm:$0xff]
        %v985 = vld [vmem:[%s962 + $0x38] sm:$0xff]
        %v986 = vadd.f32 %v968, %v977
        %v987 = vld [vmem:[%s9] sm:$0xff]
        %v988 = vld [vmem:[%s9 + $0x8] sm:$0xff]
        %v989 = vld [vmem:[%s9 + $0x10] sm:$0xff]
        %v990 = vld [vmem:[%s9 + $0x18] sm:$0xff]
        %v991 = vld [vmem:[%s11] sm:$0x1]
        %v993 = vlaneseq
        %v994 = vshrl.u32 %v993, 7
        %v995 = vsub.s32 0, %v994
        %v996 = vrot.slane %v991, %v995
        %vm998 = vcmask 261120
        %v1000 = vsel %vm998, %v986, 0
        %1002 = vmatprep.subr.mxu0 0.0
        %1003 = vmatpush1.msra.mxu0 %v987
        %1004 = vmatprep.subr.mxu0 0.0
        %1005 = vmatpush1.msra.mxu0 %v988
        %1006 = vmatprep.subr.mxu0 0.0
        %1007 = vmatpush1.msra.mxu0 %v989
        %1008 = vmatprep.subr.mxu0 0.0
        %1009 = vmatpush1.msra.mxu0 %v990
        %1010 = vmatprep.subr.mxu0 0.0
        %1011 = vmatpush1.msra.mxu0 0.0
        %1012 = vmatprep.subr.mxu0 0.0
        %1013 = vmatpush1.msra.mxu0 0.0
        %1014 = vmatprep.subr.mxu0 0.0
        %1015 = vmatpush1.msra.mxu0 0.0
        %1016 = vmatprep.subr.mxu0 0.0
        %1017 = vmatpush1.msra.mxu0 0.0
        %1018 = vmatprep.subr.mxu0 0.0
        %1019 = vmatpush1.msra.mxu0 0.0
        %1020 = vmatprep.subr.mxu0 0.0
        %1021 = vmatpush1.msra.mxu0 0.0
        %1022 = vmatprep.subr.mxu0 0.0
        %1023 = vmatpush1.msra.mxu0 0.0
        %1024 = vmatprep.subr.mxu0 0.0
        %1025 = vmatpush1.msra.mxu0 0.0
        %1026 = vmatprep.subr.mxu0 0.0
        %1027 = vmatpush1.msra.mxu0 0.0
        %1028 = vmatprep.subr.mxu0 0.0
        %1029 = vmatpush1.msra.mxu0 0.0
        %1030 = vmatprep.subr.mxu0 0.0
        %1031 = vmatpush1.msra.mxu0 0.0
        %1032 = vmatprep.subr.mxu0 0.0
        %1033 = vmatpush1.msra.mxu0 0.0
        %1034 = vmatprep.subr.mxu0 0.0
        %1035 = vmatpush1.msra.mxu0 0.0
        %1036 = vmatprep.subr.mxu0 0.0
        %1037 = vmatpush1.msra.mxu0 0.0
        %1038 = vmatprep.subr.mxu0 0.0
        %1039 = vmatpush1.msra.mxu0 0.0
        %1040 = vmatprep.subr.mxu0 0.0
        %1041 = vmatpush1.msra.mxu0 0.0
        %1042 = vmatprep.subr.mxu0 0.0
        %1043 = vmatpush1.msra.mxu0 0.0
        %1044 = vmatprep.subr.mxu0 0.0
        %1045 = vmatpush1.msra.mxu0 0.0
        %1046 = vmatprep.subr.mxu0 0.0
        %1047 = vmatpush1.msra.mxu0 0.0
        %1048 = vmatprep.subr.mxu0 0.0
        %1049 = vmatpush1.msra.mxu0 0.0
        %1050 = vmatprep.subr.mxu0 0.0
        %1051 = vmatpush1.msra.mxu0 0.0
        %1052 = vmatprep.subr.mxu0 0.0
        %1053 = vmatpush1.msra.mxu0 0.0
        %1054 = vmatprep.subr.mxu0 0.0
        %1055 = vmatpush1.msra.mxu0 0.0
        %1056 = vmatprep.subr.mxu0 0.0
        %1057 = vmatpush1.msra.mxu0 0.0
        %1058 = vmatprep.subr.mxu0 0.0
        %1059 = vmatpush1.msra.mxu0 0.0
        %1060 = vmatprep.subr.mxu0 0.0
        %1061 = vmatpush1.msra.mxu0 0.0
        %1062 = vmatprep.subr.mxu0 0.0
        %1063 = vmatpush1.msra.mxu0 0.0
        %1064 = vmatprep.subr.mxu0 0.0
        %1065 = vmatpush1.msra.mxu0 0.0
        %1066 = vmatprep.mubr.f32.mxu0 0.0
        %1067 = vmatmul.mubr.f32.gmra.mrb[0].mxu0 %v1000
        %v1068 = vpop.f32.mrb[0].mxu0
        %v1069 = vadd.f32 %v996, %v1068
        %v1070 = vpop.f32.mrb[0].mxu0
        %1071 = vdwg.mxu0
        %s1072 = scalar_lea.vmem %s9, 32
        %v1073 = vld [vmem:[%s1072] sm:$0xff]
        %v1074 = vld [vmem:[%s1072 + $0x8] sm:$0xff]
        %v1075 = vld [vmem:[%s1072 + $0x10] sm:$0xff]
        %v1076 = vld [vmem:[%s1072 + $0x18] sm:$0xff]
        %s1077 = scalar_lea.vmem %s11, 1
        %v1078 = vld [vmem:[%s1077] sm:$0x1]
        %v1080 = vlaneseq
        %v1081 = vshrl.u32 %v1080, 7
        %v1082 = vsub.s32 0, %v1081
        %v1083 = vrot.slane %v1078, %v1082
        %1085 = vmatprep.subr.mxu0 0.0
        %1086 = vmatpush1.msra.mxu0 %v1073
        %1087 = vmatprep.subr.mxu0 0.0
        %1088 = vmatpush1.msra.mxu0 %v1074
        %1089 = vmatprep.subr.mxu0 0.0
        %1090 = vmatpush1.msra.mxu0 %v1075
        %1091 = vmatprep.subr.mxu0 0.0
        %1092 = vmatpush1.msra.mxu0 %v1076
        %1093 = vmatprep.subr.mxu0 0.0
        %1094 = vmatpush1.msra.mxu0 0.0
        %1095 = vmatprep.subr.mxu0 0.0
        %1096 = vmatpush1.msra.mxu0 0.0
        %1097 = vmatprep.subr.mxu0 0.0
        %1098 = vmatpush1.msra.mxu0 0.0
        %1099 = vmatprep.subr.mxu0 0.0
        %1100 = vmatpush1.msra.mxu0 0.0
        %1101 = vmatprep.subr.mxu0 0.0
        %1102 = vmatpush1.msra.mxu0 0.0
        %1103 = vmatprep.subr.mxu0 0.0
        %1104 = vmatpush1.msra.mxu0 0.0
        %1105 = vmatprep.subr.mxu0 0.0
        %1106 = vmatpush1.msra.mxu0 0.0
        %1107 = vmatprep.subr.mxu0 0.0
        %1108 = vmatpush1.msra.mxu0 0.0
        %1109 = vmatprep.subr.mxu0 0.0
        %1110 = vmatpush1.msra.mxu0 0.0
        %1111 = vmatprep.subr.mxu0 0.0
        %1112 = vmatpush1.msra.mxu0 0.0
        %1113 = vmatprep.subr.mxu0 0.0
        %1114 = vmatpush1.msra.mxu0 0.0
        %1115 = vmatprep.subr.mxu0 0.0
        %1116 = vmatpush1.msra.mxu0 0.0
        %1117 = vmatprep.subr.mxu0 0.0
        %1118 = vmatpush1.msra.mxu0 0.0
        %1119 = vmatprep.subr.mxu0 0.0
        %1120 = vmatpush1.msra.mxu0 0.0
        %1121 = vmatprep.subr.mxu0 0.0
        %1122 = vmatpush1.msra.mxu0 0.0
        %1123 = vmatprep.subr.mxu0 0.0
        %1124 = vmatpush1.msra.mxu0 0.0
        %1125 = vmatprep.subr.mxu0 0.0
        %1126 = vmatpush1.msra.mxu0 0.0
        %1127 = vmatprep.subr.mxu0 0.0
        %1128 = vmatpush1.msra.mxu0 0.0
        %1129 = vmatprep.subr.mxu0 0.0
        %1130 = vmatpush1.msra.mxu0 0.0
        %1131 = vmatprep.subr.mxu0 0.0
        %1132 = vmatpush1.msra.mxu0 0.0
        %1133 = vmatprep.subr.mxu0 0.0
        %1134 = vmatpush1.msra.mxu0 0.0
        %1135 = vmatprep.subr.mxu0 0.0
        %1136 = vmatpush1.msra.mxu0 0.0
        %1137 = vmatprep.subr.mxu0 0.0
        %1138 = vmatpush1.msra.mxu0 0.0
        %1139 = vmatprep.subr.mxu0 0.0
        %1140 = vmatpush1.msra.mxu0 0.0
        %1141 = vmatprep.subr.mxu0 0.0
        %1142 = vmatpush1.msra.mxu0 0.0
        %1143 = vmatprep.subr.mxu0 0.0
        %1144 = vmatpush1.msra.mxu0 0.0
        %1145 = vmatprep.subr.mxu0 0.0
        %1146 = vmatpush1.msra.mxu0 0.0
        %1147 = vmatprep.subr.mxu0 0.0
        %1148 = vmatpush1.msra.mxu0 0.0
        %1149 = vmatprep.mubr.f32.mxu0 0.0
        %1150 = vmatmul.mubr.f32.gmra.mrb[0].mxu0 %v1000
        %v1151 = vpop.f32.mrb[0].mxu0
        %v1152 = vadd.f32 %v1083, %v1151
        %v1153 = vpop.f32.mrb[0].mxu0
        %1154 = vdwg.mxu0
        %s1155 = scalar_lea.vmem %s9, 64
        %v1156 = vld [vmem:[%s1155] sm:$0xff]
        %v1157 = vld [vmem:[%s1155 + $0x8] sm:$0xff]
        %v1158 = vld [vmem:[%s1155 + $0x10] sm:$0xff]
        %v1159 = vld [vmem:[%s1155 + $0x18] sm:$0xff]
        %s1160 = scalar_lea.vmem %s11, 2
        %v1161 = vld [vmem:[%s1160] sm:$0x1]
        %v1163 = vlaneseq
        %v1164 = vshrl.u32 %v1163, 7
        %v1165 = vsub.s32 0, %v1164
        %v1166 = vrot.slane %v1161, %v1165
        %v1169 = vsel %vm998, %v968, 0
        %1171 = vmatprep.subr.mxu0 0.0
        %1172 = vmatpush1.msra.mxu0 %v1156
        %1173 = vmatprep.subr.mxu0 0.0
        %1174 = vmatpush1.msra.mxu0 %v1157
        %1175 = vmatprep.subr.mxu0 0.0
        %1176 = vmatpush1.msra.mxu0 %v1158
        %1177 = vmatprep.subr.mxu0 0.0
        %1178 = vmatpush1.msra.mxu0 %v1159
        %1179 = vmatprep.subr.mxu0 0.0
        %1180 = vmatpush1.msra.mxu0 0.0
        %1181 = vmatprep.subr.mxu0 0.0
        %1182 = vmatpush1.msra.mxu0 0.0
        %1183 = vmatprep.subr.mxu0 0.0
        %1184 = vmatpush1.msra.mxu0 0.0
        %1185 = vmatprep.subr.mxu0 0.0
        %1186 = vmatpush1.msra.mxu0 0.0
        %1187 = vmatprep.subr.mxu0 0.0
        %1188 = vmatpush1.msra.mxu0 0.0
        %1189 = vmatprep.subr.mxu0 0.0
        %1190 = vmatpush1.msra.mxu0 0.0
        %1191 = vmatprep.subr.mxu0 0.0
        %1192 = vmatpush1.msra.mxu0 0.0
        %1193 = vmatprep.subr.mxu0 0.0
        %1194 = vmatpush1.msra.mxu0 0.0
        %1195 = vmatprep.subr.mxu0 0.0
        %1196 = vmatpush1.msra.mxu0 0.0
        %1197 = vmatprep.subr.mxu0 0.0
        %1198 = vmatpush1.msra.mxu0 0.0
        %1199 = vmatprep.subr.mxu0 0.0
        %1200 = vmatpush1.msra.mxu0 0.0
        %1201 = vmatprep.subr.mxu0 0.0
        %1202 = vmatpush1.msra.mxu0 0.0
        %1203 = vmatprep.subr.mxu0 0.0
        %1204 = vmatpush1.msra.mxu0 0.0
        %1205 = vmatprep.subr.mxu0 0.0
        %1206 = vmatpush1.msra.mxu0 0.0
        %1207 = vmatprep.subr.mxu0 0.0
        %1208 = vmatpush1.msra.mxu0 0.0
        %1209 = vmatprep.subr.mxu0 0.0
        %1210 = vmatpush1.msra.mxu0 0.0
        %1211 = vmatprep.subr.mxu0 0.0
        %1212 = vmatpush1.msra.mxu0 0.0
        %1213 = vmatprep.subr.mxu0 0.0
        %1214 = vmatpush1.msra.mxu0 0.0
        %1215 = vmatprep.subr.mxu0 0.0
        %1216 = vmatpush1.msra.mxu0 0.0
        %1217 = vmatprep.subr.mxu0 0.0
        %1218 = vmatpush1.msra.mxu0 0.0
        %1219 = vmatprep.subr.mxu0 0.0
        %1220 = vmatpush1.msra.mxu0 0.0
        %1221 = vmatprep.subr.mxu0 0.0
        %1222 = vmatpush1.msra.mxu0 0.0
        %1223 = vmatprep.subr.mxu0 0.0
        %1224 = vmatpush1.msra.mxu0 0.0
        %1225 = vmatprep.subr.mxu0 0.0
        %1226 = vmatpush1.msra.mxu0 0.0
        %1227 = vmatprep.subr.mxu0 0.0
        %1228 = vmatpush1.msra.mxu0 0.0
        %1229 = vmatprep.subr.mxu0 0.0
        %1230 = vmatpush1.msra.mxu0 0.0
        %1231 = vmatprep.subr.mxu0 0.0
        %1232 = vmatpush1.msra.mxu0 0.0
        %1233 = vmatprep.subr.mxu0 0.0
        %1234 = vmatpush1.msra.mxu0 0.0
        %1235 = vmatprep.mubr.f32.mxu0 0.0
        %1236 = vmatmul.mubr.f32.gmra.mrb[0].mxu0 %v1169
        %v1237 = vpop.f32.mrb[0].mxu0
        %v1238 = vadd.f32 %v1166, %v1237
        %v1239 = vpop.f32.mrb[0].mxu0
        %1240 = vdwg.mxu0
        %vm1241 = vcmask 130048
        %v1243 = vsel %vm1241, %v1069, 0
        %v1246 = vsel %vm1241, %v1152, 0
        %1248 = vmatprep.subr.mxu0 0.0
        %1249 = vmatpush1.xpose.msra.mxu0 %v1246
        %1250 = vmatprep.subr.mxu0 0.0
        %1251 = vmatpush1.xpose.msra.mxu0 0.0
        %1252 = vmatprep.subr.mxu0 0.0
        %1253 = vmatpush1.xpose.msra.mxu0 0.0
        %1254 = vmatprep.subr.mxu0 0.0
        %1255 = vmatpush1.xpose.msra.mxu0 0.0
        %1256 = vmatprep.subr.mxu0 0.0
        %1257 = vmatpush1.xpose.msra.mxu0 0.0
        %1258 = vmatprep.subr.mxu0 0.0
        %1259 = vmatpush1.xpose.msra.mxu0 0.0
        %1260 = vmatprep.subr.mxu0 0.0
        %1261 = vmatpush1.xpose.msra.mxu0 0.0
        %1262 = vmatprep.subr.mxu0 0.0
        %1263 = vmatpush1.xpose.msra.mxu0 0.0
        %1264 = vmatprep.subr.mxu0 0.0
        %1265 = vmatpush1.xpose.msra.mxu0 0.0
        %1266 = vmatprep.subr.mxu0 0.0
        %1267 = vmatpush1.xpose.msra.mxu0 0.0
        %1268 = vmatprep.subr.mxu0 0.0
        %1269 = vmatpush1.xpose.msra.mxu0 0.0
        %1270 = vmatprep.subr.mxu0 0.0
        %1271 = vmatpush1.xpose.msra.mxu0 0.0
        %1272 = vmatprep.subr.mxu0 0.0
        %1273 = vmatpush1.xpose.msra.mxu0 0.0
        %1274 = vmatprep.subr.mxu0 0.0
        %1275 = vmatpush1.xpose.msra.mxu0 0.0
        %1276 = vmatprep.subr.mxu0 0.0
        %1277 = vmatpush1.xpose.msra.mxu0 0.0
        %1278 = vmatprep.subr.mxu0 0.0
        %1279 = vmatpush1.xpose.msra.mxu0 0.0
        %1280 = vmatprep.subr.mxu0 0.0
        %1281 = vmatpush1.xpose.msra.mxu0 0.0
        %1282 = vmatprep.subr.mxu0 0.0
        %1283 = vmatpush1.xpose.msra.mxu0 0.0
        %1284 = vmatprep.subr.mxu0 0.0
        %1285 = vmatpush1.xpose.msra.mxu0 0.0
        %1286 = vmatprep.subr.mxu0 0.0
        %1287 = vmatpush1.xpose.msra.mxu0 0.0
        %1288 = vmatprep.subr.mxu0 0.0
        %1289 = vmatpush1.xpose.msra.mxu0 0.0
        %1290 = vmatprep.subr.mxu0 0.0
        %1291 = vmatpush1.xpose.msra.mxu0 0.0
        %1292 = vmatprep.subr.mxu0 0.0
        %1293 = vmatpush1.xpose.msra.mxu0 0.0
        %1294 = vmatprep.subr.mxu0 0.0
        %1295 = vmatpush1.xpose.msra.mxu0 0.0
        %1296 = vmatprep.subr.mxu0 0.0
        %1297 = vmatpush1.xpose.msra.mxu0 0.0
        %1298 = vmatprep.subr.mxu0 0.0
        %1299 = vmatpush1.xpose.msra.mxu0 0.0
        %1300 = vmatprep.subr.mxu0 0.0
        %1301 = vmatpush1.xpose.msra.mxu0 0.0
        %1302 = vmatprep.subr.mxu0 0.0
        %1303 = vmatpush1.xpose.msra.mxu0 0.0
        %1304 = vmatprep.subr.mxu0 0.0
        %1305 = vmatpush1.xpose.msra.mxu0 0.0
        %1306 = vmatprep.subr.mxu0 0.0
        %1307 = vmatpush1.xpose.msra.mxu0 0.0
        %1308 = vmatprep.subr.mxu0 0.0
        %1309 = vmatpush1.xpose.msra.mxu0 0.0
        %1310 = vmatprep.subr.mxu0 0.0
        %1311 = vmatpush1.xpose.msra.mxu0 0.0
        %1312 = vmatprep.mubr.f32.mxu0 0.0
        %1313 = vmatmul.mubr.f32.gmra.mrb[0].mxu0 %v1243
        %v1314 = vpop.f32.mrb[0].mxu0
        %v1315 = vadd.f32 0.0, %v1314
        %v1316 = vpop.f32.mrb[0].mxu0
        %1317 = vdwg.mxu0
        %v1318 = vmul.f32 %v1315, 0.25
        %vm1319 = vcmask 64512
        %v1320 = vsel %vm1319, %v1318, -inf
        %1321 = vmax.xlane.f32.xlu0 %v1320
        %v1322 = vpop.xlane.xlu0 %1321
        %v1323 = vsub.f32 %v1318, %v1322
        %v1324 = vmul.f32 %v1323, 1.442695
        %v1325 = vpow.pop %v1324
        %v1326 = vsel %vm1319, %v1325, 0.0
        %1327 = vadd.xlane.f32.xlu0 %v1326
        %v1328 = vpop.xlane.xlu0 %1327
        %v1329 = vrcp.pop %v1328
        %v1330 = vmul.f32 %v1325, %v1329
        %v1332 = vsel %vm1319, %v1330, 0
        %1334 = vmatprep.subr.mxu0 0.0
        %1335 = vmatpush1.msra.mxu0 %v1238
        %1336 = vmatprep.subr.mxu0 0.0
        %1337 = vmatpush1.msra.mxu0 0.0
        %1338 = vmatprep.subr.mxu0 0.0
        %1339 = vmatpush1.msra.mxu0 0.0
        %1340 = vmatprep.subr.mxu0 0.0
        %1341 = vmatpush1.msra.mxu0 0.0
        %1342 = vmatprep.subr.mxu0 0.0
        %1343 = vmatpush1.msra.mxu0 0.0
        %1344 = vmatprep.subr.mxu0 0.0
        %1345 = vmatpush1.msra.mxu0 0.0
        %1346 = vmatprep.subr.mxu0 0.0
        %1347 = vmatpush1.msra.mxu0 0.0
        %1348 = vmatprep.subr.mxu0 0.0
        %1349 = vmatpush1.msra.mxu0 0.0
        %1350 = vmatprep.subr.mxu0 0.0
        %1351 = vmatpush1.msra.mxu0 0.0
        %1352 = vmatprep.subr.mxu0 0.0
        %1353 = vmatpush1.msra.mxu0 0.0
        %1354 = vmatprep.subr.mxu0 0.0
        %1355 = vmatpush1.msra.mxu0 0.0
        %1356 = vmatprep.subr.mxu0 0.0
        %1357 = vmatpush1.msra.mxu0 0.0
        %1358 = vmatprep.subr.mxu0 0.0
        %1359 = vmatpush1.msra.mxu0 0.0
        %1360 = vmatprep.subr.mxu0 0.0
        %1361 = vmatpush1.msra.mxu0 0.0
        %1362 = vmatprep.subr.mxu0 0.0
        %1363 = vmatpush1.msra.mxu0 0.0
        %1364 = vmatprep.subr.mxu0 0.0
        %1365 = vmatpush1.msra.mxu0 0.0
        %1366 = vmatprep.subr.mxu0 0.0
        %1367 = vmatpush1.msra.mxu0 0.0
        %1368 = vmatprep.subr.mxu0 0.0
        %1369 = vmatpush1.msra.mxu0 0.0
        %1370 = vmatprep.subr.mxu0 0.0
        %1371 = vmatpush1.msra.mxu0 0.0
        %1372 = vmatprep.subr.mxu0 0.0
        %1373 = vmatpush1.msra.mxu0 0.0
        %1374 = vmatprep.subr.mxu0 0.0
        %1375 = vmatpush1.msra.mxu0 0.0
        %1376 = vmatprep.subr.mxu0 0.0
        %1377 = vmatpush1.msra.mxu0 0.0
        %1378 = vmatprep.subr.mxu0 0.0
        %1379 = vmatpush1.msra.mxu0 0.0
        %1380 = vmatprep.subr.mxu0 0.0
        %1381 = vmatpush1.msra.mxu0 0.0
        %1382 = vmatprep.subr.mxu0 0.0
        %1383 = vmatpush1.msra.mxu0 0.0
        %1384 = vmatprep.subr.mxu0 0.0
        %1385 = vmatpush1.msra.mxu0 0.0
        %1386 = vmatprep.subr.mxu0 0.0
        %1387 = vmatpush1.msra.mxu0 0.0
        %1388 = vmatprep.subr.mxu0 0.0
        %1389 = vmatpush1.msra.mxu0 0.0
        %1390 = vmatprep.subr.mxu0 0.0
        %1391 = vmatpush1.msra.mxu0 0.0
        %1392 = vmatprep.subr.mxu0 0.0
        %1393 = vmatpush1.msra.mxu0 0.0
        %1394 = vmatprep.subr.mxu0 0.0
        %1395 = vmatpush1.msra.mxu0 0.0
        %1396 = vmatprep.subr.mxu0 0.0
        %1397 = vmatpush1.msra.mxu0 0.0
        %1398 = vmatprep.mubr.f32.mxu0 0.0
        %1399 = vmatmul.mubr.f32.gmra.mrb[0].mxu0 %v1332
        %v1400 = vpop.f32.mrb[0].mxu0
        %v1401 = vadd.f32 0.0, %v1400
        %v1402 = vpop.f32.mrb[0].mxu0
        %1403 = vdwg.mxu0
        %1404 = vrot.lane.b32.xlu0 %v1069, 112
        %v1405 = vpop.permute.xlu0 %1404
        %1406 = vrot.lane.b32.xlu0 %v1152, 112
        %v1407 = vpop.permute.xlu0 %1406
        %v1408 = vsel %vm1241, %v1405, 0
        %v1410 = vsel %vm1241, %v1407, 0
        %1412 = vmatprep.subr.mxu0 0.0
        %1413 = vmatpush1.xpose.msra.mxu0 %v1410
        %1414 = vmatprep.subr.mxu0 0.0
        %1415 = vmatpush1.xpose.msra.mxu0 0.0
        %1416 = vmatprep.subr.mxu0 0.0
        %1417 = vmatpush1.xpose.msra.mxu0 0.0
        %1418 = vmatprep.subr.mxu0 0.0
        %1419 = vmatpush1.xpose.msra.mxu0 0.0
        %1420 = vmatprep.subr.mxu0 0.0
        %1421 = vmatpush1.xpose.msra.mxu0 0.0
        %1422 = vmatprep.subr.mxu0 0.0
        %1423 = vmatpush1.xpose.msra.mxu0 0.0
        %1424 = vmatprep.subr.mxu0 0.0
        %1425 = vmatpush1.xpose.msra.mxu0 0.0
        %1426 = vmatprep.subr.mxu0 0.0
        %1427 = vmatpush1.xpose.msra.mxu0 0.0
        %1428 = vmatprep.subr.mxu0 0.0
        %1429 = vmatpush1.xpose.msra.mxu0 0.0
        %1430 = vmatprep.subr.mxu0 0.0
        %1431 = vmatpush1.xpose.msra.mxu0 0.0
        %1432 = vmatprep.subr.mxu0 0.0
        %1433 = vmatpush1.xpose.msra.mxu0 0.0
        %1434 = vmatprep.subr.mxu0 0.0
        %1435 = vmatpush1.xpose.msra.mxu0 0.0
        %1436 = vmatprep.subr.mxu0 0.0
        %1437 = vmatpush1.xpose.msra.mxu0 0.0
        %1438 = vmatprep.subr.mxu0 0.0
        %1439 = vmatpush1.xpose.msra.mxu0 0.0
        %1440 = vmatprep.subr.mxu0 0.0
        %1441 = vmatpush1.xpose.msra.mxu0 0.0
        %1442 = vmatprep.subr.mxu0 0.0
        %1443 = vmatpush1.xpose.msra.mxu0 0.0
        %1444 = vmatprep.subr.mxu0 0.0
        %1445 = vmatpush1.xpose.msra.mxu0 0.0
        %1446 = vmatprep.subr.mxu0 0.0
        %1447 = vmatpush1.xpose.msra.mxu0 0.0
        %1448 = vmatprep.subr.mxu0 0.0
        %1449 = vmatpush1.xpose.msra.mxu0 0.0
        %1450 = vmatprep.subr.mxu0 0.0
        %1451 = vmatpush1.xpose.msra.mxu0 0.0
        %1452 = vmatprep.subr.mxu0 0.0
        %1453 = vmatpush1.xpose.msra.mxu0 0.0
        %1454 = vmatprep.subr.mxu0 0.0
        %1455 = vmatpush1.xpose.msra.mxu0 0.0
        %1456 = vmatprep.subr.mxu0 0.0
        %1457 = vmatpush1.xpose.msra.mxu0 0.0
        %1458 = vmatprep.subr.mxu0 0.0
        %1459 = vmatpush1.xpose.msra.mxu0 0.0
        %1460 = vmatprep.subr.mxu0 0.0
        %1461 = vmatpush1.xpose.msra.mxu0 0.0
        %1462 = vmatprep.subr.mxu0 0.0
        %1463 = vmatpush1.xpose.msra.mxu0 0.0
        %1464 = vmatprep.subr.mxu0 0.0
        %1465 = vmatpush1.xpose.msra.mxu0 0.0
        %1466 = vmatprep.subr.mxu0 0.0
        %1467 = vmatpush1.xpose.msra.mxu0 0.0
        %1468 = vmatprep.subr.mxu0 0.0
        %1469 = vmatpush1.xpose.msra.mxu0 0.0
        %1470 = vmatprep.subr.mxu0 0.0
        %1471 = vmatpush1.xpose.msra.mxu0 0.0
        %1472 = vmatprep.subr.mxu0 0.0
        %1473 = vmatpush1.xpose.msra.mxu0 0.0
        %1474 = vmatprep.subr.mxu0 0.0
        %1475 = vmatpush1.xpose.msra.mxu0 0.0
        %1476 = vmatprep.mubr.f32.mxu0 0.0
        %1477 = vmatmul.mubr.f32.gmra.mrb[0].mxu0 %v1408
        %v1478 = vpop.f32.mrb[0].mxu0
        %v1479 = vadd.f32 0.0, %v1478
        %v1480 = vpop.f32.mrb[0].mxu0
        %1481 = vdwg.mxu0
        %v1482 = vmul.f32 %v1479, 0.25
        %v1483 = vsel %vm1319, %v1482, -inf
        %1484 = vmax.xlane.f32.xlu0 %v1483
        %v1485 = vpop.xlane.xlu0 %1484
        %v1486 = vsub.f32 %v1482, %v1485
        %v1487 = vmul.f32 %v1486, 1.442695
        %v1488 = vpow.pop %v1487
        %v1489 = vsel %vm1319, %v1488, 0.0
        %1490 = vadd.xlane.f32.xlu0 %v1489
        %v1491 = vpop.xlane.xlu0 %1490
        %v1492 = vrcp.pop %v1491
        %v1493 = vmul.f32 %v1488, %v1492
        %1495 = vrot.lane.b32.xlu0 %v1238, 112
        %v1496 = vpop.permute.xlu0 %1495
        %v1499 = vsel %vm1319, %v1493, 0
        %1501 = vmatprep.subr.mxu0 0.0
        %1502 = vmatpush1.msra.mxu0 %v1496
        %1503 = vmatprep.subr.mxu0 0.0
        %1504 = vmatpush1.msra.mxu0 0.0
        %1505 = vmatprep.subr.mxu0 0.0
        %1506 = vmatpush1.msra.mxu0 0.0
        %1507 = vmatprep.subr.mxu0 0.0
        %1508 = vmatpush1.msra.mxu0 0.0
        %1509 = vmatprep.subr.mxu0 0.0
        %1510 = vmatpush1.msra.mxu0 0.0
        %1511 = vmatprep.subr.mxu0 0.0
        %1512 = vmatpush1.msra.mxu0 0.0
        %1513 = vmatprep.subr.mxu0 0.0
        %1514 = vmatpush1.msra.mxu0 0.0
        %1515 = vmatprep.subr.mxu0 0.0
        %1516 = vmatpush1.msra.mxu0 0.0
        %1517 = vmatprep.subr.mxu0 0.0
        %1518 = vmatpush1.msra.mxu0 0.0
        %1519 = vmatprep.subr.mxu0 0.0
        %1520 = vmatpush1.msra.mxu0 0.0
        %1521 = vmatprep.subr.mxu0 0.0
        %1522 = vmatpush1.msra.mxu0 0.0
        %1523 = vmatprep.subr.mxu0 0.0
        %1524 = vmatpush1.msra.mxu0 0.0
        %1525 = vmatprep.subr.mxu0 0.0
        %1526 = vmatpush1.msra.mxu0 0.0
        %1527 = vmatprep.subr.mxu0 0.0
        %1528 = vmatpush1.msra.mxu0 0.0
        %1529 = vmatprep.subr.mxu0 0.0
        %1530 = vmatpush1.msra.mxu0 0.0
        %1531 = vmatprep.subr.mxu0 0.0
        %1532 = vmatpush1.msra.mxu0 0.0
        %1533 = vmatprep.subr.mxu0 0.0
        %1534 = vmatpush1.msra.mxu0 0.0
        %1535 = vmatprep.subr.mxu0 0.0
        %1536 = vmatpush1.msra.mxu0 0.0
        %1537 = vmatprep.subr.mxu0 0.0
        %1538 = vmatpush1.msra.mxu0 0.0
        %1539 = vmatprep.subr.mxu0 0.0
        %1540 = vmatpush1.msra.mxu0 0.0
        %1541 = vmatprep.subr.mxu0 0.0
        %1542 = vmatpush1.msra.mxu0 0.0
        %1543 = vmatprep.subr.mxu0 0.0
        %1544 = vmatpush1.msra.mxu0 0.0
        %1545 = vmatprep.subr.mxu0 0.0
        %1546 = vmatpush1.msra.mxu0 0.0
        %1547 = vmatprep.subr.mxu0 0.0
        %1548 = vmatpush1.msra.mxu0 0.0
        %1549 = vmatprep.subr.mxu0 0.0
        %1550 = vmatpush1.msra.mxu0 0.0
        %1551 = vmatprep.subr.mxu0 0.0
        %1552 = vmatpush1.msra.mxu0 0.0
        %1553 = vmatprep.subr.mxu0 0.0
        %1554 = vmatpush1.msra.mxu0 0.0
        %1555 = vmatprep.subr.mxu0 0.0
        %1556 = vmatpush1.msra.mxu0 0.0
        %1557 = vmatprep.subr.mxu0 0.0
        %1558 = vmatpush1.msra.mxu0 0.0
        %1559 = vmatprep.subr.mxu0 0.0
        %1560 = vmatpush1.msra.mxu0 0.0
        %1561 = vmatprep.subr.mxu0 0.0
        %1562 = vmatpush1.msra.mxu0 0.0
        %1563 = vmatprep.subr.mxu0 0.0
        %1564 = vmatpush1.msra.mxu0 0.0
        %1565 = vmatprep.mubr.f32.mxu0 0.0
        %1566 = vmatmul.mubr.f32.gmra.mrb[0].mxu0 %v1499
        %v1567 = vpop.f32.mrb[0].mxu0
        %v1568 = vadd.f32 0.0, %v1567
        %v1569 = vpop.f32.mrb[0].mxu0
        %1570 = vdwg.mxu0
        %1572 = vrot.lane.b32.xlu0 %v1568, 16
        %v1573 = vpop.permute.xlu0 %1572
        %v1575 = vsel %vm1241, %v1401, %v1573
        %v1576 = vld [vmem:[%s13] sm:$0xff]
        %v1577 = vld [vmem:[%s13 + $0x8] sm:$0xff]
        %v1578 = vld [vmem:[%s13 + $0x10] sm:$0xff]
        %v1579 = vld [vmem:[%s13 + $0x18] sm:$0xff]
        %v1580 = vld [vmem:[%s15] sm:$0x1]
        %v1582 = vlaneseq
        %v1583 = vshrl.u32 %v1582, 7
        %v1584 = vsub.s32 0, %v1583
        %v1585 = vrot.slane %v1580, %v1584
        %v1588 = vsel %vm998, %v1575, 0
        %1590 = vmatprep.subr.mxu0 0.0
        %1591 = vmatpush1.msra.mxu0 %v1576
        %1592 = vmatprep.subr.mxu0 0.0
        %1593 = vmatpush1.msra.mxu0 %v1577
        %1594 = vmatprep.subr.mxu0 0.0
        %1595 = vmatpush1.msra.mxu0 %v1578
        %1596 = vmatprep.subr.mxu0 0.0
        %1597 = vmatpush1.msra.mxu0 %v1579
        %1598 = vmatprep.subr.mxu0 0.0
        %1599 = vmatpush1.msra.mxu0 0.0
        %1600 = vmatprep.subr.mxu0 0.0
        %1601 = vmatpush1.msra.mxu0 0.0
        %1602 = vmatprep.subr.mxu0 0.0
        %1603 = vmatpush1.msra.mxu0 0.0
        %1604 = vmatprep.subr.mxu0 0.0
        %1605 = vmatpush1.msra.mxu0 0.0
        %1606 = vmatprep.subr.mxu0 0.0
        %1607 = vmatpush1.msra.mxu0 0.0
        %1608 = vmatprep.subr.mxu0 0.0
        %1609 = vmatpush1.msra.mxu0 0.0
        %1610 = vmatprep.subr.mxu0 0.0
        %1611 = vmatpush1.msra.mxu0 0.0
        %1612 = vmatprep.subr.mxu0 0.0
        %1613 = vmatpush1.msra.mxu0 0.0
        %1614 = vmatprep.subr.mxu0 0.0
        %1615 = vmatpush1.msra.mxu0 0.0
        %1616 = vmatprep.subr.mxu0 0.0
        %1617 = vmatpush1.msra.mxu0 0.0
        %1618 = vmatprep.subr.mxu0 0.0
        %1619 = vmatpush1.msra.mxu0 0.0
        %1620 = vmatprep.subr.mxu0 0.0
        %1621 = vmatpush1.msra.mxu0 0.0
        %1622 = vmatprep.subr.mxu0 0.0
        %1623 = vmatpush1.msra.mxu0 0.0
        %1624 = vmatprep.subr.mxu0 0.0
        %1625 = vmatpush1.msra.mxu0 0.0
        %1626 = vmatprep.subr.mxu0 0.0
        %1627 = vmatpush1.msra.mxu0 0.0
        %1628 = vmatprep.subr.mxu0 0.0
        %1629 = vmatpush1.msra.mxu0 0.0
        %1630 = vmatprep.subr.mxu0 0.0
        %1631 = vmatpush1.msra.mxu0 0.0
        %1632 = vmatprep.subr.mxu0 0.0
        %1633 = vmatpush1.msra.mxu0 0.0
        %1634 = vmatprep.subr.mxu0 0.0
        %1635 = vmatpush1.msra.mxu0 0.0
        %1636 = vmatprep.subr.mxu0 0.0
        %1637 = vmatpush1.msra.mxu0 0.0
        %1638 = vmatprep.subr.mxu0 0.0
        %1639 = vmatpush1.msra.mxu0 0.0
        %1640 = vmatprep.subr.mxu0 0.0
        %1641 = vmatpush1.msra.mxu0 0.0
        %1642 = vmatprep.subr.mxu0 0.0
        %1643 = vmatpush1.msra.mxu0 0.0
        %1644 = vmatprep.subr.mxu0 0.0
        %1645 = vmatpush1.msra.mxu0 0.0
        %1646 = vmatprep.subr.mxu0 0.0
        %1647 = vmatpush1.msra.mxu0 0.0
        %1648 = vmatprep.subr.mxu0 0.0
        %1649 = vmatpush1.msra.mxu0 0.0
        %1650 = vmatprep.subr.mxu0 0.0
        %1651 = vmatpush1.msra.mxu0 0.0
        %1652 = vmatprep.subr.mxu0 0.0
        %1653 = vmatpush1.msra.mxu0 0.0
        %1654 = vmatprep.mubr.f32.mxu0 0.0
        %1655 = vmatmul.mubr.f32.gmra.mrb[0].mxu0 %v1588
        %v1656 = vpop.f32.mrb[0].mxu0
        %v1657 = vadd.f32 %v1585, %v1656
        %v1658 = vpop.f32.mrb[0].mxu0
        %1659 = vdwg.mxu0
        %v1660 = vadd.f32 %v968, %v1657
        %v1661 = vld [vmem:[%s41] sm:$0x1]
        %v1662 = vld [vmem:[%s43] sm:$0x1]
        %v1663 = vsel %vm998, %v1660, 0.0
        %1664 = vadd.xlane.f32.xlu0 %v1663
        %v1665 = vpop.xlane.xlu0 %1664
        %v1666 = vrcp.pop 32.0
        %v1667 = vmul.f32 %v1665, %v1666
        %v1668 = vsub.f32 %v1660, %v1667
        %v1669 = vmul.f32 %v1668, %v1668
        %v1670 = vsel %vm998, %v1669, 0.0
        %1671 = vadd.xlane.f32.xlu0 %v1670
        %v1672 = vpop.xlane.xlu0 %1671
        %v1673 = vmul.f32 %v1672, %v1666
        %v1674 = vadd.f32 %v1673, 1e-05
        %v1675 = vrsqrt.pop %v1674
        %v1676 = vmul.f32 %v1668, %v1675
        %v1678 = vlaneseq
        %v1679 = vshrl.u32 %v1678, 7
        %v1680 = vsub.s32 0, %v1679
        %v1681 = vrot.slane %v1661, %v1680
        %v1683 = vmul.f32 %v1676, %v1681
        %v1685 = vlaneseq
        %v1686 = vshrl.u32 %v1685, 7
        %v1687 = vsub.s32 0, %v1686
        %v1688 = vrot.slane %v1662, %v1687
        %v1690 = vadd.f32 %v1683, %v1688
        %v1691 = vadd.f32 %v1690, %v977
        %v1692 = vadd.f32 %v969, %v978
        %v1693 = vadd.f32 %v970, %v979
        %v1694 = vadd.f32 %v971, %v980
        %v1695 = vadd.f32 %v972, %v981
        %v1696 = vadd.f32 %v973, %v982
        %v1697 = vadd.f32 %v974, %v983
        %v1698 = vadd.f32 %v975, %v984
        %v1699 = vadd.f32 %v976, %v985
        %v1700 = vld [vmem:[%s17] sm:$0xff]
        %v1701 = vld [vmem:[%s17 + $0x8] sm:$0xff]
        %v1702 = vld [vmem:[%s17 + $0x10] sm:$0xff]
        %v1703 = vld [vmem:[%s17 + $0x18] sm:$0xff]
        %v1704 = vld [vmem:[%s19] sm:$0x1]
        %v1706 = vlaneseq
        %v1707 = vshrl.u32 %v1706, 7
        %v1708 = vsub.s32 0, %v1707
        %v1709 = vrot.slane %v1704, %v1708
        %v1712 = vsel %vm998, %v1691, 0
        %1714 = vmatprep.subr.mxu0 0.0
        %1715 = vmatpush1.msra.mxu0 %v1700
        %1716 = vmatprep.subr.mxu0 0.0
        %1717 = vmatpush1.msra.mxu0 %v1701
        %1718 = vmatprep.subr.mxu0 0.0
        %1719 = vmatpush1.msra.mxu0 %v1702
        %1720 = vmatprep.subr.mxu0 0.0
        %1721 = vmatpush1.msra.mxu0 %v1703
        %1722 = vmatprep.subr.mxu0 0.0
        %1723 = vmatpush1.msra.mxu0 0.0
        %1724 = vmatprep.subr.mxu0 0.0
        %1725 = vmatpush1.msra.mxu0 0.0
        %1726 = vmatprep.subr.mxu0 0.0
        %1727 = vmatpush1.msra.mxu0 0.0
        %1728 = vmatprep.subr.mxu0 0.0
        %1729 = vmatpush1.msra.mxu0 0.0
        %1730 = vmatprep.subr.mxu0 0.0
        %1731 = vmatpush1.msra.mxu0 0.0
        %1732 = vmatprep.subr.mxu0 0.0
        %1733 = vmatpush1.msra.mxu0 0.0
        %1734 = vmatprep.subr.mxu0 0.0
        %1735 = vmatpush1.msra.mxu0 0.0
        %1736 = vmatprep.subr.mxu0 0.0
        %1737 = vmatpush1.msra.mxu0 0.0
        %1738 = vmatprep.subr.mxu0 0.0
        %1739 = vmatpush1.msra.mxu0 0.0
        %1740 = vmatprep.subr.mxu0 0.0
        %1741 = vmatpush1.msra.mxu0 0.0
        %1742 = vmatprep.subr.mxu0 0.0
        %1743 = vmatpush1.msra.mxu0 0.0
        %1744 = vmatprep.subr.mxu0 0.0
        %1745 = vmatpush1.msra.mxu0 0.0
        %1746 = vmatprep.subr.mxu0 0.0
        %1747 = vmatpush1.msra.mxu0 0.0
        %1748 = vmatprep.subr.mxu0 0.0
        %1749 = vmatpush1.msra.mxu0 0.0
        %1750 = vmatprep.subr.mxu0 0.0
        %1751 = vmatpush1.msra.mxu0 0.0
        %1752 = vmatprep.subr.mxu0 0.0
        %1753 = vmatpush1.msra.mxu0 0.0
        %1754 = vmatprep.subr.mxu0 0.0
        %1755 = vmatpush1.msra.mxu0 0.0
        %1756 = vmatprep.subr.mxu0 0.0
        %1757 = vmatpush1.msra.mxu0 0.0
        %1758 = vmatprep.subr.mxu0 0.0
        %1759 = vmatpush1.msra.mxu0 0.0
        %1760 = vmatprep.subr.mxu0 0.0
        %1761 = vmatpush1.msra.mxu0 0.0
        %1762 = vmatprep.subr.mxu0 0.0
        %1763 = vmatpush1.msra.mxu0 0.0
        %1764 = vmatprep.subr.mxu0 0.0
        %1765 = vmatpush1.msra.mxu0 0.0
        %1766 = vmatprep.subr.mxu0 0.0
        %1767 = vmatpush1.msra.mxu0 0.0
        %1768 = vmatprep.subr.mxu0 0.0
        %1769 = vmatpush1.msra.mxu0 0.0
        %1770 = vmatprep.subr.mxu0 0.0
        %1771 = vmatpush1.msra.mxu0 0.0
        %1772 = vmatprep.subr.mxu0 0.0
        %1773 = vmatpush1.msra.mxu0 0.0
        %1774 = vmatprep.subr.mxu0 0.0
        %1775 = vmatpush1.msra.mxu0 0.0
        %1776 = vmatprep.subr.mxu0 0.0
        %1777 = vmatpush1.msra.mxu0 0.0
        %1778 = vmatprep.mubr.f32.mxu0 0.0
        %1779 = vmatmul.mubr.f32.gmra.mrb[0].mxu0 %v1712
        %v1780 = vpop.f32.mrb[0].mxu0
        %v1781 = vadd.f32 %v1709, %v1780
        %v1782 = vpop.f32.mrb[0].mxu0
        %1783 = vdwg.mxu0
        %s1784 = scalar_lea.vmem %s17, 32
        %v1785 = vld [vmem:[%s1784] sm:$0xff]
        %v1786 = vld [vmem:[%s1784 + $0x8] sm:$0xff]
        %v1787 = vld [vmem:[%s1784 + $0x10] sm:$0xff]
        %v1788 = vld [vmem:[%s1784 + $0x18] sm:$0xff]
        %s1789 = scalar_lea.vmem %s19, 1
        %v1790 = vld [vmem:[%s1789] sm:$0x1]
        %v1792 = vlaneseq
        %v1793 = vshrl.u32 %v1792, 7
        %v1794 = vsub.s32 0, %v1793
        %v1795 = vrot.slane %v1790, %v1794
        %v1798 = vsel %vm998, %v1692, 0
        %v1801 = vsel %vm998, %v1693, 0
        %v1804 = vsel %vm998, %v1694, 0
        %v1807 = vsel %vm998, %v1695, 0
        %v1810 = vsel %vm998, %v1696, 0
        %v1813 = vsel %vm998, %v1697, 0
        %v1816 = vsel %vm998, %v1698, 0
        %v1819 = vsel %vm998, %v1699, 0
        %1821 = vmatprep.subr.mxu0 0.0
        %1822 = vmatpush1.msra.mxu0 %v1785
        %1823 = vmatprep.subr.mxu0 0.0
        %1824 = vmatpush1.msra.mxu0 %v1786
        %1825 = vmatprep.subr.mxu0 0.0
        %1826 = vmatpush1.msra.mxu0 %v1787
        %1827 = vmatprep.subr.mxu0 0.0
        %1828 = vmatpush1.msra.mxu0 %v1788
        %1829 = vmatprep.subr.mxu0 0.0
        %1830 = vmatpush1.msra.mxu0 0.0
        %1831 = vmatprep.subr.mxu0 0.0
        %1832 = vmatpush1.msra.mxu0 0.0
        %1833 = vmatprep.subr.mxu0 0.0
        %1834 = vmatpush1.msra.mxu0 0.0
        %1835 = vmatprep.subr.mxu0 0.0
        %1836 = vmatpush1.msra.mxu0 0.0
        %1837 = vmatprep.subr.mxu0 0.0
        %1838 = vmatpush1.msra.mxu0 0.0
        %1839 = vmatprep.subr.mxu0 0.0
        %1840 = vmatpush1.msra.mxu0 0.0
        %1841 = vmatprep.subr.mxu0 0.0
        %1842 = vmatpush1.msra.mxu0 0.0
        %1843 = vmatprep.subr.mxu0 0.0
        %1844 = vmatpush1.msra.mxu0 0.0
        %1845 = vmatprep.subr.mxu0 0.0
        %1846 = vmatpush1.msra.mxu0 0.0
        %1847 = vmatprep.subr.mxu0 0.0
        %1848 = vmatpush1.msra.mxu0 0.0
        %1849 = vmatprep.subr.mxu0 0.0
        %1850 = vmatpush1.msra.mxu0 0.0
        %1851 = vmatprep.subr.mxu0 0.0
        %1852 = vmatpush1.msra.mxu0 0.0
        %1853 = vmatprep.subr.mxu0 0.0
        %1854 = vmatpush1.msra.mxu0 0.0
        %1855 = vmatprep.subr.mxu0 0.0
        %1856 = vmatpush1.msra.mxu0 0.0
        %1857 = vmatprep.subr.mxu0 0.0
        %1858 = vmatpush1.msra.mxu0 0.0
        %1859 = vmatprep.subr.mxu0 0.0
        %1860 = vmatpush1.msra.mxu0 0.0
        %1861 = vmatprep.subr.mxu0 0.0
        %1862 = vmatpush1.msra.mxu0 0.0
        %1863 = vmatprep.subr.mxu0 0.0
        %1864 = vmatpush1.msra.mxu0 0.0
        %1865 = vmatprep.subr.mxu0 0.0
        %1866 = vmatpush1.msra.mxu0 0.0
        %1867 = vmatprep.subr.mxu0 0.0
        %1868 = vmatpush1.msra.mxu0 0.0
        %1869 = vmatprep.subr.mxu0 0.0
        %1870 = vmatpush1.msra.mxu0 0.0
        %1871 = vmatprep.subr.mxu0 0.0
        %1872 = vmatpush1.msra.mxu0 0.0
        %1873 = vmatprep.subr.mxu0 0.0
        %1874 = vmatpush1.msra.mxu0 0.0
        %1875 = vmatprep.subr.mxu0 0.0
        %1876 = vmatpush1.msra.mxu0 0.0
        %1877 = vmatprep.subr.mxu0 0.0
        %1878 = vmatpush1.msra.mxu0 0.0
        %1879 = vmatprep.subr.mxu0 0.0
        %1880 = vmatpush1.msra.mxu0 0.0
        %1881 = vmatprep.subr.mxu0 0.0
        %1882 = vmatpush1.msra.mxu0 0.0
        %1883 = vmatprep.subr.mxu0 0.0
        %1884 = vmatpush1.msra.mxu0 0.0
        %1885 = vmatprep.mubr.f32.mxu0 0.0
        %1886 = vmatmul.mubr.f32.gmra.mrb[0].mxu0 %v1798
        %v1887 = vpop.f32.mrb[0].mxu0
        %v1888 = vadd.f32 %v1795, %v1887
        %v1889 = vpop.f32.mrb[0].mxu0
        %1890 = vmatprep.mubr.f32.mxu0 0.0
        %1891 = vmatmul.mubr.f32.gmra.mrb[0].mxu0 %v1801
        %v1892 = vpop.f32.mrb[0].mxu0
        %v1893 = vadd.f32 %v1795, %v1892
        %v1894 = vpop.f32.mrb[0].mxu0
        %1895 = vmatprep.mubr.f32.mxu0 0.0
        %1896 = vmatmul.mubr.f32.gmra.mrb[0].mxu0 %v1804
        %v1897 = vpop.f32.mrb[0].mxu0
        %v1898 = vadd.f32 %v1795, %v1897
        %v1899 = vpop.f32.mrb[0].mxu0
        %1900 = vmatprep.mubr.f32.mxu0 0.0
        %1901 = vmatmul.mubr.f32.gmra.mrb[0].mxu0 %v1807
        %v1902 = vpop.f32.mrb[0].mxu0
        %v1903 = vadd.f32 %v1795, %v1902
        %v1904 = vpop.f32.mrb[0].mxu0
        %1905 = vmatprep.mubr.f32.mxu0 0.0
        %1906 = vmatmul.mubr.f32.gmra.mrb[0].mxu0 %v1810
        %v1907 = vpop.f32.mrb[0].mxu0
        %v1908 = vadd.f32 %v1795, %v1907
        %v1909 = vpop.f32.mrb[0].mxu0
        %1910 = vmatprep.mubr.f32.mxu0 0.0
        %1911 = vmatmul.mubr.f32.gmra.mrb[0].mxu0 %v1813
        %v1912 = vpop.f32.mrb[0].mxu0
        %v1913 = vadd.f32 %v1795, %v1912
        %v1914 = vpop.f32.mrb[0].mxu0
        %1915 = vmatprep.mubr.f32.mxu0 0.0
        %1916 = vmatmul.mubr.f32.gmra.mrb[0].mxu0 %v1816
        %v1917 = vpop.f32.mrb[0].mxu0
        %v1918 = vadd.f32 %v1795, %v1917
        %v1919 = vpop.f32.mrb[0].mxu0
        %1920 = vmatprep.mubr.f32.mxu0 0.0
        %1921 = vmatmul.mubr.f32.gmra.mrb[0].mxu0 %v1819
        %v1922 = vpop.f32.mrb[0].mxu0
        %v1923 = vadd.f32 %v1795, %v1922
        %v1924 = vpop.f32.mrb[0].mxu0
        %1925 = vdwg.mxu0
        %s1926 = scalar_lea.vmem %s17, 64
        %v1927 = vld [vmem:[%s1926] sm:$0xff]
        %v1928 = vld [vmem:[%s1926 + $0x8] sm:$0xff]
        %v1929 = vld [vmem:[%s1926 + $0x10] sm:$0xff]
        %v1930 = vld [vmem:[%s1926 + $0x18] sm:$0xff]
        %s1931 = scalar_lea.vmem %s19, 2
        %v1932 = vld [vmem:[%s1931] sm:$0x1]
        %v1934 = vlaneseq
        %v1935 = vshrl.u32 %v1934, 7
        %v1936 = vsub.s32 0, %v1935
        %v1937 = vrot.slane %v1932, %v1936
        %v1940 = vsel %vm998, %v969, 0
        %v1943 = vsel %vm998, %v970, 0
        %v1946 = vsel %vm998, %v971, 0
        %v1949 = vsel %vm998, %v972, 0
        %v1952 = vsel %vm998, %v973, 0
        %v1955 = vsel %vm998, %v974, 0
        %v1958 = vsel %vm998, %v975, 0
        %v1961 = vsel %vm998, %v976, 0
        %1963 = vmatprep.subr.mxu0 0.0
        %1964 = vmatpush1.msra.mxu0 %v1927
        %1965 = vmatprep.subr.mxu0 0.0
        %1966 = vmatpush1.msra.mxu0 %v1928
        %1967 = vmatprep.subr.mxu0 0.0
        %1968 = vmatpush1.msra.mxu0 %v1929
        %1969 = vmatprep.subr.mxu0 0.0
        %1970 = vmatpush1.msra.mxu0 %v1930
        %1971 = vmatprep.subr.mxu0 0.0
        %1972 = vmatpush1.msra.mxu0 0.0
        %1973 = vmatprep.subr.mxu0 0.0
        %1974 = vmatpush1.msra.mxu0 0.0
        %1975 = vmatprep.subr.mxu0 0.0
        %1976 = vmatpush1.msra.mxu0 0.0
        %1977 = vmatprep.subr.mxu0 0.0
        %1978 = vmatpush1.msra.mxu0 0.0
        %1979 = vmatprep.subr.mxu0 0.0
        %1980 = vmatpush1.msra.mxu0 0.0
        %1981 = vmatprep.subr.mxu0 0.0
        %1982 = vmatpush1.msra.mxu0 0.0
        %1983 = vmatprep.subr.mxu0 0.0
        %1984 = vmatpush1.msra.mxu0 0.0
        %1985 = vmatprep.subr.mxu0 0.0
        %1986 = vmatpush1.msra.mxu0 0.0
        %1987 = vmatprep.subr.mxu0 0.0
        %1988 = vmatpush1.msra.mxu0 0.0
        %1989 = vmatprep.subr.mxu0 0.0
        %1990 = vmatpush1.msra.mxu0 0.0
        %1991 = vmatprep.subr.mxu0 0.0
        %1992 = vmatpush1.msra.mxu0 0.0
        %1993 = vmatprep.subr.mxu0 0.0
        %1994 = vmatpush1.msra.mxu0 0.0
        %1995 = vmatprep.subr.mxu0 0.0
        %1996 = vmatpush1.msra.mxu0 0.0
        %1997 = vmatprep.subr.mxu0 0.0
        %1998 = vmatpush1.msra.mxu0 0.0
        %1999 = vmatprep.subr.mxu0 0.0
        %2000 = vmatpush1.msra.mxu0 0.0
        %2001 = vmatprep.subr.mxu0 0.0
        %2002 = vmatpush1.msra.mxu0 0.0
        %2003 = vmatprep.subr.mxu0 0.0
        %2004 = vmatpush1.msra.mxu0 0.0
        %2005 = vmatprep.subr.mxu0 0.0
        %2006 = vmatpush1.msra.mxu0 0.0
        %2007 = vmatprep.subr.mxu0 0.0
        %2008 = vmatpush1.msra.mxu0 0.0
        %2009 = vmatprep.subr.mxu0 0.0
        %2010 = vmatpush1.msra.mxu0 0.0
        %2011 = vmatprep.subr.mxu0 0.0
        %2012 = vmatpush1.msra.mxu0 0.0
        %2013 = vmatprep.subr.mxu0 0.0
        %2014 = vmatpush1.msra.mxu0 0.0
        %2015 = vmatprep.subr.mxu0 0.0
        %2016 = vmatpush1.msra.mxu0 0.0
        %2017 = vmatprep.subr.mxu0 0.0
        %2018 = vmatpush1.msra.mxu0 0.0
        %2019 = vmatprep.subr.mxu0 0.0
        %2020 = vmatpush1.msra.mxu0 0.0
        %2021 = vmatprep.subr.mxu0 0.0
        %2022 = vmatpush1.msra.mxu0 0.0
        %2023 = vmatprep.subr.mxu0 0.0
        %2024 = vmatpush1.msra.mxu0 0.0
        %2025 = vmatprep.subr.mxu0 0.0
        %2026 = vmatpush1.msra.mxu0 0.0
        %2027 = vmatprep.mubr.f32.mxu0 0.0
        %2028 = vmatmul.mubr.f32.gmra.mrb[0].mxu0 %v1940
        %v2029 = vpop.f32.mrb[0].mxu0
        %v2030 = vadd.f32 %v1937, %v2029
        %v2031 = vpop.f32.mrb[0].mxu0
        %2032 = vmatprep.mubr.f32.mxu0 0.0
        %2033 = vmatmul.mubr.f32.gmra.mrb[0].mxu0 %v1943
        %v2034 = vpop.f32.mrb[0].mxu0
        %v2035 = vadd.f32 %v1937, %v2034
        %v2036 = vpop.f32.mrb[0].mxu0
        %2037 = vmatprep.mubr.f32.mxu0 0.0
        %2038 = vmatmul.mubr.f32.gmra.mrb[0].mxu0 %v1946
        %v2039 = vpop.f32.mrb[0].mxu0
        %v2040 = vadd.f32 %v1937, %v2039
        %v2041 = vpop.f32.mrb[0].mxu0
        %2042 = vmatprep.mubr.f32.mxu0 0.0
        %2043 = vmatmul.mubr.f32.gmra.mrb[0].mxu0 %v1949
        %v2044 = vpop.f32.mrb[0].mxu0
        %v2045 = vadd.f32 %v1937, %v2044
        %v2046 = vpop.f32.mrb[0].mxu0
        %2047 = vmatprep.mubr.f32.mxu0 0.0
        %2048 = vmatmul.mubr.f32.gmra.mrb[0].mxu0 %v1952
        %v2049 = vpop.f32.mrb[0].mxu0
        %v2050 = vadd.f32 %v1937, %v2049
        %v2051 = vpop.f32.mrb[0].mxu0
        %2052 = vmatprep.mubr.f32.mxu0 0.0
        %2053 = vmatmul.mubr.f32.gmra.mrb[0].mxu0 %v1955
        %v2054 = vpop.f32.mrb[0].mxu0
        %v2055 = vadd.f32 %v1937, %v2054
        %v2056 = vpop.f32.mrb[0].mxu0
        %2057 = vmatprep.mubr.f32.mxu0 0.0
        %2058 = vmatmul.mubr.f32.gmra.mrb[0].mxu0 %v1958
        %v2059 = vpop.f32.mrb[0].mxu0
        %v2060 = vadd.f32 %v1937, %v2059
        %v2061 = vpop.f32.mrb[0].mxu0
        %2062 = vmatprep.mubr.f32.mxu0 0.0
        %2063 = vmatmul.mubr.f32.gmra.mrb[0].mxu0 %v1961
        %v2064 = vpop.f32.mrb[0].mxu0
        %v2065 = vadd.f32 %v1937, %v2064
        %v2066 = vpop.f32.mrb[0].mxu0
        %2067 = vdwg.mxu0
        %v2069 = vsel %vm1319, %v1781, 0
        %v2072 = vsel %vm1319, %v1888, 0
        %v2075 = vsel %vm1319, %v1893, 0
        %v2078 = vsel %vm1319, %v1898, 0
        %v2081 = vsel %vm1319, %v1903, 0
        %v2084 = vsel %vm1319, %v1908, 0
        %v2087 = vsel %vm1319, %v1913, 0
        %v2090 = vsel %vm1319, %v1918, 0
        %v2093 = vsel %vm1319, %v1923, 0
        %2095 = vmatprep.subr.mxu0 0.0
        %2096 = vmatpush1.xpose.msra.mxu0 %v2072
        %2097 = vmatprep.subr.mxu0 0.0
        %2098 = vmatpush1.xpose.msra.mxu0 %v2075
        %2099 = vmatprep.subr.mxu0 0.0
        %2100 = vmatpush1.xpose.msra.mxu0 %v2078
        %2101 = vmatprep.subr.mxu0 0.0
        %2102 = vmatpush1.xpose.msra.mxu0 %v2081
        %2103 = vmatprep.subr.mxu0 0.0
        %2104 = vmatpush1.xpose.msra.mxu0 %v2084
        %2105 = vmatprep.subr.mxu0 0.0
        %2106 = vmatpush1.xpose.msra.mxu0 %v2087
        %2107 = vmatprep.subr.mxu0 0.0
        %2108 = vmatpush1.xpose.msra.mxu0 %v2090
        %2109 = vmatprep.subr.mxu0 0.0
        %2110 = vmatpush1.xpose.msra.mxu0 %v2093
        %2111 = vmatprep.subr.mxu0 0.0
        %2112 = vmatpush1.xpose.msra.mxu0 0.0
        %2113 = vmatprep.subr.mxu0 0.0
        %2114 = vmatpush1.xpose.msra.mxu0 0.0
        %2115 = vmatprep.subr.mxu0 0.0
        %2116 = vmatpush1.xpose.msra.mxu0 0.0
        %2117 = vmatprep.subr.mxu0 0.0
        %2118 = vmatpush1.xpose.msra.mxu0 0.0
        %2119 = vmatprep.subr.mxu0 0.0
        %2120 = vmatpush1.xpose.msra.mxu0 0.0
        %2121 = vmatprep.subr.mxu0 0.0
        %2122 = vmatpush1.xpose.msra.mxu0 0.0
        %2123 = vmatprep.subr.mxu0 0.0
        %2124 = vmatpush1.xpose.msra.mxu0 0.0
        %2125 = vmatprep.subr.mxu0 0.0
        %2126 = vmatpush1.xpose.msra.mxu0 0.0
        %2127 = vmatprep.subr.mxu0 0.0
        %2128 = vmatpush1.xpose.msra.mxu0 0.0
        %2129 = vmatprep.subr.mxu0 0.0
        %2130 = vmatpush1.xpose.msra.mxu0 0.0
        %2131 = vmatprep.subr.mxu0 0.0
        %2132 = vmatpush1.xpose.msra.mxu0 0.0
        %2133 = vmatprep.subr.mxu0 0.0
        %2134 = vmatpush1.xpose.msra.mxu0 0.0
        %2135 = vmatprep.subr.mxu0 0.0
        %2136 = vmatpush1.xpose.msra.mxu0 0.0
        %2137 = vmatprep.subr.mxu0 0.0
        %2138 = vmatpush1.xpose.msra.mxu0 0.0
        %2139 = vmatprep.subr.mxu0 0.0
        %2140 = vmatpush1.xpose.msra.mxu0 0.0
        %2141 = vmatprep.subr.mxu0 0.0
        %2142 = vmatpush1.xpose.msra.mxu0 0.0
        %2143 = vmatprep.subr.mxu0 0.0
        %2144 = vmatpush1.xpose.msra.mxu0 0.0
        %2145 = vmatprep.subr.mxu0 0.0
        %2146 = vmatpush1.xpose.msra.mxu0 0.0
        %2147 = vmatprep.subr.mxu0 0.0
        %2148 = vmatpush1.xpose.msra.mxu0 0.0
        %2149 = vmatprep.subr.mxu0 0.0
        %2150 = vmatpush1.xpose.msra.mxu0 0.0
        %2151 = vmatprep.subr.mxu0 0.0
        %2152 = vmatpush1.xpose.msra.mxu0 0.0
        %2153 = vmatprep.subr.mxu0 0.0
        %2154 = vmatpush1.xpose.msra.mxu0 0.0
        %2155 = vmatprep.subr.mxu0 0.0
        %2156 = vmatpush1.xpose.msra.mxu0 0.0
        %2157 = vmatprep.subr.mxu0 0.0
        %2158 = vmatpush1.xpose.msra.mxu0 0.0
        %2159 = vmatprep.mubr.f32.mxu0 0.0
        %2160 = vmatmul.mubr.f32.gmra.mrb[0].mxu0 %v2069
        %v2161 = vpop.f32.mrb[0].mxu0
        %v2162 = vadd.f32 0.0, %v2161
        %v2163 = vpop.f32.mrb[0].mxu0
        %2164 = vdwg.mxu0
        %v2165 = vmul.f32 %v2162, 0.35355338
        %vm2166 = vcmask 523264
        %v2167 = vsel %vm2166, %v2165, -inf
        %2168 = vmax.xlane.f32.xlu0 %v2167
        %v2169 = vpop.xlane.xlu0 %2168
        %v2170 = vsub.f32 %v2165, %v2169
        %v2171 = vmul.f32 %v2170, 1.442695
        %v2172 = vpow.pop %v2171
        %v2173 = vsel %vm2166, %v2172, 0.0
        %2174 = vadd.xlane.f32.xlu0 %v2173
        %v2175 = vpop.xlane.xlu0 %2174
        %v2176 = vrcp.pop %v2175
        %v2177 = vmul.f32 %v2172, %v2176
        %v2179 = vsel %vm2166, %v2177, 0
        %2181 = vmatprep.subr.mxu0 0.0
        %2182 = vmatpush1.msra.mxu0 %v2030
        %2183 = vmatprep.subr.mxu0 0.0
        %2184 = vmatpush1.msra.mxu0 %v2035
        %2185 = vmatprep.subr.mxu0 0.0
        %2186 = vmatpush1.msra.mxu0 %v2040
        %2187 = vmatprep.subr.mxu0 0.0
        %2188 = vmatpush1.msra.mxu0 %v2045
        %2189 = vmatprep.subr.mxu0 0.0
        %2190 = vmatpush1.msra.mxu0 %v2050
        %2191 = vmatprep.subr.mxu0 0.0
        %2192 = vmatpush1.msra.mxu0 %v2055
        %2193 = vmatprep.subr.mxu0 0.0
        %2194 = vmatpush1.msra.mxu0 %v2060
        %2195 = vmatprep.subr.mxu0 0.0
        %2196 = vmatpush1.msra.mxu0 %v2065
        %2197 = vmatprep.subr.mxu0 0.0
        %2198 = vmatpush1.msra.mxu0 0.0
        %2199 = vmatprep.subr.mxu0 0.0
        %2200 = vmatpush1.msra.mxu0 0.0
        %2201 = vmatprep.subr.mxu0 0.0
        %2202 = vmatpush1.msra.mxu0 0.0
        %2203 = vmatprep.subr.mxu0 0.0
        %2204 = vmatpush1.msra.mxu0 0.0
        %2205 = vmatprep.subr.mxu0 0.0
        %2206 = vmatpush1.msra.mxu0 0.0
        %2207 = vmatprep.subr.mxu0 0.0
        %2208 = vmatpush1.msra.mxu0 0.0
        %2209 = vmatprep.subr.mxu0 0.0
        %2210 = vmatpush1.msra.mxu0 0.0
        %2211 = vmatprep.subr.mxu0 0.0
        %2212 = vmatpush1.msra.mxu0 0.0
        %2213 = vmatprep.subr.mxu0 0.0
        %2214 = vmatpush1.msra.mxu0 0.0
        %2215 = vmatprep.subr.mxu0 0.0
        %2216 = vmatpush1.msra.mxu0 0.0
        %2217 = vmatprep.subr.mxu0 0.0
        %2218 = vmatpush1.msra.mxu0 0.0
        %2219 = vmatprep.subr.mxu0 0.0
        %2220 = vmatpush1.msra.mxu0 0.0
        %2221 = vmatprep.subr.mxu0 0.0
        %2222 = vmatpush1.msra.mxu0 0.0
        %2223 = vmatprep.subr.mxu0 0.0
        %2224 = vmatpush1.msra.mxu0 0.0
        %2225 = vmatprep.subr.mxu0 0.0
        %2226 = vmatpush1.msra.mxu0 0.0
        %2227 = vmatprep.subr.mxu0 0.0
        %2228 = vmatpush1.msra.mxu0 0.0
        %2229 = vmatprep.subr.mxu0 0.0
        %2230 = vmatpush1.msra.mxu0 0.0
        %2231 = vmatprep.subr.mxu0 0.0
        %2232 = vmatpush1.msra.mxu0 0.0
        %2233 = vmatprep.subr.mxu0 0.0
        %2234 = vmatpush1.msra.mxu0 0.0
        %2235 = vmatprep.subr.mxu0 0.0
        %2236 = vmatpush1.msra.mxu0 0.0
        %2237 = vmatprep.subr.mxu0 0.0
        %2238 = vmatpush1.msra.mxu0 0.0
        %2239 = vmatprep.subr.mxu0 0.0
        %2240 = vmatpush1.msra.mxu0 0.0
        %2241 = vmatprep.subr.mxu0 0.0
        %2242 = vmatpush1.msra.mxu0 0.0
        %2243 = vmatprep.subr.mxu0 0.0
        %2244 = vmatpush1.msra.mxu0 0.0
        %2245 = vmatprep.mubr.f32.mxu0 0.0
        %2246 = vmatmul.mubr.f32.gmra.mrb[0].mxu0 %v2179
        %v2247 = vpop.f32.mrb[0].mxu0
        %v2248 = vadd.f32 0.0, %v2247
        %v2249 = vpop.f32.mrb[0].mxu0
        %2250 = vdwg.mxu0
        %2251 = vrot.lane.b32.xlu0 %v1781, 120
        %v2252 = vpop.permute.xlu0 %2251
        %2253 = vrot.lane.b32.xlu0 %v1888, 120
        %v2254 = vpop.permute.xlu0 %2253
        %2255 = vrot.lane.b32.xlu0 %v1893, 120
        %v2256 = vpop.permute.xlu0 %2255
        %2257 = vrot.lane.b32.xlu0 %v1898, 120
        %v2258 = vpop.permute.xlu0 %2257
        %2259 = vrot.lane.b32.xlu0 %v1903, 120
        %v2260 = vpop.permute.xlu0 %2259
        %2261 = vrot.lane.b32.xlu0 %v1908, 120
        %v2262 = vpop.permute.xlu0 %2261
        %2263 = vrot.lane.b32.xlu0 %v1913, 120
        %v2264 = vpop.permute.xlu0 %2263
        %2265 = vrot.lane.b32.xlu0 %v1918, 120
        %v2266 = vpop.permute.xlu0 %2265
        %2267 = vrot.lane.b32.xlu0 %v1923, 120
        %v2268 = vpop.permute.xlu0 %2267
        %v2269 = vsel %vm1319, %v2252, 0
        %v2271 = vsel %vm1319, %v2254, 0
        %v2273 = vsel %vm1319, %v2256, 0
        %v2275 = vsel %vm1319, %v2258, 0
        %v2277 = vsel %vm1319, %v2260, 0
        %v2279 = vsel %vm1319, %v2262, 0
        %v2281 = vsel %vm1319, %v2264, 0
        %v2283 = vsel %vm1319, %v2266, 0
        %v2285 = vsel %vm1319, %v2268, 0
        %2287 = vmatprep.subr.mxu0 0.0
        %2288 = vmatpush1.xpose.msra.mxu0 %v2271
        %2289 = vmatprep.subr.mxu0 0.0
        %2290 = vmatpush1.xpose.msra.mxu0 %v2273
        %2291 = vmatprep.subr.mxu0 0.0
        %2292 = vmatpush1.xpose.msra.mxu0 %v2275
        %2293 = vmatprep.subr.mxu0 0.0
        %2294 = vmatpush1.xpose.msra.mxu0 %v2277
        %2295 = vmatprep.subr.mxu0 0.0
        %2296 = vmatpush1.xpose.msra.mxu0 %v2279
        %2297 = vmatprep.subr.mxu0 0.0
        %2298 = vmatpush1.xpose.msra.mxu0 %v2281
        %2299 = vmatprep.subr.mxu0 0.0
        %2300 = vmatpush1.xpose.msra.mxu0 %v2283
        %2301 = vmatprep.subr.mxu0 0.0
        %2302 = vmatpush1.xpose.msra.mxu0 %v2285
        %2303 = vmatprep.subr.mxu0 0.0
        %2304 = vmatpush1.xpose.msra.mxu0 0.0
        %2305 = vmatprep.subr.mxu0 0.0
        %2306 = vmatpush1.xpose.msra.mxu0 0.0
        %2307 = vmatprep.subr.mxu0 0.0
        %2308 = vmatpush1.xpose.msra.mxu0 0.0
        %2309 = vmatprep.subr.mxu0 0.0
        %2310 = vmatpush1.xpose.msra.mxu0 0.0
        %2311 = vmatprep.subr.mxu0 0.0
        %2312 = vmatpush1.xpose.msra.mxu0 0.0
        %2313 = vmatprep.subr.mxu0 0.0
        %2314 = vmatpush1.xpose.msra.mxu0 0.0
        %2315 = vmatprep.subr.mxu0 0.0
        %2316 = vmatpush1.xpose.msra.mxu0 0.0
        %2317 = vmatprep.subr.mxu0 0.0
        %2318 = vmatpush1.xpose.msra.mxu0 0.0
        %2319 = vmatprep.subr.mxu0 0.0
        %2320 = vmatpush1.xpose.msra.mxu0 0.0
        %2321 = vmatprep.subr.mxu0 0.0
        %2322 = vmatpush1.xpose.msra.mxu0 0.0
        %2323 = vmatprep.subr.mxu0 0.0
        %2324 = vmatpush1.xpose.msra.mxu0 0.0
        %2325 = vmatprep.subr.mxu0 0.0
        %2326 = vmatpush1.xpose.msra.mxu0 0.0
        %2327 = vmatprep.subr.mxu0 0.0
        %2328 = vmatpush1.xpose.msra.mxu0 0.0
        %2329 = vmatprep.subr.mxu0 0.0
        %2330 = vmatpush1.xpose.msra.mxu0 0.0
        %2331 = vmatprep.subr.mxu0 0.0
        %2332 = vmatpush1.xpose.msra.mxu0 0.0
        %2333 = vmatprep.subr.mxu0 0.0
        %2334 = vmatpush1.xpose.msra.mxu0 0.0
        %2335 = vmatprep.subr.mxu0 0.0
        %2336 = vmatpush1.xpose.msra.mxu0 0.0
        %2337 = vmatprep.subr.mxu0 0.0
        %2338 = vmatpush1.xpose.msra.mxu0 0.0
        %2339 = vmatprep.subr.mxu0 0.0
        %2340 = vmatpush1.xpose.msra.mxu0 0.0
        %2341 = vmatprep.subr.mxu0 0.0
        %2342 = vmatpush1.xpose.msra.mxu0 0.0
        %2343 = vmatprep.subr.mxu0 0.0
        %2344 = vmatpush1.xpose.msra.mxu0 0.0
        %2345 = vmatprep.subr.mxu0 0.0
        %2346 = vmatpush1.xpose.msra.mxu0 0.0
        %2347 = vmatprep.subr.mxu0 0.0
        %2348 = vmatpush1.xpose.msra.mxu0 0.0
        %2349 = vmatprep.subr.mxu0 0.0
        %2350 = vmatpush1.xpose.msra.mxu0 0.0
        %2351 = vmatprep.mubr.f32.mxu0 0.0
        %2352 = vmatmul.mubr.f32.gmra.mrb[0].mxu0 %v2269
        %v2353 = vpop.f32.mrb[0].mxu0
        %v2354 = vadd.f32 0.0, %v2353
        %v2355 = vpop.f32.mrb[0].mxu0
        %2356 = vdwg.mxu0
        %v2357 = vmul.f32 %v2354, 0.35355338
        %v2358 = vsel %vm2166, %v2357, -inf
        %2359 = vmax.xlane.f32.xlu0 %v2358
        %v2360 = vpop.xlane.xlu0 %2359
        %v2361 = vsub.f32 %v2357, %v2360
        %v2362 = vmul.f32 %v2361, 1.442695
        %v2363 = vpow.pop %v2362
        %v2364 = vsel %vm2166, %v2363, 0.0
        %2365 = vadd.xlane.f32.xlu0 %v2364
        %v2366 = vpop.xlane.xlu0 %2365
        %v2367 = vrcp.pop %v2366
        %v2368 = vmul.f32 %v2363, %v2367
        %2377 = vrot.lane.b32.xlu0 %v2030, 120
        %v2378 = vpop.permute.xlu0 %2377
        %2379 = vrot.lane.b32.xlu0 %v2035, 120
        %v2380 = vpop.permute.xlu0 %2379
        %2381 = vrot.lane.b32.xlu0 %v2040, 120
        %v2382 = vpop.permute.xlu0 %2381
        %2383 = vrot.lane.b32.xlu0 %v2045, 120
        %v2384 = vpop.permute.xlu0 %2383
        %2385 = vrot.lane.b32.xlu0 %v2050, 120
        %v2386 = vpop.permute.xlu0 %2385
        %2387 = vrot.lane.b32.xlu0 %v2055, 120
        %v2388 = vpop.permute.xlu0 %2387
        %2389 = vrot.lane.b32.xlu0 %v2060, 120
        %v2390 = vpop.permute.xlu0 %2389
        %2391 = vrot.lane.b32.xlu0 %v2065, 120
        %v2392 = vpop.permute.xlu0 %2391
        %v2402 = vsel %vm2166, %v2368, 0
        %2404 = vmatprep.subr.mxu0 0.0
        %2405 = vmatpush1.msra.mxu0 %v2378
        %2406 = vmatprep.subr.mxu0 0.0
        %2407 = vmatpush1.msra.mxu0 %v2380
        %2408 = vmatprep.subr.mxu0 0.0
        %2409 = vmatpush1.msra.mxu0 %v2382
        %2410 = vmatprep.subr.mxu0 0.0
        %2411 = vmatpush1.msra.mxu0 %v2384
        %2412 = vmatprep.subr.mxu0 0.0
        %2413 = vmatpush1.msra.mxu0 %v2386
        %2414 = vmatprep.subr.mxu0 0.0
        %2415 = vmatpush1.msra.mxu0 %v2388
        %2416 = vmatprep.subr.mxu0 0.0
        %2417 = vmatpush1.msra.mxu0 %v2390
        %2418 = vmatprep.subr.mxu0 0.0
        %2419 = vmatpush1.msra.mxu0 %v2392
        %2420 = vmatprep.subr.mxu0 0.0
        %2421 = vmatpush1.msra.mxu0 0.0
        %2422 = vmatprep.subr.mxu0 0.0
        %2423 = vmatpush1.msra.mxu0 0.0
        %2424 = vmatprep.subr.mxu0 0.0
        %2425 = vmatpush1.msra.mxu0 0.0
        %2426 = vmatprep.subr.mxu0 0.0
        %2427 = vmatpush1.msra.mxu0 0.0
        %2428 = vmatprep.subr.mxu0 0.0
        %2429 = vmatpush1.msra.mxu0 0.0
        %2430 = vmatprep.subr.mxu0 0.0
        %2431 = vmatpush1.msra.mxu0 0.0
        %2432 = vmatprep.subr.mxu0 0.0
        %2433 = vmatpush1.msra.mxu0 0.0
        %2434 = vmatprep.subr.mxu0 0.0
        %2435 = vmatpush1.msra.mxu0 0.0
        %2436 = vmatprep.subr.mxu0 0.0
        %2437 = vmatpush1.msra.mxu0 0.0
        %2438 = vmatprep.subr.mxu0 0.0
        %2439 = vmatpush1.msra.mxu0 0.0
        %2440 = vmatprep.subr.mxu0 0.0
        %2441 = vmatpush1.msra.mxu0 0.0
        %2442 = vmatprep.subr.mxu0 0.0
        %2443 = vmatpush1.msra.mxu0 0.0
        %2444 = vmatprep.subr.mxu0 0.0
        %2445 = vmatpush1.msra.mxu0 0.0
        %2446 = vmatprep.subr.mxu0 0.0
        %2447 = vmatpush1.msra.mxu0 0.0
        %2448 = vmatprep.subr.mxu0 0.0
        %2449 = vmatpush1.msra.mxu0 0.0
        %2450 = vmatprep.subr.mxu0 0.0
        %2451 = vmatpush1.msra.mxu0 0.0
        %2452 = vmatprep.subr.mxu0 0.0
        %2453 = vmatpush1.msra.mxu0 0.0
        %2454 = vmatprep.subr.mxu0 0.0
        %2455 = vmatpush1.msra.mxu0 0.0
        %2456 = vmatprep.subr.mxu0 0.0
        %2457 = vmatpush1.msra.mxu0 0.0
        %2458 = vmatprep.subr.mxu0 0.0
        %2459 = vmatpush1.msra.mxu0 0.0
        %2460 = vmatprep.subr.mxu0 0.0
        %2461 = vmatpush1.msra.mxu0 0.0
        %2462 = vmatprep.subr.mxu0 0.0
        %2463 = vmatpush1.msra.mxu0 0.0
        %2464 = vmatprep.subr.mxu0 0.0
        %2465 = vmatpush1.msra.mxu0 0.0
        %2466 = vmatprep.subr.mxu0 0.0
        %2467 = vmatpush1.msra.mxu0 0.0
        %2468 = vmatprep.mubr.f32.mxu0 0.0
        %2469 = vmatmul.mubr.f32.gmra.mrb[0].mxu0 %v2402
        %v2470 = vpop.f32.mrb[0].mxu0
        %v2471 = vadd.f32 0.0, %v2470
        %v2472 = vpop.f32.mrb[0].mxu0
        %2473 = vdwg.mxu0
        %2475 = vrot.lane.b32.xlu0 %v2471, 8
        %v2476 = vpop.permute.xlu0 %2475
        %v2478 = vsel %vm1319, %v2248, %v2476
        %v2479 = vld [vmem:[%s21] sm:$0xff]
        %v2480 = vld [vmem:[%s21 + $0x8] sm:$0xff]
        %v2481 = vld [vmem:[%s23] sm:$0x1]
        %v2483 = vlaneseq
        %v2484 = vshrl.u32 %v2483, 7
        %v2485 = vsub.s32 0, %v2484
        %v2486 = vrot.slane %v2481, %v2485
        %v2489 = vsel %vm1241, %v2478, 0
        %2491 = vmatprep.subr.mxu0 0.0
        %2492 = vmatpush1.msra.mxu0 %v2479
        %2493 = vmatprep.subr.mxu0 0.0
        %2494 = vmatpush1.msra.mxu0 %v2480
        %2495 = vmatprep.subr.mxu0 0.0
        %2496 = vmatpush1.msra.mxu0 0.0
        %2497 = vmatprep.subr.mxu0 0.0
        %2498 = vmatpush1.msra.mxu0 0.0
        %2499 = vmatprep.subr.mxu0 0.0
        %2500 = vmatpush1.msra.mxu0 0.0
        %2501 = vmatprep.subr.mxu0 0.0
        %2502 = vmatpush1.msra.mxu0 0.0
        %2503 = vmatprep.subr.mxu0 0.0
        %2504 = vmatpush1.msra.mxu0 0.0
        %2505 = vmatprep.subr.mxu0 0.0
        %2506 = vmatpush1.msra.mxu0 0.0
        %2507 = vmatprep.subr.mxu0 0.0
        %2508 = vmatpush1.msra.mxu0 0.0
        %2509 = vmatprep.subr.mxu0 0.0
        %2510 = vmatpush1.msra.mxu0 0.0
        %2511 = vmatprep.subr.mxu0 0.0
        %2512 = vmatpush1.msra.mxu0 0.0
        %2513 = vmatprep.subr.mxu0 0.0
        %2514 = vmatpush1.msra.mxu0 0.0
        %2515 = vmatprep.subr.mxu0 0.0
        %2516 = vmatpush1.msra.mxu0 0.0
        %2517 = vmatprep.subr.mxu0 0.0
        %2518 = vmatpush1.msra.mxu0 0.0
        %2519 = vmatprep.subr.mxu0 0.0
        %2520 = vmatpush1.msra.mxu0 0.0
        %2521 = vmatprep.subr.mxu0 0.0
        %2522 = vmatpush1.msra.mxu0 0.0
        %2523 = vmatprep.subr.mxu0 0.0
        %2524 = vmatpush1.msra.mxu0 0.0
        %2525 = vmatprep.subr.mxu0 0.0
        %2526 = vmatpush1.msra.mxu0 0.0
        %2527 = vmatprep.subr.mxu0 0.0
        %2528 = vmatpush1.msra.mxu0 0.0
        %2529 = vmatprep.subr.mxu0 0.0
        %2530 = vmatpush1.msra.mxu0 0.0
        %2531 = vmatprep.subr.mxu0 0.0
        %2532 = vmatpush1.msra.mxu0 0.0
        %2533 = vmatprep.subr.mxu0 0.0
        %2534 = vmatpush1.msra.mxu0 0.0
        %2535 = vmatprep.subr.mxu0 0.0
        %2536 = vmatpush1.msra.mxu0 0.0
        %2537 = vmatprep.subr.mxu0 0.0
        %2538 = vmatpush1.msra.mxu0 0.0
        %2539 = vmatprep.subr.mxu0 0.0
        %2540 = vmatpush1.msra.mxu0 0.0
        %2541 = vmatprep.subr.mxu0 0.0
        %2542 = vmatpush1.msra.mxu0 0.0
        %2543 = vmatprep.subr.mxu0 0.0
        %2544 = vmatpush1.msra.mxu0 0.0
        %2545 = vmatprep.subr.mxu0 0.0
        %2546 = vmatpush1.msra.mxu0 0.0
        %2547 = vmatprep.subr.mxu0 0.0
        %2548 = vmatpush1.msra.mxu0 0.0
        %2549 = vmatprep.subr.mxu0 0.0
        %2550 = vmatpush1.msra.mxu0 0.0
        %2551 = vmatprep.subr.mxu0 0.0
        %2552 = vmatpush1.msra.mxu0 0.0
        %2553 = vmatprep.subr.mxu0 0.0
        %2554 = vmatpush1.msra.mxu0 0.0
        %2555 = vmatprep.mubr.f32.mxu0 0.0
        %2556 = vmatmul.mubr.f32.gmra.mrb[0].mxu0 %v2489
        %v2557 = vpop.f32.mrb[0].mxu0
        %v2558 = vadd.f32 %v2486, %v2557
        %v2559 = vpop.f32.mrb[0].mxu0
        %2560 = vdwg.mxu0
        %v2561 = vadd.f32 %v1690, %v2558
        %v2562 = vld [vmem:[%s45] sm:$0x1]
        %v2563 = vld [vmem:[%s47] sm:$0x1]
        %v2564 = vsel %vm998, %v2561, 0.0
        %2565 = vadd.xlane.f32.xlu0 %v2564
        %v2566 = vpop.xlane.xlu0 %2565
        %v2567 = vmul.f32 %v2566, %v1666
        %v2568 = vsub.f32 %v2561, %v2567
        %v2569 = vmul.f32 %v2568, %v2568
        %v2570 = vsel %vm998, %v2569, 0.0
        %2571 = vadd.xlane.f32.xlu0 %v2570
        %v2572 = vpop.xlane.xlu0 %2571
        %v2573 = vmul.f32 %v2572, %v1666
        %v2574 = vadd.f32 %v2573, 1e-05
        %v2575 = vrsqrt.pop %v2574
        %v2576 = vmul.f32 %v2568, %v2575
        %v2578 = vlaneseq
        %v2579 = vshrl.u32 %v2578, 7
        %v2580 = vsub.s32 0, %v2579
        %v2581 = vrot.slane %v2562, %v2580
        %v2583 = vmul.f32 %v2576, %v2581
        %v2585 = vlaneseq
        %v2586 = vshrl.u32 %v2585, 7
        %v2587 = vsub.s32 0, %v2586
        %v2588 = vrot.slane %v2563, %v2587
        %v2590 = vadd.f32 %v2583, %v2588
        %v2591 = vld [vmem:[%s33] sm:$0xff]
        %v2592 = vld [vmem:[%s33 + $0x8] sm:$0xff]
        %v2593 = vld [vmem:[%s33 + $0x10] sm:$0xff]
        %v2594 = vld [vmem:[%s33 + $0x18] sm:$0xff]
        %v2595 = vld [vmem:[%s35] sm:$0x1]
        %v2597 = vlaneseq
        %v2598 = vshrl.u32 %v2597, 7
        %v2599 = vsub.s32 0, %v2598
        %v2600 = vrot.slane %v2595, %v2599
        %v2603 = vsel %vm998, %v2590, 0
        %2605 = vmatprep.subr.mxu0 0.0
        %2606 = vmatpush1.msra.mxu0 %v2591
        %2607 = vmatprep.subr.mxu0 0.0
        %2608 = vmatpush1.msra.mxu0 %v2592
        %2609 = vmatprep.subr.mxu0 0.0
        %2610 = vmatpush1.msra.mxu0 %v2593
        %2611 = vmatprep.subr.mxu0 0.0
        %2612 = vmatpush1.msra.mxu0 %v2594
        %2613 = vmatprep.subr.mxu0 0.0
        %2614 = vmatpush1.msra.mxu0 0.0
        %2615 = vmatprep.subr.mxu0 0.0
        %2616 = vmatpush1.msra.mxu0 0.0
        %2617 = vmatprep.subr.mxu0 0.0
        %2618 = vmatpush1.msra.mxu0 0.0
        %2619 = vmatprep.subr.mxu0 0.0
        %2620 = vmatpush1.msra.mxu0 0.0
        %2621 = vmatprep.subr.mxu0 0.0
        %2622 = vmatpush1.msra.mxu0 0.0
        %2623 = vmatprep.subr.mxu0 0.0
        %2624 = vmatpush1.msra.mxu0 0.0
        %2625 = vmatprep.subr.mxu0 0.0
        %2626 = vmatpush1.msra.mxu0 0.0
        %2627 = vmatprep.subr.mxu0 0.0
        %2628 = vmatpush1.msra.mxu0 0.0
        %2629 = vmatprep.subr.mxu0 0.0
        %2630 = vmatpush1.msra.mxu0 0.0
        %2631 = vmatprep.subr.mxu0 0.0
        %2632 = vmatpush1.msra.mxu0 0.0
        %2633 = vmatprep.subr.mxu0 0.0
        %2634 = vmatpush1.msra.mxu0 0.0
        %2635 = vmatprep.subr.mxu0 0.0
        %2636 = vmatpush1.msra.mxu0 0.0
        %2637 = vmatprep.subr.mxu0 0.0
        %2638 = vmatpush1.msra.mxu0 0.0
        %2639 = vmatprep.subr.mxu0 0.0
        %2640 = vmatpush1.msra.mxu0 0.0
        %2641 = vmatprep.subr.mxu0 0.0
        %2642 = vmatpush1.msra.mxu0 0.0
        %2643 = vmatprep.subr.mxu0 0.0
        %2644 = vmatpush1.msra.mxu0 0.0
        %2645 = vmatprep.subr.mxu0 0.0
        %2646 = vmatpush1.msra.mxu0 0.0
        %2647 = vmatprep.subr.mxu0 0.0
        %2648 = vmatpush1.msra.mxu0 0.0
        %2649 = vmatprep.subr.mxu0 0.0
        %2650 = vmatpush1.msra.mxu0 0.0
        %2651 = vmatprep.subr.mxu0 0.0
        %2652 = vmatpush1.msra.mxu0 0.0
        %2653 = vmatprep.subr.mxu0 0.0
        %2654 = vmatpush1.msra.mxu0 0.0
        %2655 = vmatprep.subr.mxu0 0.0
        %2656 = vmatpush1.msra.mxu0 0.0
        %2657 = vmatprep.subr.mxu0 0.0
        %2658 = vmatpush1.msra.mxu0 0.0
        %2659 = vmatprep.subr.mxu0 0.0
        %2660 = vmatpush1.msra.mxu0 0.0
        %2661 = vmatprep.subr.mxu0 0.0
        %2662 = vmatpush1.msra.mxu0 0.0
        %2663 = vmatprep.subr.mxu0 0.0
        %2664 = vmatpush1.msra.mxu0 0.0
        %2665 = vmatprep.subr.mxu0 0.0
        %2666 = vmatpush1.msra.mxu0 0.0
        %2667 = vmatprep.subr.mxu0 0.0
        %2668 = vmatpush1.msra.mxu0 0.0
        %2669 = vmatprep.mubr.f32.mxu0 0.0
        %2670 = vmatmul.mubr.f32.gmra.mrb[0].mxu0 %v2603
        %v2671 = vpop.f32.mrb[0].mxu0
        %v2672 = vadd.f32 %v2600, %v2671
        %v2673 = vpop.f32.mrb[0].mxu0
        %2674 = vdwg.mxu0
        %v2675 = vmax.f32 %v2672, 0.0
        %v2676 = vld [vmem:[%s37] sm:$0xff]
        %v2677 = vld [vmem:[%s37 + $0x8] sm:$0xff]
        %v2678 = vld [vmem:[%s37 + $0x10] sm:$0xff]
        %v2679 = vld [vmem:[%s37 + $0x18] sm:$0xff]
        %v2680 = vld [vmem:[%s37 + $0x20] sm:$0xff]
        %v2681 = vld [vmem:[%s37 + $0x28] sm:$0xff]
        %v2682 = vld [vmem:[%s37 + $0x30] sm:$0xff]
        %v2683 = vld [vmem:[%s37 + $0x38] sm:$0xff]
        %v2684 = vld [vmem:[%s39] sm:$0x1]
        %v2686 = vlaneseq
        %v2687 = vshrl.u32 %v2686, 7
        %v2688 = vsub.s32 0, %v2687
        %v2689 = vrot.slane %v2684, %v2688
        %v2692 = vsel %vm2166, %v2675, 0
        %2694 = vmatprep.subr.mxu0 0.0
        %2695 = vmatpush1.msra.mxu0 %v2676
        %2696 = vmatprep.subr.mxu0 0.0
        %2697 = vmatpush1.msra.mxu0 %v2677
        %2698 = vmatprep.subr.mxu0 0.0
        %2699 = vmatpush1.msra.mxu0 %v2678
        %2700 = vmatprep.subr.mxu0 0.0
        %2701 = vmatpush1.msra.mxu0 %v2679
        %2702 = vmatprep.subr.mxu0 0.0
        %2703 = vmatpush1.msra.mxu0 %v2680
        %2704 = vmatprep.subr.mxu0 0.0
        %2705 = vmatpush1.msra.mxu0 %v2681
        %2706 = vmatprep.subr.mxu0 0.0
        %2707 = vmatpush1.msra.mxu0 %v2682
        %2708 = vmatprep.subr.mxu0 0.0
        %2709 = vmatpush1.msra.mxu0 %v2683
        %2710 = vmatprep.subr.mxu0 0.0
        %2711 = vmatpush1.msra.mxu0 0.0
        %2712 = vmatprep.subr.mxu0 0.0
        %2713 = vmatpush1.msra.mxu0 0.0
        %2714 = vmatprep.subr.mxu0 0.0
        %2715 = vmatpush1.msra.mxu0 0.0
        %2716 = vmatprep.subr.mxu0 0.0
        %2717 = vmatpush1.msra.mxu0 0.0
        %2718 = vmatprep.subr.mxu0 0.0
        %2719 = vmatpush1.msra.mxu0 0.0
        %2720 = vmatprep.subr.mxu0 0.0
        %2721 = vmatpush1.msra.mxu0 0.0
        %2722 = vmatprep.subr.mxu0 0.0
        %2723 = vmatpush1.msra.mxu0 0.0
        %2724 = vmatprep.subr.mxu0 0.0
        %2725 = vmatpush1.msra.mxu0 0.0
        %2726 = vmatprep.subr.mxu0 0.0
        %2727 = vmatpush1.msra.mxu0 0.0
        %2728 = vmatprep.subr.mxu0 0.0
        %2729 = vmatpush1.msra.mxu0 0.0
        %2730 = vmatprep.subr.mxu0 0.0
        %2731 = vmatpush1.msra.mxu0 0.0
        %2732 = vmatprep.subr.mxu0 0.0
        %2733 = vmatpush1.msra.mxu0 0.0
        %2734 = vmatprep.subr.mxu0 0.0
        %2735 = vmatpush1.msra.mxu0 0.0
        %2736 = vmatprep.subr.mxu0 0.0
        %2737 = vmatpush1.msra.mxu0 0.0
        %2738 = vmatprep.subr.mxu0 0.0
        %2739 = vmatpush1.msra.mxu0 0.0
        %2740 = vmatprep.subr.mxu0 0.0
        %2741 = vmatpush1.msra.mxu0 0.0
        %2742 = vmatprep.subr.mxu0 0.0
        %2743 = vmatpush1.msra.mxu0 0.0
        %2744 = vmatprep.subr.mxu0 0.0
        %2745 = vmatpush1.msra.mxu0 0.0
        %2746 = vmatprep.subr.mxu0 0.0
        %2747 = vmatpush1.msra.mxu0 0.0
        %2748 = vmatprep.subr.mxu0 0.0
        %2749 = vmatpush1.msra.mxu0 0.0
        %2750 = vmatprep.subr.mxu0 0.0
        %2751 = vmatpush1.msra.mxu0 0.0
        %2752 = vmatprep.subr.mxu0 0.0
        %2753 = vmatpush1.msra.mxu0 0.0
        %2754 = vmatprep.subr.mxu0 0.0
        %2755 = vmatpush1.msra.mxu0 0.0
        %2756 = vmatprep.subr.mxu0 0.0
        %2757 = vmatpush1.msra.mxu0 0.0
        %2758 = vmatprep.mubr.f32.mxu0 0.0
        %2759 = vmatmul.mubr.f32.gmra.mrb[0].mxu0 %v2692
        %v2760 = vpop.f32.mrb[0].mxu0
        %v2761 = vadd.f32 %v2689, %v2760
        %v2762 = vpop.f32.mrb[0].mxu0
        %2763 = vdwg.mxu0
        %v2764 = vadd.f32 %v2590, %v2761
        %v2765 = vld [vmem:[%s49] sm:$0x1]
        %v2766 = vld [vmem:[%s51] sm:$0x1]
        %v2767 = vsel %vm998, %v2764, 0.0
        %2768 = vadd.xlane.f32.xlu0 %v2767
        %v2769 = vpop.xlane.xlu0 %2768
        %v2770 = vmul.f32 %v2769, %v1666
        %v2771 = vsub.f32 %v2764, %v2770
        %v2772 = vmul.f32 %v2771, %v2771
        %v2773 = vsel %vm998, %v2772, 0.0
        %2774 = vadd.xlane.f32.xlu0 %v2773
        %v2775 = vpop.xlane.xlu0 %2774
        %v2776 = vmul.f32 %v2775, %v1666
        %v2777 = vadd.f32 %v2776, 1e-05
        %v2778 = vrsqrt.pop %v2777
        %v2779 = vmul.f32 %v2771, %v2778
        %v2781 = vlaneseq
        %v2782 = vshrl.u32 %v2781, 7
        %v2783 = vsub.s32 0, %v2782
        %v2784 = vrot.slane %v2765, %v2783
        %v2786 = vmul.f32 %v2779, %v2784
        %v2788 = vlaneseq
        %v2789 = vshrl.u32 %v2788, 7
        %v2790 = vsub.s32 0, %v2789
        %v2791 = vrot.slane %v2766, %v2790
        %v2793 = vadd.f32 %v2786, %v2791
        %v2794 = vadd.f32 %v2793, %v977
        %v2795 = vld [vmem:[%s25] sm:$0xff]
        %v2796 = vld [vmem:[%s25 + $0x8] sm:$0xff]
        %v2797 = vld [vmem:[%s25 + $0x10] sm:$0xff]
        %v2798 = vld [vmem:[%s25 + $0x18] sm:$0xff]
        %v2799 = vld [vmem:[%s27] sm:$0x1]
        %v2801 = vlaneseq
        %v2802 = vshrl.u32 %v2801, 7
        %v2803 = vsub.s32 0, %v2802
        %v2804 = vrot.slane %v2799, %v2803
        %2806 = vmatprep.subr.mxu0 0.0
        %2807 = vmatpush1.msra.mxu0 %v2795
        %2808 = vmatprep.subr.mxu0 0.0
        %2809 = vmatpush1.msra.mxu0 %v2796
        %2810 = vmatprep.subr.mxu0 0.0
        %2811 = vmatpush1.msra.mxu0 %v2797
        %2812 = vmatprep.subr.mxu0 0.0
        %2813 = vmatpush1.msra.mxu0 %v2798
        %2814 = vmatprep.subr.mxu0 0.0
        %2815 = vmatpush1.msra.mxu0 0.0
        %2816 = vmatprep.subr.mxu0 0.0
        %2817 = vmatpush1.msra.mxu0 0.0
        %2818 = vmatprep.subr.mxu0 0.0
        %2819 = vmatpush1.msra.mxu0 0.0
        %2820 = vmatprep.subr.mxu0 0.0
        %2821 = vmatpush1.msra.mxu0 0.0
        %2822 = vmatprep.subr.mxu0 0.0
        %2823 = vmatpush1.msra.mxu0 0.0
        %2824 = vmatprep.subr.mxu0 0.0
        %2825 = vmatpush1.msra.mxu0 0.0
        %2826 = vmatprep.subr.mxu0 0.0
        %2827 = vmatpush1.msra.mxu0 0.0
        %2828 = vmatprep.subr.mxu0 0.0
        %2829 = vmatpush1.msra.mxu0 0.0
        %2830 = vmatprep.subr.mxu0 0.0
        %2831 = vmatpush1.msra.mxu0 0.0
        %2832 = vmatprep.subr.mxu0 0.0
        %2833 = vmatpush1.msra.mxu0 0.0
        %2834 = vmatprep.subr.mxu0 0.0
        %2835 = vmatpush1.msra.mxu0 0.0
        %2836 = vmatprep.subr.mxu0 0.0
        %2837 = vmatpush1.msra.mxu0 0.0
        %2838 = vmatprep.subr.mxu0 0.0
        %2839 = vmatpush1.msra.mxu0 0.0
        %2840 = vmatprep.subr.mxu0 0.0
        %2841 = vmatpush1.msra.mxu0 0.0
        %2842 = vmatprep.subr.mxu0 0.0
        %2843 = vmatpush1.msra.mxu0 0.0
        %2844 = vmatprep.subr.mxu0 0.0
        %2845 = vmatpush1.msra.mxu0 0.0
        %2846 = vmatprep.subr.mxu0 0.0
        %2847 = vmatpush1.msra.mxu0 0.0
        %2848 = vmatprep.subr.mxu0 0.0
        %2849 = vmatpush1.msra.mxu0 0.0
        %2850 = vmatprep.subr.mxu0 0.0
        %2851 = vmatpush1.msra.mxu0 0.0
        %2852 = vmatprep.subr.mxu0 0.0
        %2853 = vmatpush1.msra.mxu0 0.0
        %2854 = vmatprep.subr.mxu0 0.0
        %2855 = vmatpush1.msra.mxu0 0.0
        %2856 = vmatprep.subr.mxu0 0.0
        %2857 = vmatpush1.msra.mxu0 0.0
        %2858 = vmatprep.subr.mxu0 0.0
        %2859 = vmatpush1.msra.mxu0 0.0
        %2860 = vmatprep.subr.mxu0 0.0
        %2861 = vmatpush1.msra.mxu0 0.0
        %2862 = vmatprep.subr.mxu0 0.0
        %2863 = vmatpush1.msra.mxu0 0.0
        %2864 = vmatprep.subr.mxu0 0.0
        %2865 = vmatpush1.msra.mxu0 0.0
        %2866 = vmatprep.subr.mxu0 0.0
        %2867 = vmatpush1.msra.mxu0 0.0
        %2868 = vmatprep.subr.mxu0 0.0
        %2869 = vmatpush1.msra.mxu0 0.0
        %2870 = vmatprep.mubr.f32.mxu0 0.0
        %2871 = vmatmul.mubr.f32.gmra.mrb[0].mxu0 %v1798
        %v2872 = vpop.f32.mrb[0].mxu0
        %v2873 = vadd.f32 %v2804, %v2872
        %v2874 = vpop.f32.mrb[0].mxu0
        %2875 = vmatprep.mubr.f32.mxu0 0.0
        %2876 = vmatmul.mubr.f32.gmra.mrb[0].mxu0 %v1801
        %v2877 = vpop.f32.mrb[0].mxu0
        %v2878 = vadd.f32 %v2804, %v2877
        %v2879 = vpop.f32.mrb[0].mxu0
        %2880 = vmatprep.mubr.f32.mxu0 0.0
        %2881 = vmatmul.mubr.f32.gmra.mrb[0].mxu0 %v1804
        %v2882 = vpop.f32.mrb[0].mxu0
        %v2883 = vadd.f32 %v2804, %v2882
        %v2884 = vpop.f32.mrb[0].mxu0
        %2885 = vmatprep.mubr.f32.mxu0 0.0
        %2886 = vmatmul.mubr.f32.gmra.mrb[0].mxu0 %v1807
        %v2887 = vpop.f32.mrb[0].mxu0
        %v2888 = vadd.f32 %v2804, %v2887
        %v2889 = vpop.f32.mrb[0].mxu0
        %2890 = vmatprep.mubr.f32.mxu0 0.0
        %2891 = vmatmul.mubr.f32.gmra.mrb[0].mxu0 %v1810
        %v2892 = vpop.f32.mrb[0].mxu0
        %v2893 = vadd.f32 %v2804, %v2892
        %v2894 = vpop.f32.mrb[0].mxu0
        %2895 = vmatprep.mubr.f32.mxu0 0.0
        %2896 = vmatmul.mubr.f32.gmra.mrb[0].mxu0 %v1813
        %v2897 = vpop.f32.mrb[0].mxu0
        %v2898 = vadd.f32 %v2804, %v2897
        %v2899 = vpop.f32.mrb[0].mxu0
        %2900 = vmatprep.mubr.f32.mxu0 0.0
        %2901 = vmatmul.mubr.f32.gmra.mrb[0].mxu0 %v1816
        %v2902 = vpop.f32.mrb[0].mxu0
        %v2903 = vadd.f32 %v2804, %v2902
        %v2904 = vpop.f32.mrb[0].mxu0
        %2905 = vmatprep.mubr.f32.mxu0 0.0
        %2906 = vmatmul.mubr.f32.gmra.mrb[0].mxu0 %v1819
        %v2907 = vpop.f32.mrb[0].mxu0
        %v2908 = vadd.f32 %v2804, %v2907
        %v2909 = vpop.f32.mrb[0].mxu0
        %2910 = vdwg.mxu0
        %s2911 = scalar_lea.vmem %s25, 32
        %v2912 = vld [vmem:[%s2911] sm:$0xff]
        %v2913 = vld [vmem:[%s2911 + $0x8] sm:$0xff]
        %v2914 = vld [vmem:[%s2911 + $0x10] sm:$0xff]
        %v2915 = vld [vmem:[%s2911 + $0x18] sm:$0xff]
        %s2916 = scalar_lea.vmem %s27, 1
        %v2917 = vld [vmem:[%s2916] sm:$0x1]
        %v2919 = vlaneseq
        %v2920 = vshrl.u32 %v2919, 7
        %v2921 = vsub.s32 0, %v2920
        %v2922 = vrot.slane %v2917, %v2921
        %v2925 = vsel %vm998, %v2794, 0
        %2927 = vmatprep.subr.mxu0 0.0
        %2928 = vmatpush1.msra.mxu0 %v2912
        %2929 = vmatprep.subr.mxu0 0.0
        %2930 = vmatpush1.msra.mxu0 %v2913
        %2931 = vmatprep.subr.mxu0 0.0
        %2932 = vmatpush1.msra.mxu0 %v2914
        %2933 = vmatprep.subr.mxu0 0.0
        %2934 = vmatpush1.msra.mxu0 %v2915
        %2935 = vmatprep.subr.mxu0 0.0
        %2936 = vmatpush1.msra.mxu0 0.0
        %2937 = vmatprep.subr.mxu0 0.0
        %2938 = vmatpush1.msra.mxu0 0.0
        %2939 = vmatprep.subr.mxu0 0.0
        %2940 = vmatpush1.msra.mxu0 0.0
        %2941 = vmatprep.subr.mxu0 0.0
        %2942 = vmatpush1.msra.mxu0 0.0
        %2943 = vmatprep.subr.mxu0 0.0
        %2944 = vmatpush1.msra.mxu0 0.0
        %2945 = vmatprep.subr.mxu0 0.0
        %2946 = vmatpush1.msra.mxu0 0.0
        %2947 = vmatprep.subr.mxu0 0.0
        %2948 = vmatpush1.msra.mxu0 0.0
        %2949 = vmatprep.subr.mxu0 0.0
        %2950 = vmatpush1.msra.mxu0 0.0
        %2951 = vmatprep.subr.mxu0 0.0
        %2952 = vmatpush1.msra.mxu0 0.0
        %2953 = vmatprep.subr.mxu0 0.0
        %2954 = vmatpush1.msra.mxu0 0.0
        %2955 = vmatprep.subr.mxu0 0.0
        %2956 = vmatpush1.msra.mxu0 0.0
        %2957 = vmatprep.subr.mxu0 0.0
        %2958 = vmatpush1.msra.mxu0 0.0
        %2959 = vmatprep.subr.mxu0 0.0
        %2960 = vmatpush1.msra.mxu0 0.0
        %2961 = vmatprep.subr.mxu0 0.0
        %2962 = vmatpush1.msra.mxu0 0.0
        %2963 = vmatprep.subr.mxu0 0.0
        %2964 = vmatpush1.msra.mxu0 0.0
        %2965 = vmatprep.subr.mxu0 0.0
        %2966 = vmatpush1.msra.mxu0 0.0
        %2967 = vmatprep.subr.mxu0 0.0
        %2968 = vmatpush1.msra.mxu0 0.0
        %2969 = vmatprep.subr.mxu0 0.0
        %2970 = vmatpush1.msra.mxu0 0.0
        %2971 = vmatprep.subr.mxu0 0.0
        %2972 = vmatpush1.msra.mxu0 0.0
        %2973 = vmatprep.subr.mxu0 0.0
        %2974 = vmatpush1.msra.mxu0 0.0
        %2975 = vmatprep.subr.mxu0 0.0
        %2976 = vmatpush1.msra.mxu0 0.0
        %2977 = vmatprep.subr.mxu0 0.0
        %2978 = vmatpush1.msra.mxu0 0.0
        %2979 = vmatprep.subr.mxu0 0.0
        %2980 = vmatpush1.msra.mxu0 0.0
        %2981 = vmatprep.subr.mxu0 0.0
        %2982 = vmatpush1.msra.mxu0 0.0
        %2983 = vmatprep.subr.mxu0 0.0
        %2984 = vmatpush1.msra.mxu0 0.0
        %2985 = vmatprep.subr.mxu0 0.0
        %2986 = vmatpush1.msra.mxu0 0.0
        %2987 = vmatprep.subr.mxu0 0.0
        %2988 = vmatpush1.msra.mxu0 0.0
        %2989 = vmatprep.subr.mxu0 0.0
        %2990 = vmatpush1.msra.mxu0 0.0
        %2991 = vmatprep.mubr.f32.mxu0 0.0
        %2992 = vmatmul.mubr.f32.gmra.mrb[0].mxu0 %v2925
        %v2993 = vpop.f32.mrb[0].mxu0
        %v2994 = vadd.f32 %v2922, %v2993
        %v2995 = vpop.f32.mrb[0].mxu0
        %2996 = vdwg.mxu0
        %s2997 = scalar_lea.vmem %s25, 64
        %v2998 = vld [vmem:[%s2997] sm:$0xff]
        %v2999 = vld [vmem:[%s2997 + $0x8] sm:$0xff]
        %v3000 = vld [vmem:[%s2997 + $0x10] sm:$0xff]
        %v3001 = vld [vmem:[%s2997 + $0x18] sm:$0xff]
        %s3002 = scalar_lea.vmem %s27, 2
        %v3003 = vld [vmem:[%s3002] sm:$0x1]
        %v3005 = vlaneseq
        %v3006 = vshrl.u32 %v3005, 7
        %v3007 = vsub.s32 0, %v3006
        %v3008 = vrot.slane %v3003, %v3007
        %v3011 = vsel %vm998, %v2793, 0
        %3013 = vmatprep.subr.mxu0 0.0
        %3014 = vmatpush1.msra.mxu0 %v2998
        %3015 = vmatprep.subr.mxu0 0.0
        %3016 = vmatpush1.msra.mxu0 %v2999
        %3017 = vmatprep.subr.mxu0 0.0
        %3018 = vmatpush1.msra.mxu0 %v3000
        %3019 = vmatprep.subr.mxu0 0.0
        %3020 = vmatpush1.msra.mxu0 %v3001
        %3021 = vmatprep.subr.mxu0 0.0
        %3022 = vmatpush1.msra.mxu0 0.0
        %3023 = vmatprep.subr.mxu0 0.0
        %3024 = vmatpush1.msra.mxu0 0.0
        %3025 = vmatprep.subr.mxu0 0.0
        %3026 = vmatpush1.msra.mxu0 0.0
        %3027 = vmatprep.subr.mxu0 0.0
        %3028 = vmatpush1.msra.mxu0 0.0
        %3029 = vmatprep.subr.mxu0 0.0
        %3030 = vmatpush1.msra.mxu0 0.0
        %3031 = vmatprep.subr.mxu0 0.0
        %3032 = vmatpush1.msra.mxu0 0.0
        %3033 = vmatprep.subr.mxu0 0.0
        %3034 = vmatpush1.msra.mxu0 0.0
        %3035 = vmatprep.subr.mxu0 0.0
        %3036 = vmatpush1.msra.mxu0 0.0
        %3037 = vmatprep.subr.mxu0 0.0
        %3038 = vmatpush1.msra.mxu0 0.0
        %3039 = vmatprep.subr.mxu0 0.0
        %3040 = vmatpush1.msra.mxu0 0.0
        %3041 = vmatprep.subr.mxu0 0.0
        %3042 = vmatpush1.msra.mxu0 0.0
        %3043 = vmatprep.subr.mxu0 0.0
        %3044 = vmatpush1.msra.mxu0 0.0
        %3045 = vmatprep.subr.mxu0 0.0
        %3046 = vmatpush1.msra.mxu0 0.0
        %3047 = vmatprep.subr.mxu0 0.0
        %3048 = vmatpush1.msra.mxu0 0.0
        %3049 = vmatprep.subr.mxu0 0.0
        %3050 = vmatpush1.msra.mxu0 0.0
        %3051 = vmatprep.subr.mxu0 0.0
        %3052 = vmatpush1.msra.mxu0 0.0
        %3053 = vmatprep.subr.mxu0 0.0
        %3054 = vmatpush1.msra.mxu0 0.0
        %3055 = vmatprep.subr.mxu0 0.0
        %3056 = vmatpush1.msra.mxu0 0.0
        %3057 = vmatprep.subr.mxu0 0.0
        %3058 = vmatpush1.msra.mxu0 0.0
        %3059 = vmatprep.subr.mxu0 0.0
        %3060 = vmatpush1.msra.mxu0 0.0
        %3061 = vmatprep.subr.mxu0 0.0
        %3062 = vmatpush1.msra.mxu0 0.0
        %3063 = vmatprep.subr.mxu0 0.0
        %3064 = vmatpush1.msra.mxu0 0.0
        %3065 = vmatprep.subr.mxu0 0.0
        %3066 = vmatpush1.msra.mxu0 0.0
        %3067 = vmatprep.subr.mxu0 0.0
        %3068 = vmatpush1.msra.mxu0 0.0
        %3069 = vmatprep.subr.mxu0 0.0
        %3070 = vmatpush1.msra.mxu0 0.0
        %3071 = vmatprep.subr.mxu0 0.0
        %3072 = vmatpush1.msra.mxu0 0.0
        %3073 = vmatprep.subr.mxu0 0.0
        %3074 = vmatpush1.msra.mxu0 0.0
        %3075 = vmatprep.subr.mxu0 0.0
        %3076 = vmatpush1.msra.mxu0 0.0
        %3077 = vmatprep.mubr.f32.mxu0 0.0
        %3078 = vmatmul.mubr.f32.gmra.mrb[0].mxu0 %v3011
        %v3079 = vpop.f32.mrb[0].mxu0
        %v3080 = vadd.f32 %v3008, %v3079
        %v3081 = vpop.f32.mrb[0].mxu0
        %3082 = vdwg.mxu0
        %v3084 = vsel %vm1319, %v2873, 0
        %v3087 = vsel %vm1319, %v2878, 0
        %v3090 = vsel %vm1319, %v2883, 0
        %v3093 = vsel %vm1319, %v2888, 0
        %v3096 = vsel %vm1319, %v2893, 0
        %v3099 = vsel %vm1319, %v2898, 0
        %v3102 = vsel %vm1319, %v2903, 0
        %v3105 = vsel %vm1319, %v2908, 0
        %v3108 = vsel %vm1319, %v2994, 0
        %3110 = vmatprep.subr.mxu0 0.0
        %3111 = vmatpush1.xpose.msra.mxu0 %v3108
        %3112 = vmatprep.subr.mxu0 0.0
        %3113 = vmatpush1.xpose.msra.mxu0 0.0
        %3114 = vmatprep.subr.mxu0 0.0
        %3115 = vmatpush1.xpose.msra.mxu0 0.0
        %3116 = vmatprep.subr.mxu0 0.0
        %3117 = vmatpush1.xpose.msra.mxu0 0.0
        %3118 = vmatprep.subr.mxu0 0.0
        %3119 = vmatpush1.xpose.msra.mxu0 0.0
        %3120 = vmatprep.subr.mxu0 0.0
        %3121 = vmatpush1.xpose.msra.mxu0 0.0
        %3122 = vmatprep.subr.mxu0 0.0
        %3123 = vmatpush1.xpose.msra.mxu0 0.0
        %3124 = vmatprep.subr.mxu0 0.0
        %3125 = vmatpush1.xpose.msra.mxu0 0.0
        %3126 = vmatprep.subr.mxu0 0.0
        %3127 = vmatpush1.xpose.msra.mxu0 0.0
        %3128 = vmatprep.subr.mxu0 0.0
        %3129 = vmatpush1.xpose.msra.mxu0 0.0
        %3130 = vmatprep.subr.mxu0 0.0
        %3131 = vmatpush1.xpose.msra.mxu0 0.0
        %3132 = vmatprep.subr.mxu0 0.0
        %3133 = vmatpush1.xpose.msra.mxu0 0.0
        %3134 = vmatprep.subr.mxu0 0.0
        %3135 = vmatpush1.xpose.msra.mxu0 0.0
        %3136 = vmatprep.subr.mxu0 0.0
        %3137 = vmatpush1.xpose.msra.mxu0 0.0
        %3138 = vmatprep.subr.mxu0 0.0
        %3139 = vmatpush1.xpose.msra.mxu0 0.0
        %3140 = vmatprep.subr.mxu0 0.0
        %3141 = vmatpush1.xpose.msra.mxu0 0.0
        %3142 = vmatprep.subr.mxu0 0.0
        %3143 = vmatpush1.xpose.msra.mxu0 0.0
        %3144 = vmatprep.subr.mxu0 0.0
        %3145 = vmatpush1.xpose.msra.mxu0 0.0
        %3146 = vmatprep.subr.mxu0 0.0
        %3147 = vmatpush1.xpose.msra.mxu0 0.0
        %3148 = vmatprep.subr.mxu0 0.0
        %3149 = vmatpush1.xpose.msra.mxu0 0.0
        %3150 = vmatprep.subr.mxu0 0.0
        %3151 = vmatpush1.xpose.msra.mxu0 0.0
        %3152 = vmatprep.subr.mxu0 0.0
        %3153 = vmatpush1.xpose.msra.mxu0 0.0
        %3154 = vmatprep.subr.mxu0 0.0
        %3155 = vmatpush1.xpose.msra.mxu0 0.0
        %3156 = vmatprep.subr.mxu0 0.0
        %3157 = vmatpush1.xpose.msra.mxu0 0.0
        %3158 = vmatprep.subr.mxu0 0.0
        %3159 = vmatpush1.xpose.msra.mxu0 0.0
        %3160 = vmatprep.subr.mxu0 0.0
        %3161 = vmatpush1.xpose.msra.mxu0 0.0
        %3162 = vmatprep.subr.mxu0 0.0
        %3163 = vmatpush1.xpose.msra.mxu0 0.0
        %3164 = vmatprep.subr.mxu0 0.0
        %3165 = vmatpush1.xpose.msra.mxu0 0.0
        %3166 = vmatprep.subr.mxu0 0.0
        %3167 = vmatpush1.xpose.msra.mxu0 0.0
        %3168 = vmatprep.subr.mxu0 0.0
        %3169 = vmatpush1.xpose.msra.mxu0 0.0
        %3170 = vmatprep.subr.mxu0 0.0
        %3171 = vmatpush1.xpose.msra.mxu0 0.0
        %3172 = vmatprep.subr.mxu0 0.0
        %3173 = vmatpush1.xpose.msra.mxu0 0.0
        %3174 = vmatprep.mubr.f32.mxu0 0.0
        %3175 = vmatmul.mubr.f32.gmra.mrb[0].mxu0 %v3084
        %v3176 = vpop.f32.mrb[0].mxu0
        %v3177 = vadd.f32 0.0, %v3176
        %v3178 = vpop.f32.mrb[0].mxu0
        %3179 = vmatprep.mubr.f32.mxu0 0.0
        %3180 = vmatmul.mubr.f32.gmra.mrb[0].mxu0 %v3087
        %v3181 = vpop.f32.mrb[0].mxu0
        %v3182 = vadd.f32 0.0, %v3181
        %v3183 = vpop.f32.mrb[0].mxu0
        %3184 = vmatprep.mubr.f32.mxu0 0.0
        %3185 = vmatmul.mubr.f32.gmra.mrb[0].mxu0 %v3090
        %v3186 = vpop.f32.mrb[0].mxu0
        %v3187 = vadd.f32 0.0, %v3186
        %v3188 = vpop.f32.mrb[0].mxu0
        %3189 = vmatprep.mubr.f32.mxu0 0.0
        %3190 = vmatmul.mubr.f32.gmra.mrb[0].mxu0 %v3093
        %v3191 = vpop.f32.mrb[0].mxu0
        %v3192 = vadd.f32 0.0, %v3191
        %v3193 = vpop.f32.mrb[0].mxu0
        %3194 = vmatprep.mubr.f32.mxu0 0.0
        %3195 = vmatmul.mubr.f32.gmra.mrb[0].mxu0 %v3096
        %v3196 = vpop.f32.mrb[0].mxu0
        %v3197 = vadd.f32 0.0, %v3196
        %v3198 = vpop.f32.mrb[0].mxu0
        %3199 = vmatprep.mubr.f32.mxu0 0.0
        %3200 = vmatmul.mubr.f32.gmra.mrb[0].mxu0 %v3099
        %v3201 = vpop.f32.mrb[0].mxu0
        %v3202 = vadd.f32 0.0, %v3201
        %v3203 = vpop.f32.mrb[0].mxu0
        %3204 = vmatprep.mubr.f32.mxu0 0.0
        %3205 = vmatmul.mubr.f32.gmra.mrb[0].mxu0 %v3102
        %v3206 = vpop.f32.mrb[0].mxu0
        %v3207 = vadd.f32 0.0, %v3206
        %v3208 = vpop.f32.mrb[0].mxu0
        %3209 = vmatprep.mubr.f32.mxu0 0.0
        %3210 = vmatmul.mubr.f32.gmra.mrb[0].mxu0 %v3105
        %v3211 = vpop.f32.mrb[0].mxu0
        %v3212 = vadd.f32 0.0, %v3211
        %v3213 = vpop.f32.mrb[0].mxu0
        %3214 = vdwg.mxu0
        %v3215 = vmul.f32 %v3177, 0.35355338
        %v3216 = vmul.f32 %v3182, 0.35355338
        %v3217 = vmul.f32 %v3187, 0.35355338
        %v3218 = vmul.f32 %v3192, 0.35355338
        %v3219 = vmul.f32 %v3197, 0.35355338
        %v3220 = vmul.f32 %v3202, 0.35355338
        %v3221 = vmul.f32 %v3207, 0.35355338
        %v3222 = vmul.f32 %v3212, 0.35355338
        %v3223 = vsel %vm1319, %v3215, -inf
        %3224 = vmax.xlane.f32.xlu0 %v3223
        %v3225 = vpop.xlane.xlu0 %3224
        %v3226 = vsel %vm1319, %v3216, -inf
        %3227 = vmax.xlane.f32.xlu0 %v3226
        %v3228 = vpop.xlane.xlu0 %3227
        %v3229 = vsel %vm1319, %v3217, -inf
        %3230 = vmax.xlane.f32.xlu0 %v3229
        %v3231 = vpop.xlane.xlu0 %3230
        %v3232 = vsel %vm1319, %v3218, -inf
        %3233 = vmax.xlane.f32.xlu0 %v3232
        %v3234 = vpop.xlane.xlu0 %3233
        %v3235 = vsel %vm1319, %v3219, -inf
        %3236 = vmax.xlane.f32.xlu0 %v3235
        %v3237 = vpop.xlane.xlu0 %3236
        %v3238 = vsel %vm1319, %v3220, -inf
        %3239 = vmax.xlane.f32.xlu0 %v3238
        %v3240 = vpop.xlane.xlu0 %3239
        %v3241 = vsel %vm1319, %v3221, -inf
        %3242 = vmax.xlane.f32.xlu0 %v3241
        %v3243 = vpop.xlane.xlu0 %3242
        %v3244 = vsel %vm1319, %v3222, -inf
        %3245 = vmax.xlane.f32.xlu0 %v3244
        %v3246 = vpop.xlane.xlu0 %3245
        %v3247 = vsub.f32 %v3215, %v3225
        %v3248 = vsub.f32 %v3216, %v3228
        %v3249 = vsub.f32 %v3217, %v3231
        %v3250 = vsub.f32 %v3218, %v3234
        %v3251 = vsub.f32 %v3219, %v3237
        %v3252 = vsub.f32 %v3220, %v3240
        %v3253 = vsub.f32 %v3221, %v3243
        %v3254 = vsub.f32 %v3222, %v3246
        %v3255 = vmul.f32 %v3247, 1.442695
        %v3256 = vpow.pop %v3255
        %v3257 = vmul.f32 %v3248, 1.442695
        %v3258 = vpow.pop %v3257
        %v3259 = vmul.f32 %v3249, 1.442695
        %v3260 = vpow.pop %v3259
        %v3261 = vmul.f32 %v3250, 1.442695
        %v3262 = vpow.pop %v3261
        %v3263 = vmul.f32 %v3251, 1.442695
        %v3264 = vpow.pop %v3263
        %v3265 = vmul.f32 %v3252, 1.442695
        %v3266 = vpow.pop %v3265
        %v3267 = vmul.f32 %v3253, 1.442695
        %v3268 = vpow.pop %v3267
        %v3269 = vmul.f32 %v3254, 1.442695
        %v3270 = vpow.pop %v3269
        %v3271 = vsel %vm1319, %v3256, 0.0
        %3272 = vadd.xlane.f32.xlu0 %v3271
        %v3273 = vpop.xlane.xlu0 %3272
        %v3274 = vsel %vm1319, %v3258, 0.0
        %3275 = vadd.xlane.f32.xlu0 %v3274
        %v3276 = vpop.xlane.xlu0 %3275
        %v3277 = vsel %vm1319, %v3260, 0.0
        %3278 = vadd.xlane.f32.xlu0 %v3277
        %v3279 = vpop.xlane.xlu0 %3278
        %v3280 = vsel %vm1319, %v3262, 0.0
        %3281 = vadd.xlane.f32.xlu0 %v3280
        %v3282 = vpop.xlane.xlu0 %3281
        %v3283 = vsel %vm1319, %v3264, 0.0
        %3284 = vadd.xlane.f32.xlu0 %v3283
        %v3285 = vpop.xlane.xlu0 %3284
        %v3286 = vsel %vm1319, %v3266, 0.0
        %3287 = vadd.xlane.f32.xlu0 %v3286
        %v3288 = vpop.xlane.xlu0 %3287
        %v3289 = vsel %vm1319, %v3268, 0.0
        %3290 = vadd.xlane.f32.xlu0 %v3289
        %v3291 = vpop.xlane.xlu0 %3290
        %v3292 = vsel %vm1319, %v3270, 0.0
        %3293 = vadd.xlane.f32.xlu0 %v3292
        %v3294 = vpop.xlane.xlu0 %3293
        %v3295 = vrcp.pop %v3273
        %v3296 = vrcp.pop %v3276
        %v3297 = vrcp.pop %v3279
        %v3298 = vrcp.pop %v3282
        %v3299 = vrcp.pop %v3285
        %v3300 = vrcp.pop %v3288
        %v3301 = vrcp.pop %v3291
        %v3302 = vrcp.pop %v3294
        %v3303 = vmul.f32 %v3256, %v3295
        %v3304 = vmul.f32 %v3258, %v3296
        %v3305 = vmul.f32 %v3260, %v3297
        %v3306 = vmul.f32 %v3262, %v3298
        %v3307 = vmul.f32 %v3264, %v3299
        %v3308 = vmul.f32 %v3266, %v3300
        %v3309 = vmul.f32 %v3268, %v3301
        %v3310 = vmul.f32 %v3270, %v3302
        %v3312 = vsel %vm1319, %v3303, 0
        %v3315 = vsel %vm1319, %v3304, 0
        %v3318 = vsel %vm1319, %v3305, 0
        %v3321 = vsel %vm1319, %v3306, 0
        %v3324 = vsel %vm1319, %v3307, 0
        %v3327 = vsel %vm1319, %v3308, 0
        %v3330 = vsel %vm1319, %v3309, 0
        %v3333 = vsel %vm1319, %v3310, 0
        %3335 = vmatprep.subr.mxu0 0.0
        %3336 = vmatpush1.msra.mxu0 %v3080
        %3337 = vmatprep.subr.mxu0 0.0
        %3338 = vmatpush1.msra.mxu0 0.0
        %3339 = vmatprep.subr.mxu0 0.0
        %3340 = vmatpush1.msra.mxu0 0.0
        %3341 = vmatprep.subr.mxu0 0.0
        %3342 = vmatpush1.msra.mxu0 0.0
        %3343 = vmatprep.subr.mxu0 0.0
        %3344 = vmatpush1.msra.mxu0 0.0
        %3345 = vmatprep.subr.mxu0 0.0
        %3346 = vmatpush1.msra.mxu0 0.0
        %3347 = vmatprep.subr.mxu0 0.0
        %3348 = vmatpush1.msra.mxu0 0.0
        %3349 = vmatprep.subr.mxu0 0.0
        %3350 = vmatpush1.msra.mxu0 0.0
        %3351 = vmatprep.subr.mxu0 0.0
        %3352 = vmatpush1.msra.mxu0 0.0
        %3353 = vmatprep.subr.mxu0 0.0
        %3354 = vmatpush1.msra.mxu0 0.0
        %3355 = vmatprep.subr.mxu0 0.0
        %3356 = vmatpush1.msra.mxu0 0.0
        %3357 = vmatprep.subr.mxu0 0.0
        %3358 = vmatpush1.msra.mxu0 0.0
        %3359 = vmatprep.subr.mxu0 0.0
        %3360 = vmatpush1.msra.mxu0 0.0
        %3361 = vmatprep.subr.mxu0 0.0
        %3362 = vmatpush1.msra.mxu0 0.0
        %3363 = vmatprep.subr.mxu0 0.0
        %3364 = vmatpush1.msra.mxu0 0.0
        %3365 = vmatprep.subr.mxu0 0.0
        %3366 = vmatpush1.msra.mxu0 0.0
        %3367 = vmatprep.subr.mxu0 0.0
        %3368 = vmatpush1.msra.mxu0 0.0
        %3369 = vmatprep.subr.mxu0 0.0
        %3370 = vmatpush1.msra.mxu0 0.0
        %3371 = vmatprep.subr.mxu0 0.0
        %3372 = vmatpush1.msra.mxu0 0.0
        %3373 = vmatprep.subr.mxu0 0.0
        %3374 = vmatpush1.msra.mxu0 0.0
        %3375 = vmatprep.subr.mxu0 0.0
        %3376 = vmatpush1.msra.mxu0 0.0
        %3377 = vmatprep.subr.mxu0 0.0
        %3378 = vmatpush1.msra.mxu0 0.0
        %3379 = vmatprep.subr.mxu0 0.0
        %3380 = vmatpush1.msra.mxu0 0.0
        %3381 = vmatprep.subr.mxu0 0.0
        %3382 = vmatpush1.msra.mxu0 0.0
        %3383 = vmatprep.subr.mxu0 0.0
        %3384 = vmatpush1.msra.mxu0 0.0
        %3385 = vmatprep.subr.mxu0 0.0
        %3386 = vmatpush1.msra.mxu0 0.0
        %3387 = vmatprep.subr.mxu0 0.0
        %3388 = vmatpush1.msra.mxu0 0.0
        %3389 = vmatprep.subr.mxu0 0.0
        %3390 = vmatpush1.msra.mxu0 0.0
        %3391 = vmatprep.subr.mxu0 0.0
        %3392 = vmatpush1.msra.mxu0 0.0
        %3393 = vmatprep.subr.mxu0 0.0
        %3394 = vmatpush1.msra.mxu0 0.0
        %3395 = vmatprep.subr.mxu0 0.0
        %3396 = vmatpush1.msra.mxu0 0.0
        %3397 = vmatprep.subr.mxu0 0.0
        %3398 = vmatpush1.msra.mxu0 0.0
        %3399 = vmatprep.mubr.f32.mxu0 0.0
        %3400 = vmatmul.mubr.f32.gmra.mrb[0].mxu0 %v3312
        %v3401 = vpop.f32.mrb[0].mxu0
        %v3402 = vadd.f32 0.0, %v3401
        %v3403 = vpop.f32.mrb[0].mxu0
        %3404 = vmatprep.mubr.f32.mxu0 0.0
        %3405 = vmatmul.mubr.f32.gmra.mrb[0].mxu0 %v3315
        %v3406 = vpop.f32.mrb[0].mxu0
        %v3407 = vadd.f32 0.0, %v3406
        %v3408 = vpop.f32.mrb[0].mxu0
        %3409 = vmatprep.mubr.f32.mxu0 0.0
        %3410 = vmatmul.mubr.f32.gmra.mrb[0].mxu0 %v3318
        %v3411 = vpop.f32.mrb[0].mxu0
        %v3412 = vadd.f32 0.0, %v3411
        %v3413 = vpop.f32.mrb[0].mxu0
        %3414 = vmatprep.mubr.f32.mxu0 0.0
        %3415 = vmatmul.mubr.f32.gmra.mrb[0].mxu0 %v3321
        %v3416 = vpop.f32.mrb[0].mxu0
        %v3417 = vadd.f32 0.0, %v3416
        %v3418 = vpop.f32.mrb[0].mxu0
        %3419 = vmatprep.mubr.f32.mxu0 0.0
        %3420 = vmatmul.mubr.f32.gmra.mrb[0].mxu0 %v3324
        %v3421 = vpop.f32.mrb[0].mxu0
        %v3422 = vadd.f32 0.0, %v3421
        %v3423 = vpop.f32.mrb[0].mxu0
        %3424 = vmatprep.mubr.f32.mxu0 0.0
        %3425 = vmatmul.mubr.f32.gmra.mrb[0].mxu0 %v3327
        %v3426 = vpop.f32.mrb[0].mxu0
        %v3427 = vadd.f32 0.0, %v3426
        %v3428 = vpop.f32.mrb[0].mxu0
        %3429 = vmatprep.mubr.f32.mxu0 0.0
        %3430 = vmatmul.mubr.f32.gmra.mrb[0].mxu0 %v3330
        %v3431 = vpop.f32.mrb[0].mxu0
        %v3432 = vadd.f32 0.0, %v3431
        %v3433 = vpop.f32.mrb[0].mxu0
        %3434 = vmatprep.mubr.f32.mxu0 0.0
        %3435 = vmatmul.mubr.f32.gmra.mrb[0].mxu0 %v3333
        %v3436 = vpop.f32.mrb[0].mxu0
        %v3437 = vadd.f32 0.0, %v3436
        %v3438 = vpop.f32.mrb[0].mxu0
        %3439 = vdwg.mxu0
        %3440 = vrot.lane.b32.xlu0 %v2873, 120
        %v3441 = vpop.permute.xlu0 %3440
        %3442 = vrot.lane.b32.xlu0 %v2878, 120
        %v3443 = vpop.permute.xlu0 %3442
        %3444 = vrot.lane.b32.xlu0 %v2883, 120
        %v3445 = vpop.permute.xlu0 %3444
        %3446 = vrot.lane.b32.xlu0 %v2888, 120
        %v3447 = vpop.permute.xlu0 %3446
        %3448 = vrot.lane.b32.xlu0 %v2893, 120
        %v3449 = vpop.permute.xlu0 %3448
        %3450 = vrot.lane.b32.xlu0 %v2898, 120
        %v3451 = vpop.permute.xlu0 %3450
        %3452 = vrot.lane.b32.xlu0 %v2903, 120
        %v3453 = vpop.permute.xlu0 %3452
        %3454 = vrot.lane.b32.xlu0 %v2908, 120
        %v3455 = vpop.permute.xlu0 %3454
        %3456 = vrot.lane.b32.xlu0 %v2994, 120
        %v3457 = vpop.permute.xlu0 %3456
        %v3458 = vsel %vm1319, %v3441, 0
        %v3460 = vsel %vm1319, %v3443, 0
        %v3462 = vsel %vm1319, %v3445, 0
        %v3464 = vsel %vm1319, %v3447, 0
        %v3466 = vsel %vm1319, %v3449, 0
        %v3468 = vsel %vm1319, %v3451, 0
        %v3470 = vsel %vm1319, %v3453, 0
        %v3472 = vsel %vm1319, %v3455, 0
        %v3474 = vsel %vm1319, %v3457, 0
        %3476 = vmatprep.subr.mxu0 0.0
        %3477 = vmatpush1.xpose.msra.mxu0 %v3474
        %3478 = vmatprep.subr.mxu0 0.0
        %3479 = vmatpush1.xpose.msra.mxu0 0.0
        %3480 = vmatprep.subr.mxu0 0.0
        %3481 = vmatpush1.xpose.msra.mxu0 0.0
        %3482 = vmatprep.subr.mxu0 0.0
        %3483 = vmatpush1.xpose.msra.mxu0 0.0
        %3484 = vmatprep.subr.mxu0 0.0
        %3485 = vmatpush1.xpose.msra.mxu0 0.0
        %3486 = vmatprep.subr.mxu0 0.0
        %3487 = vmatpush1.xpose.msra.mxu0 0.0
        %3488 = vmatprep.subr.mxu0 0.0
        %3489 = vmatpush1.xpose.msra.mxu0 0.0
        %3490 = vmatprep.subr.mxu0 0.0
        %3491 = vmatpush1.xpose.msra.mxu0 0.0
        %3492 = vmatprep.subr.mxu0 0.0
        %3493 = vmatpush1.xpose.msra.mxu0 0.0
        %3494 = vmatprep.subr.mxu0 0.0
        %3495 = vmatpush1.xpose.msra.mxu0 0.0
        %3496 = vmatprep.subr.mxu0 0.0
        %3497 = vmatpush1.xpose.msra.mxu0 0.0
        %3498 = vmatprep.subr.mxu0 0.0
        %3499 = vmatpush1.xpose.msra.mxu0 0.0
        %3500 = vmatprep.subr.mxu0 0.0
        %3501 = vmatpush1.xpose.msra.mxu0 0.0
        %3502 = vmatprep.subr.mxu0 0.0
        %3503 = vmatpush1.xpose.msra.mxu0 0.0
        %3504 = vmatprep.subr.mxu0 0.0
        %3505 = vmatpush1.xpose.msra.mxu0 0.0
        %3506 = vmatprep.subr.mxu0 0.0
        %3507 = vmatpush1.xpose.msra.mxu0 0.0
        %3508 = vmatprep.subr.mxu0 0.0
        %3509 = vmatpush1.xpose.msra.mxu0 0.0
        %3510 = vmatprep.subr.mxu0 0.0
        %3511 = vmatpush1.xpose.msra.mxu0 0.0
        %3512 = vmatprep.subr.mxu0 0.0
        %3513 = vmatpush1.xpose.msra.mxu0 0.0
        %3514 = vmatprep.subr.mxu0 0.0
        %3515 = vmatpush1.xpose.msra.mxu0 0.0
        %3516 = vmatprep.subr.mxu0 0.0
        %3517 = vmatpush1.xpose.msra.mxu0 0.0
        %3518 = vmatprep.subr.mxu0 0.0
        %3519 = vmatpush1.xpose.msra.mxu0 0.0
        %3520 = vmatprep.subr.mxu0 0.0
        %3521 = vmatpush1.xpose.msra.mxu0 0.0
        %3522 = vmatprep.subr.mxu0 0.0
        %3523 = vmatpush1.xpose.msra.mxu0 0.0
        %3524 = vmatprep.subr.mxu0 0.0
        %3525 = vmatpush1.xpose.msra.mxu0 0.0
        %3526 = vmatprep.subr.mxu0 0.0
        %3527 = vmatpush1.xpose.msra.mxu0 0.0
        %3528 = vmatprep.subr.mxu0 0.0
        %3529 = vmatpush1.xpose.msra.mxu0 0.0
        %3530 = vmatprep.subr.mxu0 0.0
        %3531 = vmatpush1.xpose.msra.mxu0 0.0
        %3532 = vmatprep.subr.mxu0 0.0
        %3533 = vmatpush1.xpose.msra.mxu0 0.0
        %3534 = vmatprep.subr.mxu0 0.0
        %3535 = vmatpush1.xpose.msra.mxu0 0.0
        %3536 = vmatprep.subr.mxu0 0.0
        %3537 = vmatpush1.xpose.msra.mxu0 0.0
        %3538 = vmatprep.subr.mxu0 0.0
        %3539 = vmatpush1.xpose.msra.mxu0 0.0
        %3540 = vmatprep.mubr.f32.mxu0 0.0
        %3541 = vmatmul.mubr.f32.gmra.mrb[0].mxu0 %v3458
        %v3542 = vpop.f32.mrb[0].mxu0
        %v3543 = vadd.f32 0.0, %v3542
        %v3544 = vpop.f32.mrb[0].mxu0
        %3545 = vmatprep.mubr.f32.mxu0 0.0
        %3546 = vmatmul.mubr.f32.gmra.mrb[0].mxu0 %v3460
        %v3547 = vpop.f32.mrb[0].mxu0
        %v3548 = vadd.f32 0.0, %v3547
        %v3549 = vpop.f32.mrb[0].mxu0
        %3550 = vmatprep.mubr.f32.mxu0 0.0
        %3551 = vmatmul.mubr.f32.gmra.mrb[0].mxu0 %v3462
        %v3552 = vpop.f32.mrb[0].mxu0
        %v3553 = vadd.f32 0.0, %v3552
        %v3554 = vpop.f32.mrb[0].mxu0
        %3555 = vmatprep.mubr.f32.mxu0 0.0
        %3556 = vmatmul.mubr.f32.gmra.mrb[0].mxu0 %v3464
        %v3557 = vpop.f32.mrb[0].mxu0
        %v3558 = vadd.f32 0.0, %v3557
        %v3559 = vpop.f32.mrb[0].mxu0
        %3560 = vmatprep.mubr.f32.mxu0 0.0
        %3561 = vmatmul.mubr.f32.gmra.mrb[0].mxu0 %v3466
        %v3562 = vpop.f32.mrb[0].mxu0
        %v3563 = vadd.f32 0.0, %v3562
        %v3564 = vpop.f32.mrb[0].mxu0
        %3565 = vmatprep.mubr.f32.mxu0 0.0
        %3566 = vmatmul.mubr.f32.gmra.mrb[0].mxu0 %v3468
        %v3567 = vpop.f32.mrb[0].mxu0
        %v3568 = vadd.f32 0.0, %v3567
        %v3569 = vpop.f32.mrb[0].mxu0
        %3570 = vmatprep.mubr.f32.mxu0 0.0
        %3571 = vmatmul.mubr.f32.gmra.mrb[0].mxu0 %v3470
        %v3572 = vpop.f32.mrb[0].mxu0
        %v3573 = vadd.f32 0.0, %v3572
        %v3574 = vpop.f32.mrb[0].mxu0
        %3575 = vmatprep.mubr.f32.mxu0 0.0
        %3576 = vmatmul.mubr.f32.gmra.mrb[0].mxu0 %v3472
        %v3577 = vpop.f32.mrb[0].mxu0
        %v3578 = vadd.f32 0.0, %v3577
        %v3579 = vpop.f32.mrb[0].mxu0
        %3580 = vdwg.mxu0
        %v3581 = vmul.f32 %v3543, 0.35355338
        %v3582 = vmul.f32 %v3548, 0.35355338
        %v3583 = vmul.f32 %v3553, 0.35355338
        %v3584 = vmul.f32 %v3558, 0.35355338
        %v3585 = vmul.f32 %v3563, 0.35355338
        %v3586 = vmul.f32 %v3568, 0.35355338
        %v3587 = vmul.f32 %v3573, 0.35355338
        %v3588 = vmul.f32 %v3578, 0.35355338
        %v3589 = vsel %vm1319, %v3581, -inf
        %3590 = vmax.xlane.f32.xlu0 %v3589
        %v3591 = vpop.xlane.xlu0 %3590
        %v3592 = vsel %vm1319, %v3582, -inf
        %3593 = vmax.xlane.f32.xlu0 %v3592
        %v3594 = vpop.xlane.xlu0 %3593
        %v3595 = vsel %vm1319, %v3583, -inf
        %3596 = vmax.xlane.f32.xlu0 %v3595
        %v3597 = vpop.xlane.xlu0 %3596
        %v3598 = vsel %vm1319, %v3584, -inf
        %3599 = vmax.xlane.f32.xlu0 %v3598
        %v3600 = vpop.xlane.xlu0 %3599
        %v3601 = vsel %vm1319, %v3585, -inf
        %3602 = vmax.xlane.f32.xlu0 %v3601
        %v3603 = vpop.xlane.xlu0 %3602
        %v3604 = vsel %vm1319, %v3586, -inf
        %3605 = vmax.xlane.f32.xlu0 %v3604
        %v3606 = vpop.xlane.xlu0 %3605
        %v3607 = vsel %vm1319, %v3587, -inf
        %3608 = vmax.xlane.f32.xlu0 %v3607
        %v3609 = vpop.xlane.xlu0 %3608
        %v3610 = vsel %vm1319, %v3588, -inf
        %3611 = vmax.xlane.f32.xlu0 %v3610
        %v3612 = vpop.xlane.xlu0 %3611
        %v3613 = vsub.f32 %v3581, %v3591
        %v3614 = vsub.f32 %v3582, %v3594
        %v3615 = vsub.f32 %v3583, %v3597
        %v3616 = vsub.f32 %v3584, %v3600
        %v3617 = vsub.f32 %v3585, %v3603
        %v3618 = vsub.f32 %v3586, %v3606
        %v3619 = vsub.f32 %v3587, %v3609
        %v3620 = vsub.f32 %v3588, %v3612
        %v3621 = vmul.f32 %v3613, 1.442695
        %v3622 = vpow.pop %v3621
        %v3623 = vmul.f32 %v3614, 1.442695
        %v3624 = vpow.pop %v3623
        %v3625 = vmul.f32 %v3615, 1.442695
        %v3626 = vpow.pop %v3625
        %v3627 = vmul.f32 %v3616, 1.442695
        %v3628 = vpow.pop %v3627
        %v3629 = vmul.f32 %v3617, 1.442695
        %v3630 = vpow.pop %v3629
        %v3631 = vmul.f32 %v3618, 1.442695
        %v3632 = vpow.pop %v3631
        %v3633 = vmul.f32 %v3619, 1.442695
        %v3634 = vpow.pop %v3633
        %v3635 = vmul.f32 %v3620, 1.442695
        %v3636 = vpow.pop %v3635
        %v3637 = vsel %vm1319, %v3622, 0.0
        %3638 = vadd.xlane.f32.xlu0 %v3637
        %v3639 = vpop.xlane.xlu0 %3638
        %v3640 = vsel %vm1319, %v3624, 0.0
        %3641 = vadd.xlane.f32.xlu0 %v3640
        %v3642 = vpop.xlane.xlu0 %3641
        %v3643 = vsel %vm1319, %v3626, 0.0
        %3644 = vadd.xlane.f32.xlu0 %v3643
        %v3645 = vpop.xlane.xlu0 %3644
        %v3646 = vsel %vm1319, %v3628, 0.0
        %3647 = vadd.xlane.f32.xlu0 %v3646
        %v3648 = vpop.xlane.xlu0 %3647
        %v3649 = vsel %vm1319, %v3630, 0.0
        %3650 = vadd.xlane.f32.xlu0 %v3649
        %v3651 = vpop.xlane.xlu0 %3650
        %v3652 = vsel %vm1319, %v3632, 0.0
        %3653 = vadd.xlane.f32.xlu0 %v3652
        %v3654 = vpop.xlane.xlu0 %3653
        %v3655 = vsel %vm1319, %v3634, 0.0
        %3656 = vadd.xlane.f32.xlu0 %v3655
        %v3657 = vpop.xlane.xlu0 %3656
        %v3658 = vsel %vm1319, %v3636, 0.0
        %3659 = vadd.xlane.f32.xlu0 %v3658
        %v3660 = vpop.xlane.xlu0 %3659
        %v3661 = vrcp.pop %v3639
        %v3662 = vrcp.pop %v3642
        %v3663 = vrcp.pop %v3645
        %v3664 = vrcp.pop %v3648
        %v3665 = vrcp.pop %v3651
        %v3666 = vrcp.pop %v3654
        %v3667 = vrcp.pop %v3657
        %v3668 = vrcp.pop %v3660
        %v3669 = vmul.f32 %v3622, %v3661
        %v3670 = vmul.f32 %v3624, %v3662
        %v3671 = vmul.f32 %v3626, %v3663
        %v3672 = vmul.f32 %v3628, %v3664
        %v3673 = vmul.f32 %v3630, %v3665
        %v3674 = vmul.f32 %v3632, %v3666
        %v3675 = vmul.f32 %v3634, %v3667
        %v3676 = vmul.f32 %v3636, %v3668
        %3678 = vrot.lane.b32.xlu0 %v3080, 120
        %v3679 = vpop.permute.xlu0 %3678
        %v3682 = vsel %vm1319, %v3669, 0
        %v3685 = vsel %vm1319, %v3670, 0
        %v3688 = vsel %vm1319, %v3671, 0
        %v3691 = vsel %vm1319, %v3672, 0
        %v3694 = vsel %vm1319, %v3673, 0
        %v3697 = vsel %vm1319, %v3674, 0
        %v3700 = vsel %vm1319, %v3675, 0
        %v3703 = vsel %vm1319, %v3676, 0
        %3705 = vmatprep.subr.mxu0 0.0
        %3706 = vmatpush1.msra.mxu0 %v3679
        %3707 = vmatprep.subr.mxu0 0.0
        %3708 = vmatpush1.msra.mxu0 0.0
        %3709 = vmatprep.subr.mxu0 0.0
        %3710 = vmatpush1.msra.mxu0 0.0
        %3711 = vmatprep.subr.mxu0 0.0
        %3712 = vmatpush1.msra.mxu0 0.0
        %3713 = vmatprep.subr.mxu0 0.0
        %3714 = vmatpush1.msra.mxu0 0.0
        %3715 = vmatprep.subr.mxu0 0.0
        %3716 = vmatpush1.msra.mxu0 0.0
        %3717 = vmatprep.subr.mxu0 0.0
        %3718 = vmatpush1.msra.mxu0 0.0
        %3719 = vmatprep.subr.mxu0 0.0
        %3720 = vmatpush1.msra.mxu0 0.0
        %3721 = vmatprep.subr.mxu0 0.0
        %3722 = vmatpush1.msra.mxu0 0.0
        %3723 = vmatprep.subr.mxu0 0.0
        %3724 = vmatpush1.msra.mxu0 0.0
        %3725 = vmatprep.subr.mxu0 0.0
        %3726 = vmatpush1.msra.mxu0 0.0
        %3727 = vmatprep.subr.mxu0 0.0
        %3728 = vmatpush1.msra.mxu0 0.0
        %3729 = vmatprep.subr.mxu0 0.0
        %3730 = vmatpush1.msra.mxu0 0.0
        %3731 = vmatprep.subr.mxu0 0.0
        %3732 = vmatpush1.msra.mxu0 0.0
        %3733 = vmatprep.subr.mxu0 0.0
        %3734 = vmatpush1.msra.mxu0 0.0
        %3735 = vmatprep.subr.mxu0 0.0
        %3736 = vmatpush1.msra.mxu0 0.0
        %3737 = vmatprep.subr.mxu0 0.0
        %3738 = vmatpush1.msra.mxu0 0.0
        %3739 = vmatprep.subr.mxu0 0.0
        %3740 = vmatpush1.msra.mxu0 0.0
        %3741 = vmatprep.subr.mxu0 0.0
        %3742 = vmatpush1.msra.mxu0 0.0
        %3743 = vmatprep.subr.mxu0 0.0
        %3744 = vmatpush1.msra.mxu0 0.0
        %3745 = vmatprep.subr.mxu0 0.0
        %3746 = vmatpush1.msra.mxu0 0.0
        %3747 = vmatprep.subr.mxu0 0.0
        %3748 = vmatpush1.msra.mxu0 0.0
        %3749 = vmatprep.subr.mxu0 0.0
        %3750 = vmatpush1.msra.mxu0 0.0
        %3751 = vmatprep.subr.mxu0 0.0
        %3752 = vmatpush1.msra.mxu0 0.0
        %3753 = vmatprep.subr.mxu0 0.0
        %3754 = vmatpush1.msra.mxu0 0.0
        %3755 = vmatprep.subr.mxu0 0.0
        %3756 = vmatpush1.msra.mxu0 0.0
        %3757 = vmatprep.subr.mxu0 0.0
        %3758 = vmatpush1.msra.mxu0 0.0
        %3759 = vmatprep.subr.mxu0 0.0
        %3760 = vmatpush1.msra.mxu0 0.0
        %3761 = vmatprep.subr.mxu0 0.0
        %3762 = vmatpush1.msra.mxu0 0.0
        %3763 = vmatprep.subr.mxu0 0.0
        %3764 = vmatpush1.msra.mxu0 0.0
        %3765 = vmatprep.subr.mxu0 0.0
        %3766 = vmatpush1.msra.mxu0 0.0
        %3767 = vmatprep.subr.mxu0 0.0
        %3768 = vmatpush1.msra.mxu0 0.0
        %3769 = vmatprep.mubr.f32.mxu0 0.0
        %3770 = vmatmul.mubr.f32.gmra.mrb[0].mxu0 %v3682
        %v3771 = vpop.f32.mrb[0].mxu0
        %v3772 = vadd.f32 0.0, %v3771
        %v3773 = vpop.f32.mrb[0].mxu0
        %3774 = vmatprep.mubr.f32.mxu0 0.0
        %3775 = vmatmul.mubr.f32.gmra.mrb[0].mxu0 %v3685
        %v3776 = vpop.f32.mrb[0].mxu0
        %v3777 = vadd.f32 0.0, %v3776
        %v3778 = vpop.f32.mrb[0].mxu0
        %3779 = vmatprep.mubr.f32.mxu0 0.0
        %3780 = vmatmul.mubr.f32.gmra.mrb[0].mxu0 %v3688
        %v3781 = vpop.f32.mrb[0].mxu0
        %v3782 = vadd.f32 0.0, %v3781
        %v3783 = vpop.f32.mrb[0].mxu0
        %3784 = vmatprep.mubr.f32.mxu0 0.0
        %3785 = vmatmul.mubr.f32.gmra.mrb[0].mxu0 %v3691
        %v3786 = vpop.f32.mrb[0].mxu0
        %v3787 = vadd.f32 0.0, %v3786
        %v3788 = vpop.f32.mrb[0].mxu0
        %3789 = vmatprep.mubr.f32.mxu0 0.0
        %3790 = vmatmul.mubr.f32.gmra.mrb[0].mxu0 %v3694
        %v3791 = vpop.f32.mrb[0].mxu0
        %v3792 = vadd.f32 0.0, %v3791
        %v3793 = vpop.f32.mrb[0].mxu0
        %3794 = vmatprep.mubr.f32.mxu0 0.0
        %3795 = vmatmul.mubr.f32.gmra.mrb[0].mxu0 %v3697
        %v3796 = vpop.f32.mrb[0].mxu0
        %v3797 = vadd.f32 0.0, %v3796
        %v3798 = vpop.f32.mrb[0].mxu0
        %3799 = vmatprep.mubr.f32.mxu0 0.0
        %3800 = vmatmul.mubr.f32.gmra.mrb[0].mxu0 %v3700
        %v3801 = vpop.f32.mrb[0].mxu0
        %v3802 = vadd.f32 0.0, %v3801
        %v3803 = vpop.f32.mrb[0].mxu0
        %3804 = vmatprep.mubr.f32.mxu0 0.0
        %3805 = vmatmul.mubr.f32.gmra.mrb[0].mxu0 %v3703
        %v3806 = vpop.f32.mrb[0].mxu0
        %v3807 = vadd.f32 0.0, %v3806
        %v3808 = vpop.f32.mrb[0].mxu0
        %3809 = vdwg.mxu0
        %3818 = vrot.lane.b32.xlu0 %v3772, 8
        %v3819 = vpop.permute.xlu0 %3818
        %3820 = vrot.lane.b32.xlu0 %v3777, 8
        %v3821 = vpop.permute.xlu0 %3820
        %3822 = vrot.lane.b32.xlu0 %v3782, 8
        %v3823 = vpop.permute.xlu0 %3822
        %3824 = vrot.lane.b32.xlu0 %v3787, 8
        %v3825 = vpop.permute.xlu0 %3824
        %3826 = vrot.lane.b32.xlu0 %v3792, 8
        %v3827 = vpop.permute.xlu0 %3826
        %3828 = vrot.lane.b32.xlu0 %v3797, 8
        %v3829 = vpop.permute.xlu0 %3828
        %3830 = vrot.lane.b32.xlu0 %v3802, 8
        %v3831 = vpop.permute.xlu0 %3830
        %3832 = vrot.lane.b32.xlu0 %v3807, 8
        %v3833 = vpop.permute.xlu0 %3832
        %v3842 = vsel %vm1319, %v3402, %v3819
        %v3843 = vsel %vm1319, %v3407, %v3821
        %v3844 = vsel %vm1319, %v3412, %v3823
        %v3845 = vsel %vm1319, %v3417, %v3825
        %v3846 = vsel %vm1319, %v3422, %v3827
        %v3847 = vsel %vm1319, %v3427, %v3829
        %v3848 = vsel %vm1319, %v3432, %v3831
        %v3849 = vsel %vm1319, %v3437, %v3833
        %v3850 = vld [vmem:[%s29] sm:$0xff]
        %v3851 = vld [vmem:[%s29 + $0x8] sm:$0xff]
        %v3852 = vld [vmem:[%s31] sm:$0x1]
        %v3854 = vlaneseq
        %v3855 = vshrl.u32 %v3854, 7
        %v3856 = vsub.s32 0, %v3855
        %v3857 = vrot.slane %v3852, %v3856
        %v3860 = vsel %vm1241, %v3842, 0
        %v3863 = vsel %vm1241, %v3843, 0
        %v3866 = vsel %vm1241, %v3844, 0
        %v3869 = vsel %vm1241, %v3845, 0
        %v3872 = vsel %vm1241, %v3846, 0
        %v3875 = vsel %vm1241, %v3847, 0
        %v3878 = vsel %vm1241, %v3848, 0
        %v3881 = vsel %vm1241, %v3849, 0
        %3883 = vmatprep.subr.mxu0 0.0
        %3884 = vmatpush1.msra.mxu0 %v3850
        %3885 = vmatprep.subr.mxu0 0.0
        %3886 = vmatpush1.msra.mxu0 %v3851
        %3887 = vmatprep.subr.mxu0 0.0
        %3888 = vmatpush1.msra.mxu0 0.0
        %3889 = vmatprep.subr.mxu0 0.0
        %3890 = vmatpush1.msra.mxu0 0.0
        %3891 = vmatprep.subr.mxu0 0.0
        %3892 = vmatpush1.msra.mxu0 0.0
        %3893 = vmatprep.subr.mxu0 0.0
        %3894 = vmatpush1.msra.mxu0 0.0
        %3895 = vmatprep.subr.mxu0 0.0
        %3896 = vmatpush1.msra.mxu0 0.0
        %3897 = vmatprep.subr.mxu0 0.0
        %3898 = vmatpush1.msra.mxu0 0.0
        %3899 = vmatprep.subr.mxu0 0.0
        %3900 = vmatpush1.msra.mxu0 0.0
        %3901 = vmatprep.subr.mxu0 0.0
        %3902 = vmatpush1.msra.mxu0 0.0
        %3903 = vmatprep.subr.mxu0 0.0
        %3904 = vmatpush1.msra.mxu0 0.0
        %3905 = vmatprep.subr.mxu0 0.0
        %3906 = vmatpush1.msra.mxu0 0.0
        %3907 = vmatprep.subr.mxu0 0.0
        %3908 = vmatpush1.msra.mxu0 0.0
        %3909 = vmatprep.subr.mxu0 0.0
        %3910 = vmatpush1.msra.mxu0 0.0
        %3911 = vmatprep.subr.mxu0 0.0
        %3912 = vmatpush1.msra.mxu0 0.0
        %3913 = vmatprep.subr.mxu0 0.0
        %3914 = vmatpush1.msra.mxu0 0.0
        %3915 = vmatprep.subr.mxu0 0.0
        %3916 = vmatpush1.msra.mxu0 0.0
        %3917 = vmatprep.subr.mxu0 0.0
        %3918 = vmatpush1.msra.mxu0 0.0
        %3919 = vmatprep.subr.mxu0 0.0
        %3920 = vmatpush1.msra.mxu0 0.0
        %3921 = vmatprep.subr.mxu0 0.0
        %3922 = vmatpush1.msra.mxu0 0.0
        %3923 = vmatprep.subr.mxu0 0.0
        %3924 = vmatpush1.msra.mxu0 0.0
        %3925 = vmatprep.subr.mxu0 0.0
        %3926 = vmatpush1.msra.mxu0 0.0
        %3927 = vmatprep.subr.mxu0 0.0
        %3928 = vmatpush1.msra.mxu0 0.0
        %3929 = vmatprep.subr.mxu0 0.0
        %3930 = vmatpush1.msra.mxu0 0.0
        %3931 = vmatprep.subr.mxu0 0.0
        %3932 = vmatpush1.msra.mxu0 0.0
        %3933 = vmatprep.subr.mxu0 0.0
        %3934 = vmatpush1.msra.mxu0 0.0
        %3935 = vmatprep.subr.mxu0 0.0
        %3936 = vmatpush1.msra.mxu0 0.0
        %3937 = vmatprep.subr.mxu0 0.0
        %3938 = vmatpush1.msra.mxu0 0.0
        %3939 = vmatprep.subr.mxu0 0.0
        %3940 = vmatpush1.msra.mxu0 0.0
        %3941 = vmatprep.subr.mxu0 0.0
        %3942 = vmatpush1.msra.mxu0 0.0
        %3943 = vmatprep.subr.mxu0 0.0
        %3944 = vmatpush1.msra.mxu0 0.0
        %3945 = vmatprep.subr.mxu0 0.0
        %3946 = vmatpush1.msra.mxu0 0.0
        %3947 = vmatprep.mubr.f32.mxu0 0.0
        %3948 = vmatmul.mubr.f32.gmra.mrb[0].mxu0 %v3860
        %v3949 = vpop.f32.mrb[0].mxu0
        %v3950 = vadd.f32 %v3857, %v3949
        %v3951 = vpop.f32.mrb[0].mxu0
        %3952 = vmatprep.mubr.f32.mxu0 0.0
        %3953 = vmatmul.mubr.f32.gmra.mrb[0].mxu0 %v3863
        %v3954 = vpop.f32.mrb[0].mxu0
        %v3955 = vadd.f32 %v3857, %v3954
        %v3956 = vpop.f32.mrb[0].mxu0
        %3957 = vmatprep.mubr.f32.mxu0 0.0
        %3958 = vmatmul.mubr.f32.gmra.mrb[0].mxu0 %v3866
        %v3959 = vpop.f32.mrb[0].mxu0
        %v3960 = vadd.f32 %v3857, %v3959
        %v3961 = vpop.f32.mrb[0].mxu0
        %3962 = vmatprep.mubr.f32.mxu0 0.0
        %3963 = vmatmul.mubr.f32.gmra.mrb[0].mxu0 %v3869
        %v3964 = vpop.f32.mrb[0].mxu0
        %v3965 = vadd.f32 %v3857, %v3964
        %v3966 = vpop.f32.mrb[0].mxu0
        %3967 = vmatprep.mubr.f32.mxu0 0.0
        %3968 = vmatmul.mubr.f32.gmra.mrb[0].mxu0 %v3872
        %v3969 = vpop.f32.mrb[0].mxu0
        %v3970 = vadd.f32 %v3857, %v3969
        %v3971 = vpop.f32.mrb[0].mxu0
        %3972 = vmatprep.mubr.f32.mxu0 0.0
        %3973 = vmatmul.mubr.f32.gmra.mrb[0].mxu0 %v3875
        %v3974 = vpop.f32.mrb[0].mxu0
        %v3975 = vadd.f32 %v3857, %v3974
        %v3976 = vpop.f32.mrb[0].mxu0
        %3977 = vmatprep.mubr.f32.mxu0 0.0
        %3978 = vmatmul.mubr.f32.gmra.mrb[0].mxu0 %v3878
        %v3979 = vpop.f32.mrb[0].mxu0
        %v3980 = vadd.f32 %v3857, %v3979
        %v3981 = vpop.f32.mrb[0].mxu0
        %3982 = vmatprep.mubr.f32.mxu0 0.0
        %3983 = vmatmul.mubr.f32.gmra.mrb[0].mxu0 %v3881
        %v3984 = vpop.f32.mrb[0].mxu0
        %v3985 = vadd.f32 %v3857, %v3984
        %v3986 = vpop.f32.mrb[0].mxu0
        %3987 = vdwg.mxu0
        %v3988 = vadd.f32 %v969, %v3950
        %v3989 = vadd.f32 %v970, %v3955
        %v3990 = vadd.f32 %v971, %v3960
        %v3991 = vadd.f32 %v972, %v3965
        %v3992 = vadd.f32 %v973, %v3970
        %v3993 = vadd.f32 %v974, %v3975
        %v3994 = vadd.f32 %v975, %v3980
        %v3995 = vadd.f32 %v976, %v3985
        %v3996 = vld [vmem:[%s53] sm:$0x1]
        %v3997 = vld [vmem:[%s55] sm:$0x1]
        %v3998 = vsel %vm998, %v3988, 0.0
        %3999 = vadd.xlane.f32.xlu0 %v3998
        %v4000 = vpop.xlane.xlu0 %3999
        %v4001 = vsel %vm998, %v3989, 0.0
        %4002 = vadd.xlane.f32.xlu0 %v4001
        %v4003 = vpop.xlane.xlu0 %4002
        %v4004 = vsel %vm998, %v3990, 0.0
        %4005 = vadd.xlane.f32.xlu0 %v4004
        %v4006 = vpop.xlane.xlu0 %4005
        %v4007 = vsel %vm998, %v3991, 0.0
        %4008 = vadd.xlane.f32.xlu0 %v4007
        %v4009 = vpop.xlane.xlu0 %4008
        %v4010 = vsel %vm998, %v3992, 0.0
        %4011 = vadd.xlane.f32.xlu0 %v4010
        %v4012 = vpop.xlane.xlu0 %4011
        %v4013 = vsel %vm998, %v3993, 0.0
        %4014 = vadd.xlane.f32.xlu0 %v4013
        %v4015 = vpop.xlane.xlu0 %4014
        %v4016 = vsel %vm998, %v3994, 0.0
        %4017 = vadd.xlane.f32.xlu0 %v4016
        %v4018 = vpop.xlane.xlu0 %4017
        %v4019 = vsel %vm998, %v3995, 0.0
        %4020 = vadd.xlane.f32.xlu0 %v4019
        %v4021 = vpop.xlane.xlu0 %4020
        %v4022 = vmul.f32 %v4000, %v1666
        %v4023 = vmul.f32 %v4003, %v1666
        %v4024 = vmul.f32 %v4006, %v1666
        %v4025 = vmul.f32 %v4009, %v1666
        %v4026 = vmul.f32 %v4012, %v1666
        %v4027 = vmul.f32 %v4015, %v1666
        %v4028 = vmul.f32 %v4018, %v1666
        %v4029 = vmul.f32 %v4021, %v1666
        %v4030 = vsub.f32 %v3988, %v4022
        %v4031 = vsub.f32 %v3989, %v4023
        %v4032 = vsub.f32 %v3990, %v4024
        %v4033 = vsub.f32 %v3991, %v4025
        %v4034 = vsub.f32 %v3992, %v4026
        %v4035 = vsub.f32 %v3993, %v4027
        %v4036 = vsub.f32 %v3994, %v4028
        %v4037 = vsub.f32 %v3995, %v4029
        %v4038 = vmul.f32 %v4030, %v4030
        %v4039 = vmul.f32 %v4031, %v4031
        %v4040 = vmul.f32 %v4032, %v4032
        %v4041 = vmul.f32 %v4033, %v4033
        %v4042 = vmul.f32 %v4034, %v4034
        %v4043 = vmul.f32 %v4035, %v4035
        %v4044 = vmul.f32 %v4036, %v4036
        %v4045 = vmul.f32 %v4037, %v4037
        %v4046 = vsel %vm998, %v4038, 0.0
        %4047 = vadd.xlane.f32.xlu0 %v4046
        %v4048 = vpop.xlane.xlu0 %4047
        %v4049 = vsel %vm998, %v4039, 0.0
        %4050 = vadd.xlane.f32.xlu0 %v4049
        %v4051 = vpop.xlane.xlu0 %4050
        %v4052 = vsel %vm998, %v4040, 0.0
        %4053 = vadd.xlane.f32.xlu0 %v4052
        %v4054 = vpop.xlane.xlu0 %4053
        %v4055 = vsel %vm998, %v4041, 0.0
        %4056 = vadd.xlane.f32.xlu0 %v4055
        %v4057 = vpop.xlane.xlu0 %4056
        %v4058 = vsel %vm998, %v4042, 0.0
        %4059 = vadd.xlane.f32.xlu0 %v4058
        %v4060 = vpop.xlane.xlu0 %4059
        %v4061 = vsel %vm998, %v4043, 0.0
        %4062 = vadd.xlane.f32.xlu0 %v4061
        %v4063 = vpop.xlane.xlu0 %4062
        %v4064 = vsel %vm998, %v4044, 0.0
        %4065 = vadd.xlane.f32.xlu0 %v4064
        %v4066 = vpop.xlane.xlu0 %4065
        %v4067 = vsel %vm998, %v4045, 0.0
        %4068 = vadd.xlane.f32.xlu0 %v4067
        %v4069 = vpop.xlane.xlu0 %4068
        %v4070 = vmul.f32 %v4048, %v1666
        %v4071 = vmul.f32 %v4051, %v1666
        %v4072 = vmul.f32 %v4054, %v1666
        %v4073 = vmul.f32 %v4057, %v1666
        %v4074 = vmul.f32 %v4060, %v1666
        %v4075 = vmul.f32 %v4063, %v1666
        %v4076 = vmul.f32 %v4066, %v1666
        %v4077 = vmul.f32 %v4069, %v1666
        %v4078 = vadd.f32 %v4070, 1e-05
        %v4079 = vadd.f32 %v4071, 1e-05
        %v4080 = vadd.f32 %v4072, 1e-05
        %v4081 = vadd.f32 %v4073, 1e-05
        %v4082 = vadd.f32 %v4074, 1e-05
        %v4083 = vadd.f32 %v4075, 1e-05
        %v4084 = vadd.f32 %v4076, 1e-05
        %v4085 = vadd.f32 %v4077, 1e-05
        %v4086 = vrsqrt.pop %v4078
        %v4087 = vrsqrt.pop %v4079
        %v4088 = vrsqrt.pop %v4080
        %v4089 = vrsqrt.pop %v4081
        %v4090 = vrsqrt.pop %v4082
        %v4091 = vrsqrt.pop %v4083
        %v4092 = vrsqrt.pop %v4084
        %v4093 = vrsqrt.pop %v4085
        %v4094 = vmul.f32 %v4030, %v4086
        %v4095 = vmul.f32 %v4031, %v4087
        %v4096 = vmul.f32 %v4032, %v4088
        %v4097 = vmul.f32 %v4033, %v4089
        %v4098 = vmul.f32 %v4034, %v4090
        %v4099 = vmul.f32 %v4035, %v4091
        %v4100 = vmul.f32 %v4036, %v4092
        %v4101 = vmul.f32 %v4037, %v4093
        %v4103 = vlaneseq
        %v4104 = vshrl.u32 %v4103, 7
        %v4105 = vsub.s32 0, %v4104
        %v4106 = vrot.slane %v3996, %v4105
        %v4108 = vmul.f32 %v4094, %v4106
        %v4109 = vmul.f32 %v4095, %v4106
        %v4110 = vmul.f32 %v4096, %v4106
        %v4111 = vmul.f32 %v4097, %v4106
        %v4112 = vmul.f32 %v4098, %v4106
        %v4113 = vmul.f32 %v4099, %v4106
        %v4114 = vmul.f32 %v4100, %v4106
        %v4115 = vmul.f32 %v4101, %v4106
        %v4117 = vlaneseq
        %v4118 = vshrl.u32 %v4117, 7
        %v4119 = vsub.s32 0, %v4118
        %v4120 = vrot.slane %v3997, %v4119
        %v4122 = vadd.f32 %v4108, %v4120
        %v4123 = vadd.f32 %v4109, %v4120
        %v4124 = vadd.f32 %v4110, %v4120
        %v4125 = vadd.f32 %v4111, %v4120
        %v4126 = vadd.f32 %v4112, %v4120
        %v4127 = vadd.f32 %v4113, %v4120
        %v4128 = vadd.f32 %v4114, %v4120
        %v4129 = vadd.f32 %v4115, %v4120
        %4130 = vst.msk [vmem:[%s937] sm:$0xff] %vm998, %v2793
        %4131 = vst.msk [vmem:[%s967] sm:$0xff] %vm998, %v4122
        %4132 = vst.msk [vmem:[%s967 + $0x8] sm:$0xff] %vm998, %v4123
        %4133 = vst.msk [vmem:[%s967 + $0x10] sm:$0xff] %vm998, %v4124
        %4134 = vst.msk [vmem:[%s967 + $0x18] sm:$0xff] %vm998, %v4125
        %4135 = vst.msk [vmem:[%s967 + $0x20] sm:$0xff] %vm998, %v4126
        %4136 = vst.msk [vmem:[%s967 + $0x28] sm:$0xff] %vm998, %v4127
        %4137 = vst.msk [vmem:[%s967 + $0x30] sm:$0xff] %vm998, %v4128
        %4138 = vst.msk [vmem:[%s967 + $0x38] sm:$0xff] %vm998, %v4129
        %s4139 = sand.u32 %s690, 1
        %s4140 = scalar_lea.sflag [#allocation3], %s4139
        %s4141 = sand.u32 %s690, 1
        %s4142 = smul.addr %s4141, 8
        %s4143 = scalar_lea.vmem [#allocation2], %s4142
        %p4144 = scmp.lt.s32.totalorder %s74, 1
        %s4145 = scalar_select %p4144, %s74, 1
        %s4146 = smul.addr %s4145, 8
        %s4147 = smul.addr %s4146, 8
        %s4148 = scalar_lea.vmem %s59, %s4147
        // Predicated region
        $region133: #{tpu_custom_call.1} parent=131 // pred_check
          %p4149 = pneg %p700
        $region134: #{tpu_custom_call.1} parent=131 // pred_check_branch
          %4151 = sbr.rel (%p4149) target = $region136
        $region135: #{tpu_custom_call.1} parent=131 // pred_region
          %s4153 = ssub.s32 128, 128
          %4154 = vsyncadd %s4140, %s4153
          %s4155 = smul.addr %s74, 128
          %s4156 = scalar_lea.hbm %s57, %s4155
          %s4158 = sshll.u32 %s4143, 4
          %s4159 = int_to_ptr.vmem [resolvable:$true] %s4158
          %4161 = dma.vmem_to_hbm [thread:$0]  %s4159, 128, %s4156, %s4140
        $region136: #{tpu_custom_call.1} parent=131 // pred_fallthru
          _
        // Predicated region
        $region137: #{tpu_custom_call.1} parent=131 // pred_check
          %p4162 = pneg %p726
        $region138: #{tpu_custom_call.1} parent=131 // pred_check_branch
          %4164 = sbr.rel (%p4162) target = $region140
        $region139: #{tpu_custom_call.1} parent=131 // pred_region
          _
        $region140: #{tpu_custom_call.1} parent=131 // pred_fallthru
          _
      $region132: #{tpu_custom_call.1} parent=5 // pred_fallthru
        _
      %p4165 = scmp.le.s32.totalorder 2, %s69
      // Predicated region
      $region141: #{tpu_custom_call.1} parent=5 // pred_check
        %p4166 = pneg %p4165
      $region142: #{tpu_custom_call.1} parent=5 // pred_check_branch
        %4168 = sbr.rel (%p4166) target = $region144
      $region143: #{tpu_custom_call.1} parent=5 // pred_region
        %s4169 = ssub.s32 %s69, 2
        // Predicated region
        $region145: #{tpu_custom_call.1} parent=143 // pred_check
          %p4170 = pneg %p706
        $region146: #{tpu_custom_call.1} parent=143 // pred_check_branch
          %4172 = sbr.rel (%p4170) target = $region148
        $region147: #{tpu_custom_call.1} parent=143 // pred_region
          %s4173 = sand.u32 %s691, 1
          %s4174 = scalar_lea.sflag [#allocation3], %s4173
          %s4175 = sand.u32 %s691, 1
          %s4176 = smul.addr %s4175, 8
          %s4177 = scalar_lea.vmem [#allocation2], %s4176
          %4178 = dma.done %s4174, 128
        $region148: #{tpu_custom_call.1} parent=143 // pred_fallthru
          _
        // Predicated region
        $region149: #{tpu_custom_call.1} parent=143 // pred_check
          %p4179 = pneg %p732
        $region150: #{tpu_custom_call.1} parent=143 // pred_check_branch
          %4181 = sbr.rel (%p4179) target = $region152
        $region151: #{tpu_custom_call.1} parent=143 // pred_region
          %p4182 = scmp.lt.s32.totalorder %s75, 1
          %s4183 = scalar_select %p4182, %s75, 1
          %s4184 = smul.addr %s4183, 8
          %s4185 = smul.addr %s4184, 8
          %s4186 = scalar_lea.vmem %s59, %s4185
        $region152: #{tpu_custom_call.1} parent=143 // pred_fallthru
          _
      $region144: #{tpu_custom_call.1} parent=5 // pred_fallthru
        _
    $region6: #{tpu_custom_call.1} parent=1 // loop_footer
      %s73 = sadd.s32 1, %s69
    $region7: #{tpu_custom_call.1} parent=1 // loop_footer_branch
      %68 = sbr.rel target = $region3
    $region8: #{tpu_custom_call.1} parent=1 // loop_exit
      _
    %4187 = vsyncpa [#allocation3], 1
    %s4188 = scalar_lea.sflag [#allocation3], 1
    %4189 = vsyncpa %s4188, 1

</llo_original>
